<compile_context>
chip_gen: v7x
topology: tpu7x:2x2x1
jax: 0.10.0
libtpu: 0.0.40
codegen_flags: <defaults>
</compile_context>

<pallas_src>
import functools
import math

import jax
import jax.numpy as jnp
from jax import lax
from jax.experimental import pallas as pl
from jax.experimental.pallas import tpu as pltpu


_VMEM_LIMIT = 32 * 1024 * 1024  # explicit scoped-VMEM cap, safe on v5e/v6e/v7x


# ----------------------------------------------------------------------------
# In-kernel math helpers (f32 epilogues; matmul operands are bf16)
# ----------------------------------------------------------------------------
def _mish(x):
    # Mish(x) = x * tanh(softplus(x)); numerically stable softplus.
    sp = jnp.maximum(x, 0.0) + jnp.log1p(jnp.exp(-jnp.abs(x)))
    return x * jnp.tanh(sp)


def _apply_act(x, act):
    if act == "leaky_relu":          # nn.LeakyReLU(0.2)
        return jnp.where(x >= 0.0, x, 0.2 * x)
    if act == "sigmoid":             # nn.Sigmoid()
        return 1.0 / (1.0 + jnp.exp(-x))
    if act == "relu":
        return jnp.maximum(x, 0.0)
    if act == "none":
        return x
    raise ValueError(act)


# ----------------------------------------------------------------------------
# Pallas kernels
# ----------------------------------------------------------------------------
def _enc_conv_gap_kernel(p_ref, w_ref, b_ref, o_ref):
    """Stand-in encoder: conv(3x3) + bias + ReLU + global-average-pool, fused.

    p_ref: (S, K)  bf16 im2col patches of one image (S = H*W on sublanes)
    w_ref: (K, C)  bf16 conv weight (C = fc1 on lanes)
    b_ref: (1, C)  f32  conv bias
    o_ref: (1, C)  f32  pooled features (lane-dense on C)
    """
    acc = jnp.dot(p_ref[...], w_ref[...], preferred_element_type=jnp.float32)
    acc = jnp.maximum(acc + b_ref[...], 0.0)            # bias BEFORE ReLU
    o_ref[...] = jnp.mean(acc, axis=0, keepdims=True)   # GAP over spatial sublanes


def _dec_conv_kernel(w_ref, p_ref, o_ref, *, act):
    """Sub-pixel ConvTranspose phase matmul with fused activation.

    w_ref: (4*Cout, Cin*9)  bf16 phase-packed weights (resident across the grid)
    p_ref: (Cin*9, S_tile)  bf16 im2col patches (spatial on lanes -> lane-dense out)
    o_ref: (4*Cout, S_tile) f32
    """
    acc = jnp.dot(w_ref[...], p_ref[...], preferred_element_type=jnp.float32)
    o_ref[...] = _apply_act(acc, act)


def _latent_kernel(h_ref, wmu_ref, bmu_ref, wvar_ref, bvar_ref, eps_ref,
                   wd_ref, bd_ref, mu_ref, lv_ref, z_ref, hd_ref):
    """fc_mus + fc_vars (+Mish), reparameterize, and fcD1 (+Mish) in one call."""
    hb = h_ref[...].astype(jnp.bfloat16)
    mu = _mish(jnp.dot(hb, wmu_ref[...], preferred_element_type=jnp.float32)
               + bmu_ref[...])
    lv = _mish(jnp.dot(hb, wvar_ref[...], preferred_element_type=jnp.float32)
               + bvar_ref[...])
    # Reference training-mode reparameterize: std = exp(logvar); z = eps*std + mu.
    z = eps_ref[...] * jnp.exp(lv) + mu
    mu_ref[...] = mu
    lv_ref[...] = lv
    z_ref[...] = z
    hd = jnp.dot(z.astype(jnp.bfloat16), wd_ref[...],
                 preferred_element_type=jnp.float32) + bd_ref[...]
    hd_ref[...] = _mish(hd)


# ----------------------------------------------------------------------------
# Wrappers (im2col glue in XLA, matmul + epilogue in Pallas)
# ----------------------------------------------------------------------------
def _pick_spatial_tile(s, max_tile=512):
    """Largest tile that is a multiple of 128 and divides s; else the full extent."""
    if s % 128 == 0:
        t = min(s, max_tile)
        while s % t != 0:
            t -= 128
        assert t >= 128 and s % t == 0
        return t
    return s  # small spatial (4 / 16 / 64): single full-extent block is always legal


def encode_features(params, x, cfg):
    """Stand-in for `h = resnet34(x)` (global_pool='avg' head) -> (B, fc1)."""
    # TODO(synk): timm 'resnet34' pretrained weights are unavailable offline.
    B, Cin, H, W = x.shape
    C = cfg.fc1
    K = Cin * 9
    S = H * W
    # im2col with NHWC output layout -> (B, S, K) with a plain reshape (no relayout).
    patches = lax.conv_general_dilated_patches(
        x.astype(jnp.bfloat16), (3, 3), (1, 1), ((1, 1), (1, 1)),
        dimension_numbers=("NCHW", "OIHW", "NHWC"),
    ).reshape(B, S, K)
    w = params["enc_conv_w"].reshape(C, K).T.astype(jnp.bfloat16)   # (K, C)
    b = params["enc_conv_b"].reshape(1, C).astype(jnp.float32)
    h = pl.pallas_call(
        _enc_conv_gap_kernel,
        out_shape=jax.ShapeDtypeStruct((B, 1, C), jnp.float32),
        grid=(B,),
        in_specs=[
            pl.BlockSpec((None, S, K), lambda i: (i, 0, 0)),
            pl.BlockSpec((K, C), lambda i: (0, 0)),
            pl.BlockSpec((1, C), lambda i: (0, 0)),
        ],
        out_specs=pl.BlockSpec((None, 1, C), lambda i: (i, 0, 0)),
        compiler_params=pltpu.CompilerParams(
            dimension_semantics=("parallel",),
            vmem_limit_bytes=_VMEM_LIMIT,
        ),
    )(patches, w, b)
    return h.reshape(B, C)


def latent_heads(params, h, eps, cfg):
    """mu, logvar, z, fcD1(z) from one fused Pallas call."""
    B = h.shape[0]
    wmu = params["fc_mus_w"].T.astype(jnp.bfloat16)    # (fc1, fc2)
    wvar = params["fc_vars_w"].T.astype(jnp.bfloat16)  # (fc1, fc2)
    wd = params["fcD1_w"].T.astype(jnp.bfloat16)       # (fc2, fc1)
    bmu = params["fc_mus_b"].reshape(1, -1).astype(jnp.float32)
    bvar = params["fc_vars_b"].reshape(1, -1).astype(jnp.float32)
    bd = params["fcD1_b"].reshape(1, -1).astype(jnp.float32)
    return pl.pallas_call(
        _latent_kernel,
        out_shape=(
            jax.ShapeDtypeStruct((B, cfg.fc2), jnp.float32),   # mu
            jax.ShapeDtypeStruct((B, cfg.fc2), jnp.float32),   # logvar
            jax.ShapeDtypeStruct((B, cfg.fc2), jnp.float32),   # z
            jax.ShapeDtypeStruct((B, cfg.fc1), jnp.float32),   # fcD1(z)
        ),
    )(h, wmu, bmu, wvar, bvar, eps, wd, bd)


def _subpixel_weights(w_t):
    """Phase-decompose a PyTorch ConvTranspose2d(kernel=4, stride=2, padding=1) weight.

    w_t: (Cin, Cout, 4, 4) -> (4*Cout, Cin*9) weights for a stride-1 3x3 correlation
    over the zero-padded input; output channel ((r*2+c)*Cout + co) is phase
    (out_row % 2 == r, out_col % 2 == c). Exactly equivalent to the transposed conv.
    """
    Cin, Cout, kh, kw = w_t.shape
    assert kh == 4 and kw == 4, "sub-pixel decomposition assumes k=4, s=2, p=1"
    # phase -> {3x3 patch offset: transposed-conv kernel tap}
    tap = {0: {0: 3, 1: 1}, 1: {1: 2, 2: 0}}
    w3 = jnp.zeros((2, 2, Cout, Cin, 3, 3), w_t.dtype)
    for r in (0, 1):
        for c in (0, 1):
            for dy, ki in tap[r].items():
                for dx, kj in tap[c].items():
                    w3 = w3.at[r, c, :, :, dy, dx].set(w_t[:, :, ki, kj].T)
    return w3.reshape(4 * Cout, Cin * 9)


def conv_transpose2d_subpixel(x, w_t, *, act):
    """PyTorch ConvTranspose2d(Cin, Cout, 4, stride=2, padding=1, bias=False) + act."""
    B, Cin, H, W = x.shape
    Cout = w_t.shape[1]
    K9, S = Cin * 9, H * W
    Nout = 4 * Cout
    w3 = _subpixel_weights(w_t).astype(jnp.bfloat16)
    # im2col of the (zero-padded) input; NCHW output gives (B, K9, S) with no relayout.
    patches = lax.conv_general_dilated_patches(
        x.astype(jnp.bfloat16), (3, 3), (1, 1), ((1, 1), (1, 1)),
        dimension_numbers=("NCHW", "OIHW", "NCHW"),
    ).reshape(B, K9, S)
    st = _pick_spatial_tile(S)
    out = pl.pallas_call(
        functools.partial(_dec_conv_kernel, act=act),
        out_shape=jax.ShapeDtypeStruct((B, Nout, S), jnp.float32),
        grid=(B, S // st),
        in_specs=[
            pl.BlockSpec((Nout, K9), lambda b, s: (0, 0)),        # weight stays resident
            pl.BlockSpec((None, K9, st), lambda b, s: (b, 0, s)),
        ],
        out_specs=pl.BlockSpec((None, Nout, st), lambda b, s: (b, 0, s)),
        compiler_params=pltpu.CompilerParams(
            dimension_semantics=("parallel", "parallel"),
            vmem_limit_bytes=_VMEM_LIMIT,
        ),
    )(w3, patches)
    # interleave the 4 phases: (B, 2, 2, Cout, H, W) -> (B, Cout, 2H, 2W)
    out = out.reshape(B, 2, 2, Cout, H, W).transpose(0, 3, 4, 1, 5, 2)
    return out.reshape(B, Cout, 2 * H, 2 * W)


def decode(params, h_dec, cfg):
    s = int(math.sqrt(cfg.fc1 / cfg.hidden5))
    h = h_dec.reshape(-1, cfg.hidden5, s, s)
    acts = ["leaky_relu"] * 4 + ["sigmoid"]
    for w_t, act in zip(params["dec_ws"], acts):
        h = conv_transpose2d_subpixel(h, w_t, act=act)
    return h


def forward(params, x, eps_key, cfg):
    h = encode_features(params, x, cfg)                            # (B, fc1)
    eps = jax.random.normal(eps_key, (x.shape[0], cfg.fc2), jnp.float32)
    mu, logvar, z, h_dec = latent_heads(params, h, eps, cfg)       # fused heads
    res = decode(params, h_dec, cfg)
    return res, z, mu, logvar


# ----------------------------------------------------------------------------
# CNN_VAE configuration / parameters
# ----------------------------------------------------------------------------
class CNNVAEConfig:
    kernel = 4
    stride = 2
    padding = 1
    nc = 4
    hidden1 = 8
    hidden2 = 16
    hidden3 = 16
    hidden4 = 32
    hidden5 = 32
    fc1 = 128
    fc2 = 32


def init_params(key, cfg):
    ks = jax.random.split(key, 16)
    n = lambda k, shape, s=0.05: s * jax.random.normal(k, shape, jnp.float32)
    p = {}
    # stand-in encoder (replaces timm resnet34): 3x3 conv nc -> fc1 (+bias), ReLU, GAP
    p["enc_conv_w"] = n(ks[0], (cfg.fc1, cfg.nc, 3, 3))
    p["enc_conv_b"] = n(ks[1], (cfg.fc1,), 0.01)
    # fc_mus / fc_vars : Linear(fc1, fc2) + Mish — PyTorch Linear W: (out, in)
    p["fc_mus_w"] = n(ks[2], (cfg.fc2, cfg.fc1))
    p["fc_mus_b"] = n(ks[3], (cfg.fc2,), 0.01)
    p["fc_vars_w"] = n(ks[4], (cfg.fc2, cfg.fc1))
    p["fc_vars_b"] = n(ks[5], (cfg.fc2,), 0.01)
    # fcD1 : Linear(fc2, fc1) + Mish
    p["fcD1_w"] = n(ks[6], (cfg.fc1, cfg.fc2))
    p["fcD1_b"] = n(ks[7], (cfg.fc1,), 0.01)
    # decoder ConvTranspose2d weights: (Cin, Cout, k, k), bias=False
    chans = [cfg.hidden5, cfg.hidden4, cfg.hidden3, cfg.hidden2, cfg.hidden1, cfg.nc]
    p["dec_ws"] = [
        n(ks[8 + i], (chans[i], chans[i + 1], cfg.kernel, cfg.kernel))
        for i in range(5)
    ]
    return p


# ----------------------------------------------------------------------------
if __name__ == "__main__":
    cfg = CNNVAEConfig()
    key = jax.random.PRNGKey(0)
    k_params, k_x, k_eps = jax.random.split(key, 3)

    params = init_params(k_params, cfg)
    x = jax.random.normal(k_x, (2, cfg.nc, 16, 16), jnp.float32)  # NCHW

    fwd = jax.jit(lambda p, xx, kk: forward(p, xx, kk, cfg))
    res, z, mu, logvar = fwd(params, x, k_eps)
    jax.block_until_ready((res, z, mu, logvar))

    # sanity: decoder output spatial = 2 * 2**5 = 64, channels = nc
    assert res.shape == (2, cfg.nc, 64, 64), res.shape
    assert z.shape == (2, cfg.fc2) and mu.shape == (2, cfg.fc2) and logvar.shape == (2, cfg.fc2)
    assert bool(jnp.all(jnp.isfinite(res)))
    assert bool(jnp.all((res >= 0) & (res <= 1)))
    print("KERNEL_OK")
</pallas_src>

<mosaic_0001>
module attributes {stable_mosaic.version = 11 : i64} {
  func.func @_enc_conv_gap_kernel(%arg0: i32, %arg1: memref<1x256x36xbf16, #tpu.memory_space<vmem>>, %arg2: memref<36x128xbf16, #tpu.memory_space<vmem>>, %arg3: memref<1x128xf32, #tpu.memory_space<vmem>>, %arg4: memref<1x1x128xf32, #tpu.memory_space<vmem>>) attributes {dimension_semantics = [#tpu.dimension_semantics<parallel>], iteration_bounds = array<i64: 2>, scalar_prefetch = 0 : i64, scratch_operands = 0 : i64, tpu.core_type = #tpu.core_type<tc>, window_params = [{transform_indices = @transform_0, window_bounds = array<i64: 1, 256, 36>}, {pipeline_mode = #tpu.pipeline_mode<synchronous>, transform_indices = @transform_1, window_bounds = array<i64: 36, 128>}, {pipeline_mode = #tpu.pipeline_mode<synchronous>, transform_indices = @transform_2, window_bounds = array<i64: 1, 128>}, {transform_indices = @transform_3, window_bounds = array<i64: 1, 1, 128>}]} {
    %c0 = arith.constant 0 : index
    %c0_0 = arith.constant 0 : index
    %c0_1 = arith.constant 0 : index
    %0 = vector.load %arg1[%c0, %c0_0, %c0_1] : memref<1x256x36xbf16, #tpu.memory_space<vmem>>, vector<1x256x36xbf16>
    %1 = vector.shape_cast %0 : vector<1x256x36xbf16> to vector<256x36xbf16>
    %c0_2 = arith.constant 0 : index
    %c0_3 = arith.constant 0 : index
    %2 = vector.load %arg2[%c0_2, %c0_3] : memref<36x128xbf16, #tpu.memory_space<vmem>>, vector<36x128xbf16>
    %cst = arith.constant dense<0.000000e+00> : vector<256x128xf32>
    %3 = tpu.matmul %1, %2, %cst {dimension_numbers = #tpu.dot_dimension_numbers<[1], [0], [0], [1], [0, 0, 1, 1], [], []>} : vector<256x36xbf16>, vector<36x128xbf16>, vector<256x128xf32> -> vector<256x128xf32>
    %c0_4 = arith.constant 0 : index
    %c0_5 = arith.constant 0 : index
    %4 = vector.load %arg3[%c0_4, %c0_5] : memref<1x128xf32, #tpu.memory_space<vmem>>, vector<1x128xf32>
    %5 = vector.broadcast %4 : vector<1x128xf32> to vector<256x128xf32>
    %6 = arith.addf %3, %5 : vector<256x128xf32>
    %cst_6 = arith.constant 0.000000e+00 : f32
    %7 = vector.broadcast %cst_6 : f32 to vector<256x128xf32>
    %8 = arith.maximumf %6, %7 : vector<256x128xf32>
    %cst_7 = arith.constant dense<0.000000e+00> : vector<128xf32>
    %9 = vector.multi_reduction <add>, %8, %cst_7 [0] : vector<256x128xf32> to vector<128xf32>
    %10 = vector.shape_cast %9 : vector<128xf32> to vector<1x128xf32>
    %cst_8 = arith.constant 2.560000e+02 : f32
    %11 = vector.broadcast %cst_8 : f32 to vector<1x128xf32>
    %12 = arith.divf %10, %11 : vector<1x128xf32>
    %c0_9 = arith.constant 0 : index
    %c0_10 = arith.constant 0 : index
    %c0_11 = arith.constant 0 : index
    %13 = vector.load %arg4[%c0_9, %c0_10, %c0_11] : memref<1x1x128xf32, #tpu.memory_space<vmem>>, vector<1x1x128xf32>
    %14 = vector.shape_cast %13 : vector<1x1x128xf32> to vector<1x128xf32>
    %15 = vector.shape_cast %12 : vector<1x128xf32> to vector<1x1x128xf32>
    tpu.vector_store %arg4[%c0_9, %c0_10, %c0_11], %15 {strides = array<i32>} : memref<1x1x128xf32, #tpu.memory_space<vmem>>, vector<1x1x128xf32>,
    return
  }
  func.func @transform_0(%arg0: i32) -> (i32, i32, i32) {
    %c0_i32 = arith.constant 0 : i32
    %c0_i32_0 = arith.constant 0 : i32
    %c0_i32_1 = arith.constant 0 : i32
    return %arg0, %c0_i32, %c0_i32_0 : i32, i32, i32
  }
  func.func @transform_1(%arg0: i32) -> (i32, i32) {
    %c0_i32 = arith.constant 0 : i32
    %c0_i32_0 = arith.constant 0 : i32
    %c0_i32_1 = arith.constant 0 : i32
    return %c0_i32, %c0_i32_0 : i32, i32
  }
  func.func @transform_2(%arg0: i32) -> (i32, i32) {
    %c0_i32 = arith.constant 0 : i32
    %c0_i32_0 = arith.constant 0 : i32
    %c0_i32_1 = arith.constant 0 : i32
    return %c0_i32, %c0_i32_0 : i32, i32
  }
  func.func @transform_3(%arg0: i32) -> (i32, i32, i32) {
    %c0_i32 = arith.constant 0 : i32
    %c0_i32_0 = arith.constant 0 : i32
    %c0_i32_1 = arith.constant 0 : i32
    return %arg0, %c0_i32, %c0_i32_0 : i32, i32, i32
  }
}

module attributes {stable_mosaic.version = 11 : i64} {
  func.func @_latent_kernel(%arg0: memref<2x128xf32, #tpu.memory_space<vmem>>, %arg1: memref<128x32xbf16, #tpu.memory_space<vmem>>, %arg2: memref<1x32xf32, #tpu.memory_space<vmem>>, %arg3: memref<128x32xbf16, #tpu.memory_space<vmem>>, %arg4: memref<1x32xf32, #tpu.memory_space<vmem>>, %arg5: memref<2x32xf32, #tpu.memory_space<vmem>>, %arg6: memref<32x128xbf16, #tpu.memory_space<vmem>>, %arg7: memref<1x128xf32, #tpu.memory_space<vmem>>, %arg8: memref<2x32xf32, #tpu.memory_space<vmem>>, %arg9: memref<2x32xf32, #tpu.memory_space<vmem>>, %arg10: memref<2x32xf32, #tpu.memory_space<vmem>>, %arg11: memref<2x128xf32, #tpu.memory_space<vmem>>) attributes {dimension_semantics = [], scalar_prefetch = 0 : i64, scratch_operands = 0 : i64, tpu.core_type = #tpu.core_type<tc>} {
    %c0 = arith.constant 0 : index
    %c0_0 = arith.constant 0 : index
    %0 = vector.load %arg0[%c0, %c0_0] : memref<2x128xf32, #tpu.memory_space<vmem>>, vector<2x128xf32>
    %1 = arith.truncf %0 : vector<2x128xf32> to vector<2x128xbf16>
    %c0_1 = arith.constant 0 : index
    %c0_2 = arith.constant 0 : index
    %2 = vector.load %arg1[%c0_1, %c0_2] : memref<128x32xbf16, #tpu.memory_space<vmem>>, vector<128x32xbf16>
    %cst = arith.constant dense<0.000000e+00> : vector<2x32xf32>
    %3 = tpu.matmul %1, %2, %cst {dimension_numbers = #tpu.dot_dimension_numbers<[1], [0], [0], [1], [0, 0, 1, 1], [], []>} : vector<2x128xbf16>, vector<128x32xbf16>, vector<2x32xf32> -> vector<2x32xf32>
    %c0_3 = arith.constant 0 : index
    %c0_4 = arith.constant 0 : index
    %4 = vector.load %arg2[%c0_3, %c0_4] : memref<1x32xf32, #tpu.memory_space<vmem>>, vector<1x32xf32>
    %5 = vector.broadcast %4 : vector<1x32xf32> to vector<2x32xf32>
    %6 = arith.addf %3, %5 : vector<2x32xf32>
    %cst_5 = arith.constant 0.000000e+00 : f32
    %7 = vector.broadcast %cst_5 : f32 to vector<2x32xf32>
    %8 = arith.maximumf %6, %7 : vector<2x32xf32>
    %9 = math.absf %6 : vector<2x32xf32>
    %cst_6 = arith.constant 0.000000e+00 : f32
    %10 = vector.broadcast %cst_6 : f32 to vector<2x32xf32>
    %11 = arith.subf %10, %9 : vector<2x32xf32>
    %12 = math.exp %11 : vector<2x32xf32>
    %13 = math.log1p %12 : vector<2x32xf32>
    %14 = arith.addf %8, %13 : vector<2x32xf32>
    %15 = math.tanh %14 : vector<2x32xf32>
    %16 = arith.mulf %6, %15 : vector<2x32xf32>
    %c0_7 = arith.constant 0 : index
    %c0_8 = arith.constant 0 : index
    %17 = vector.load %arg3[%c0_7, %c0_8] : memref<128x32xbf16, #tpu.memory_space<vmem>>, vector<128x32xbf16>
    %cst_9 = arith.constant dense<0.000000e+00> : vector<2x32xf32>
    %18 = tpu.matmul %1, %17, %cst_9 {dimension_numbers = #tpu.dot_dimension_numbers<[1], [0], [0], [1], [0, 0, 1, 1], [], []>} : vector<2x128xbf16>, vector<128x32xbf16>, vector<2x32xf32> -> vector<2x32xf32>
    %c0_10 = arith.constant 0 : index
    %c0_11 = arith.constant 0 : index
    %19 = vector.load %arg4[%c0_10, %c0_11] : memref<1x32xf32, #tpu.memory_space<vmem>>, vector<1x32xf32>
    %20 = vector.broadcast %19 : vector<1x32xf32> to vector<2x32xf32>
    %21 = arith.addf %18, %20 : vector<2x32xf32>
    %cst_12 = arith.constant 0.000000e+00 : f32
    %22 = vector.broadcast %cst_12 : f32 to vector<2x32xf32>
    %23 = arith.maximumf %21, %22 : vector<2x32xf32>
    %24 = math.absf %21 : vector<2x32xf32>
    %cst_13 = arith.constant 0.000000e+00 : f32
    %25 = vector.broadcast %cst_13 : f32 to vector<2x32xf32>
    %26 = arith.subf %25, %24 : vector<2x32xf32>
    %27 = math.exp %26 : vector<2x32xf32>
    %28 = math.log1p %27 : vector<2x32xf32>
    %29 = arith.addf %23, %28 : vector<2x32xf32>
    %30 = math.tanh %29 : vector<2x32xf32>
    %31 = arith.mulf %21, %30 : vector<2x32xf32>
    %c0_14 = arith.constant 0 : index
    %c0_15 = arith.constant 0 : index
    %32 = vector.load %arg5[%c0_14, %c0_15] : memref<2x32xf32, #tpu.memory_space<vmem>>, vector<2x32xf32>
    %33 = math.exp %31 : vector<2x32xf32>
    %34 = arith.mulf %32, %33 : vector<2x32xf32>
    %35 = arith.addf %34, %16 : vector<2x32xf32>
    %c0_16 = arith.constant 0 : index
    %c0_17 = arith.constant 0 : index
    %36 = vector.load %arg8[%c0_16, %c0_17] : memref<2x32xf32, #tpu.memory_space<vmem>>, vector<2x32xf32>
    tpu.vector_store %arg8[%c0_16, %c0_17], %16 {strides = array<i32>} : memref<2x32xf32, #tpu.memory_space<vmem>>, vector<2x32xf32>,
    %c0_18 = arith.constant 0 : index
    %c0_19 = arith.constant 0 : index
    %37 = vector.load %arg9[%c0_18, %c0_19] : memref<2x32xf32, #tpu.memory_space<vmem>>, vector<2x32xf32>
    tpu.vector_store %arg9[%c0_18, %c0_19], %31 {strides = array<i32>} : memref<2x32xf32, #tpu.memory_space<vmem>>, vector<2x32xf32>,
    %c0_20 = arith.constant 0 : index
    %c0_21 = arith.constant 0 : index
    %38 = vector.load %arg10[%c0_20, %c0_21] : memref<2x32xf32, #tpu.memory_space<vmem>>, vector<2x32xf32>
    tpu.vector_store %arg10[%c0_20, %c0_21], %35 {strides = array<i32>} : memref<2x32xf32, #tpu.memory_space<vmem>>, vector<2x32xf32>,
    %39 = arith.truncf %35 : vector<2x32xf32> to vector<2x32xbf16>
    %c0_22 = arith.constant 0 : index
    %c0_23 = arith.constant 0 : index
    %40 = vector.load %arg6[%c0_22, %c0_23] : memref<32x128xbf16, #tpu.memory_space<vmem>>, vector<32x128xbf16>
    %cst_24 = arith.constant dense<0.000000e+00> : vector<2x128xf32>
    %41 = tpu.matmul %39, %40, %cst_24 {dimension_numbers = #tpu.dot_dimension_numbers<[1], [0], [0], [1], [0, 0, 1, 1], [], []>} : vector<2x32xbf16>, vector<32x128xbf16>, vector<2x128xf32> -> vector<2x128xf32>
    %c0_25 = arith.constant 0 : index
    %c0_26 = arith.constant 0 : index
    %42 = vector.load %arg7[%c0_25, %c0_26] : memref<1x128xf32, #tpu.memory_space<vmem>>, vector<1x128xf32>
    %43 = vector.broadcast %42 : vector<1x128xf32> to vector<2x128xf32>
    %44 = arith.addf %41, %43 : vector<2x128xf32>
    %cst_27 = arith.constant 0.000000e+00 : f32
    %45 = vector.broadcast %cst_27 : f32 to vector<2x128xf32>
    %46 = arith.maximumf %44, %45 : vector<2x128xf32>
    %47 = math.absf %44 : vector<2x128xf32>
    %cst_28 = arith.constant 0.000000e+00 : f32
    %48 = vector.broadcast %cst_28 : f32 to vector<2x128xf32>
    %49 = arith.subf %48, %47 : vector<2x128xf32>
    %50 = math.exp %49 : vector<2x128xf32>
    %51 = math.log1p %50 : vector<2x128xf32>
    %52 = arith.addf %46, %51 : vector<2x128xf32>
    %53 = math.tanh %52 : vector<2x128xf32>
    %54 = arith.mulf %44, %53 : vector<2x128xf32>
    %c0_29 = arith.constant 0 : index
    %c0_30 = arith.constant 0 : index
    %55 = vector.load %arg11[%c0_29, %c0_30] : memref<2x128xf32, #tpu.memory_space<vmem>>, vector<2x128xf32>
    tpu.vector_store %arg11[%c0_29, %c0_30], %54 {strides = array<i32>} : memref<2x128xf32, #tpu.memory_space<vmem>>, vector<2x128xf32>,
    return
  }
}

module attributes {stable_mosaic.version = 11 : i64} {
  func.func @_dec_conv_kernel(%arg0: i32, %arg1: i32, %arg2: memref<128x288xbf16, #tpu.memory_space<vmem>>, %arg3: memref<1x288x4xbf16, #tpu.memory_space<vmem>>, %arg4: memref<1x128x4xf32, #tpu.memory_space<vmem>>) attributes {dimension_semantics = [#tpu.dimension_semantics<parallel>, #tpu.dimension_semantics<parallel>], iteration_bounds = array<i64: 2, 1>, scalar_prefetch = 0 : i64, scratch_operands = 0 : i64, tpu.core_type = #tpu.core_type<tc>, window_params = [{pipeline_mode = #tpu.pipeline_mode<synchronous>, transform_indices = @transform_0, window_bounds = array<i64: 128, 288>}, {transform_indices = @transform_1, window_bounds = array<i64: 1, 288, 4>}, {transform_indices = @transform_2, window_bounds = array<i64: 1, 128, 4>}]} {
    %c0 = arith.constant 0 : index
    %c0_0 = arith.constant 0 : index
    %0 = vector.load %arg2[%c0, %c0_0] : memref<128x288xbf16, #tpu.memory_space<vmem>>, vector<128x288xbf16>
    %c0_1 = arith.constant 0 : index
    %c0_2 = arith.constant 0 : index
    %c0_3 = arith.constant 0 : index
    %1 = vector.load %arg3[%c0_1, %c0_2, %c0_3] : memref<1x288x4xbf16, #tpu.memory_space<vmem>>, vector<1x288x4xbf16>
    %2 = vector.shape_cast %1 : vector<1x288x4xbf16> to vector<288x4xbf16>
    %cst = arith.constant dense<0.000000e+00> : vector<128x4xf32>
    %3 = tpu.matmul %0, %2, %cst {dimension_numbers = #tpu.dot_dimension_numbers<[1], [0], [0], [1], [0, 0, 1, 1], [], []>} : vector<128x288xbf16>, vector<288x4xbf16>, vector<128x4xf32> -> vector<128x4xf32>
    %cst_4 = arith.constant 0.000000e+00 : f32
    %4 = vector.broadcast %cst_4 : f32 to vector<128x4xf32>
    %5 = arith.cmpf oge, %3, %4 : vector<128x4xf32>
    %cst_5 = arith.constant 2.000000e-01 : f32
    %6 = vector.broadcast %cst_5 : f32 to vector<128x4xf32>
    %7 = arith.mulf %6, %3 : vector<128x4xf32>
    %8 = arith.select %5, %3, %7 : vector<128x4xi1>, vector<128x4xf32>
    %c0_6 = arith.constant 0 : index
    %c0_7 = arith.constant 0 : index
    %c0_8 = arith.constant 0 : index
    %9 = vector.load %arg4[%c0_6, %c0_7, %c0_8] : memref<1x128x4xf32, #tpu.memory_space<vmem>>, vector<1x128x4xf32>
    %10 = vector.shape_cast %9 : vector<1x128x4xf32> to vector<128x4xf32>
    %11 = vector.shape_cast %8 : vector<128x4xf32> to vector<1x128x4xf32>
    tpu.vector_store %arg4[%c0_6, %c0_7, %c0_8], %11 {strides = array<i32>} : memref<1x128x4xf32, #tpu.memory_space<vmem>>, vector<1x128x4xf32>,
    return
  }
  func.func @transform_0(%arg0: i32, %arg1: i32) -> (i32, i32) {
    %c0_i32 = arith.constant 0 : i32
    %c0_i32_0 = arith.constant 0 : i32
    %c0_i32_1 = arith.constant 0 : i32
    return %c0_i32, %c0_i32_0 : i32, i32
  }
  func.func @transform_1(%arg0: i32, %arg1: i32) -> (i32, i32, i32) {
    %c0_i32 = arith.constant 0 : i32
    %c0_i32_0 = arith.constant 0 : i32
    return %arg0, %c0_i32, %arg1 : i32, i32, i32
  }
  func.func @transform_2(%arg0: i32, %arg1: i32) -> (i32, i32, i32) {
    %c0_i32 = arith.constant 0 : i32
    %c0_i32_0 = arith.constant 0 : i32
    return %arg0, %c0_i32, %arg1 : i32, i32, i32
  }
}

module attributes {stable_mosaic.version = 11 : i64} {
  func.func @_dec_conv_kernel(%arg0: i32, %arg1: i32, %arg2: memref<64x288xbf16, #tpu.memory_space<vmem>>, %arg3: memref<1x288x16xbf16, #tpu.memory_space<vmem>>, %arg4: memref<1x64x16xf32, #tpu.memory_space<vmem>>) attributes {dimension_semantics = [#tpu.dimension_semantics<parallel>, #tpu.dimension_semantics<parallel>], iteration_bounds = array<i64: 2, 1>, scalar_prefetch = 0 : i64, scratch_operands = 0 : i64, tpu.core_type = #tpu.core_type<tc>, window_params = [{pipeline_mode = #tpu.pipeline_mode<synchronous>, transform_indices = @transform_0, window_bounds = array<i64: 64, 288>}, {transform_indices = @transform_1, window_bounds = array<i64: 1, 288, 16>}, {transform_indices = @transform_2, window_bounds = array<i64: 1, 64, 16>}]} {
    %c0 = arith.constant 0 : index
    %c0_0 = arith.constant 0 : index
    %0 = vector.load %arg2[%c0, %c0_0] : memref<64x288xbf16, #tpu.memory_space<vmem>>, vector<64x288xbf16>
    %c0_1 = arith.constant 0 : index
    %c0_2 = arith.constant 0 : index
    %c0_3 = arith.constant 0 : index
    %1 = vector.load %arg3[%c0_1, %c0_2, %c0_3] : memref<1x288x16xbf16, #tpu.memory_space<vmem>>, vector<1x288x16xbf16>
    %2 = vector.shape_cast %1 : vector<1x288x16xbf16> to vector<288x16xbf16>
    %cst = arith.constant dense<0.000000e+00> : vector<64x16xf32>
    %3 = tpu.matmul %0, %2, %cst {dimension_numbers = #tpu.dot_dimension_numbers<[1], [0], [0], [1], [0, 0, 1, 1], [], []>} : vector<64x288xbf16>, vector<288x16xbf16>, vector<64x16xf32> -> vector<64x16xf32>
    %cst_4 = arith.constant 0.000000e+00 : f32
    %4 = vector.broadcast %cst_4 : f32 to vector<64x16xf32>
    %5 = arith.cmpf oge, %3, %4 : vector<64x16xf32>
    %cst_5 = arith.constant 2.000000e-01 : f32
    %6 = vector.broadcast %cst_5 : f32 to vector<64x16xf32>
    %7 = arith.mulf %6, %3 : vector<64x16xf32>
    %8 = arith.select %5, %3, %7 : vector<64x16xi1>, vector<64x16xf32>
    %c0_6 = arith.constant 0 : index
    %c0_7 = arith.constant 0 : index
    %c0_8 = arith.constant 0 : index
    %9 = vector.load %arg4[%c0_6, %c0_7, %c0_8] : memref<1x64x16xf32, #tpu.memory_space<vmem>>, vector<1x64x16xf32>
    %10 = vector.shape_cast %9 : vector<1x64x16xf32> to vector<64x16xf32>
    %11 = vector.shape_cast %8 : vector<64x16xf32> to vector<1x64x16xf32>
    tpu.vector_store %arg4[%c0_6, %c0_7, %c0_8], %11 {strides = array<i32>} : memref<1x64x16xf32, #tpu.memory_space<vmem>>, vector<1x64x16xf32>,
    return
  }
  func.func @transform_0(%arg0: i32, %arg1: i32) -> (i32, i32) {
    %c0_i32 = arith.constant 0 : i32
    %c0_i32_0 = arith.constant 0 : i32
    %c0_i32_1 = arith.constant 0 : i32
    return %c0_i32, %c0_i32_0 : i32, i32
  }
  func.func @transform_1(%arg0: i32, %arg1: i32) -> (i32, i32, i32) {
    %c0_i32 = arith.constant 0 : i32
    %c0_i32_0 = arith.constant 0 : i32
    return %arg0, %c0_i32, %arg1 : i32, i32, i32
  }
  func.func @transform_2(%arg0: i32, %arg1: i32) -> (i32, i32, i32) {
    %c0_i32 = arith.constant 0 : i32
    %c0_i32_0 = arith.constant 0 : i32
    return %arg0, %c0_i32, %arg1 : i32, i32, i32
  }
}

module attributes {stable_mosaic.version = 11 : i64} {
  func.func @_dec_conv_kernel(%arg0: i32, %arg1: i32, %arg2: memref<64x144xbf16, #tpu.memory_space<vmem>>, %arg3: memref<1x144x64xbf16, #tpu.memory_space<vmem>>, %arg4: memref<1x64x64xf32, #tpu.memory_space<vmem>>) attributes {dimension_semantics = [#tpu.dimension_semantics<parallel>, #tpu.dimension_semantics<parallel>], iteration_bounds = array<i64: 2, 1>, scalar_prefetch = 0 : i64, scratch_operands = 0 : i64, tpu.core_type = #tpu.core_type<tc>, window_params = [{pipeline_mode = #tpu.pipeline_mode<synchronous>, transform_indices = @transform_0, window_bounds = array<i64: 64, 144>}, {transform_indices = @transform_1, window_bounds = array<i64: 1, 144, 64>}, {transform_indices = @transform_2, window_bounds = array<i64: 1, 64, 64>}]} {
    %c0 = arith.constant 0 : index
    %c0_0 = arith.constant 0 : index
    %0 = vector.load %arg2[%c0, %c0_0] : memref<64x144xbf16, #tpu.memory_space<vmem>>, vector<64x144xbf16>
    %c0_1 = arith.constant 0 : index
    %c0_2 = arith.constant 0 : index
    %c0_3 = arith.constant 0 : index
    %1 = vector.load %arg3[%c0_1, %c0_2, %c0_3] : memref<1x144x64xbf16, #tpu.memory_space<vmem>>, vector<1x144x64xbf16>
    %2 = vector.shape_cast %1 : vector<1x144x64xbf16> to vector<144x64xbf16>
    %cst = arith.constant dense<0.000000e+00> : vector<64x64xf32>
    %3 = tpu.matmul %0, %2, %cst {dimension_numbers = #tpu.dot_dimension_numbers<[1], [0], [0], [1], [0, 0, 1, 1], [], []>} : vector<64x144xbf16>, vector<144x64xbf16>, vector<64x64xf32> -> vector<64x64xf32>
    %cst_4 = arith.constant 0.000000e+00 : f32
    %4 = vector.broadcast %cst_4 : f32 to vector<64x64xf32>
    %5 = arith.cmpf oge, %3, %4 : vector<64x64xf32>
    %cst_5 = arith.constant 2.000000e-01 : f32
    %6 = vector.broadcast %cst_5 : f32 to vector<64x64xf32>
    %7 = arith.mulf %6, %3 : vector<64x64xf32>
    %8 = arith.select %5, %3, %7 : vector<64x64xi1>, vector<64x64xf32>
    %c0_6 = arith.constant 0 : index
    %c0_7 = arith.constant 0 : index
    %c0_8 = arith.constant 0 : index
    %9 = vector.load %arg4[%c0_6, %c0_7, %c0_8] : memref<1x64x64xf32, #tpu.memory_space<vmem>>, vector<1x64x64xf32>
    %10 = vector.shape_cast %9 : vector<1x64x64xf32> to vector<64x64xf32>
    %11 = vector.shape_cast %8 : vector<64x64xf32> to vector<1x64x64xf32>
    tpu.vector_store %arg4[%c0_6, %c0_7, %c0_8], %11 {strides = array<i32>} : memref<1x64x64xf32, #tpu.memory_space<vmem>>, vector<1x64x64xf32>,
    return
  }
  func.func @transform_0(%arg0: i32, %arg1: i32) -> (i32, i32) {
    %c0_i32 = arith.constant 0 : i32
    %c0_i32_0 = arith.constant 0 : i32
    %c0_i32_1 = arith.constant 0 : i32
    return %c0_i32, %c0_i32_0 : i32, i32
  }
  func.func @transform_1(%arg0: i32, %arg1: i32) -> (i32, i32, i32) {
    %c0_i32 = arith.constant 0 : i32
    %c0_i32_0 = arith.constant 0 : i32
    return %arg0, %c0_i32, %arg1 : i32, i32, i32
  }
  func.func @transform_2(%arg0: i32, %arg1: i32) -> (i32, i32, i32) {
    %c0_i32 = arith.constant 0 : i32
    %c0_i32_0 = arith.constant 0 : i32
    return %arg0, %c0_i32, %arg1 : i32, i32, i32
  }
}

module attributes {stable_mosaic.version = 11 : i64} {
  func.func @_dec_conv_kernel(%arg0: i32, %arg1: i32, %arg2: memref<32x144xbf16, #tpu.memory_space<vmem>>, %arg3: memref<1x144x256xbf16, #tpu.memory_space<vmem>>, %arg4: memref<1x32x256xf32, #tpu.memory_space<vmem>>) attributes {dimension_semantics = [#tpu.dimension_semantics<parallel>, #tpu.dimension_semantics<parallel>], iteration_bounds = array<i64: 2, 1>, scalar_prefetch = 0 : i64, scratch_operands = 0 : i64, tpu.core_type = #tpu.core_type<tc>, window_params = [{pipeline_mode = #tpu.pipeline_mode<synchronous>, transform_indices = @transform_0, window_bounds = array<i64: 32, 144>}, {transform_indices = @transform_1, window_bounds = array<i64: 1, 144, 256>}, {transform_indices = @transform_2, window_bounds = array<i64: 1, 32, 256>}]} {
    %c0 = arith.constant 0 : index
    %c0_0 = arith.constant 0 : index
    %0 = vector.load %arg2[%c0, %c0_0] : memref<32x144xbf16, #tpu.memory_space<vmem>>, vector<32x144xbf16>
    %c0_1 = arith.constant 0 : index
    %c0_2 = arith.constant 0 : index
    %c0_3 = arith.constant 0 : index
    %1 = vector.load %arg3[%c0_1, %c0_2, %c0_3] : memref<1x144x256xbf16, #tpu.memory_space<vmem>>, vector<1x144x256xbf16>
    %2 = vector.shape_cast %1 : vector<1x144x256xbf16> to vector<144x256xbf16>
    %cst = arith.constant dense<0.000000e+00> : vector<32x256xf32>
    %3 = tpu.matmul %0, %2, %cst {dimension_numbers = #tpu.dot_dimension_numbers<[1], [0], [0], [1], [0, 0, 1, 1], [], []>} : vector<32x144xbf16>, vector<144x256xbf16>, vector<32x256xf32> -> vector<32x256xf32>
    %cst_4 = arith.constant 0.000000e+00 : f32
    %4 = vector.broadcast %cst_4 : f32 to vector<32x256xf32>
    %5 = arith.cmpf oge, %3, %4 : vector<32x256xf32>
    %cst_5 = arith.constant 2.000000e-01 : f32
    %6 = vector.broadcast %cst_5 : f32 to vector<32x256xf32>
    %7 = arith.mulf %6, %3 : vector<32x256xf32>
    %8 = arith.select %5, %3, %7 : vector<32x256xi1>, vector<32x256xf32>
    %c0_6 = arith.constant 0 : index
    %c0_7 = arith.constant 0 : index
    %c0_8 = arith.constant 0 : index
    %9 = vector.load %arg4[%c0_6, %c0_7, %c0_8] : memref<1x32x256xf32, #tpu.memory_space<vmem>>, vector<1x32x256xf32>
    %10 = vector.shape_cast %9 : vector<1x32x256xf32> to vector<32x256xf32>
    %11 = vector.shape_cast %8 : vector<32x256xf32> to vector<1x32x256xf32>
    tpu.vector_store %arg4[%c0_6, %c0_7, %c0_8], %11 {strides = array<i32>} : memref<1x32x256xf32, #tpu.memory_space<vmem>>, vector<1x32x256xf32>,
    return
  }
  func.func @transform_0(%arg0: i32, %arg1: i32) -> (i32, i32) {
    %c0_i32 = arith.constant 0 : i32
    %c0_i32_0 = arith.constant 0 : i32
    %c0_i32_1 = arith.constant 0 : i32
    return %c0_i32, %c0_i32_0 : i32, i32
  }
  func.func @transform_1(%arg0: i32, %arg1: i32) -> (i32, i32, i32) {
    %c0_i32 = arith.constant 0 : i32
    %c0_i32_0 = arith.constant 0 : i32
    return %arg0, %c0_i32, %arg1 : i32, i32, i32
  }
  func.func @transform_2(%arg0: i32, %arg1: i32) -> (i32, i32, i32) {
    %c0_i32 = arith.constant 0 : i32
    %c0_i32_0 = arith.constant 0 : i32
    return %arg0, %c0_i32, %arg1 : i32, i32, i32
  }
}

module attributes {stable_mosaic.version = 11 : i64} {
  func.func @_dec_conv_kernel(%arg0: i32, %arg1: i32, %arg2: memref<16x72xbf16, #tpu.memory_space<vmem>>, %arg3: memref<1x72x512xbf16, #tpu.memory_space<vmem>>, %arg4: memref<1x16x512xf32, #tpu.memory_space<vmem>>) attributes {dimension_semantics = [#tpu.dimension_semantics<parallel>, #tpu.dimension_semantics<parallel>], iteration_bounds = array<i64: 2, 2>, scalar_prefetch = 0 : i64, scratch_operands = 0 : i64, tpu.core_type = #tpu.core_type<tc>, window_params = [{pipeline_mode = #tpu.pipeline_mode<synchronous>, transform_indices = @transform_0, window_bounds = array<i64: 16, 72>}, {transform_indices = @transform_1, window_bounds = array<i64: 1, 72, 512>}, {transform_indices = @transform_2, window_bounds = array<i64: 1, 16, 512>}]} {
    %c0 = arith.constant 0 : index
    %c0_0 = arith.constant 0 : index
    %0 = vector.load %arg2[%c0, %c0_0] : memref<16x72xbf16, #tpu.memory_space<vmem>>, vector<16x72xbf16>
    %c0_1 = arith.constant 0 : index
    %c0_2 = arith.constant 0 : index
    %c0_3 = arith.constant 0 : index
    %1 = vector.load %arg3[%c0_1, %c0_2, %c0_3] : memref<1x72x512xbf16, #tpu.memory_space<vmem>>, vector<1x72x512xbf16>
    %2 = vector.shape_cast %1 : vector<1x72x512xbf16> to vector<72x512xbf16>
    %cst = arith.constant dense<0.000000e+00> : vector<16x512xf32>
    %3 = tpu.matmul %0, %2, %cst {dimension_numbers = #tpu.dot_dimension_numbers<[1], [0], [0], [1], [0, 0, 1, 1], [], []>} : vector<16x72xbf16>, vector<72x512xbf16>, vector<16x512xf32> -> vector<16x512xf32>
    %cst_4 = arith.constant 0.000000e+00 : f32
    %4 = vector.broadcast %cst_4 : f32 to vector<16x512xf32>
    %5 = arith.subf %4, %3 : vector<16x512xf32>
    %6 = math.exp %5 : vector<16x512xf32>
    %cst_5 = arith.constant 1.000000e+00 : f32
    %7 = vector.broadcast %cst_5 : f32 to vector<16x512xf32>
    %8 = arith.addf %7, %6 : vector<16x512xf32>
    %cst_6 = arith.constant 1.000000e+00 : f32
    %9 = vector.broadcast %cst_6 : f32 to vector<16x512xf32>
    %10 = arith.divf %9, %8 : vector<16x512xf32>
    %c0_7 = arith.constant 0 : index
    %c0_8 = arith.constant 0 : index
    %c0_9 = arith.constant 0 : index
    %11 = vector.load %arg4[%c0_7, %c0_8, %c0_9] : memref<1x16x512xf32, #tpu.memory_space<vmem>>, vector<1x16x512xf32>
    %12 = vector.shape_cast %11 : vector<1x16x512xf32> to vector<16x512xf32>
    %13 = vector.shape_cast %10 : vector<16x512xf32> to vector<1x16x512xf32>
    tpu.vector_store %arg4[%c0_7, %c0_8, %c0_9], %13 {strides = array<i32>} : memref<1x16x512xf32, #tpu.memory_space<vmem>>, vector<1x16x512xf32>,
    return
  }
  func.func @transform_0(%arg0: i32, %arg1: i32) -> (i32, i32) {
    %c0_i32 = arith.constant 0 : i32
    %c0_i32_0 = arith.constant 0 : i32
    %c0_i32_1 = arith.constant 0 : i32
    return %c0_i32, %c0_i32_0 : i32, i32
  }
  func.func @transform_1(%arg0: i32, %arg1: i32) -> (i32, i32, i32) {
    %c0_i32 = arith.constant 0 : i32
    %c0_i32_0 = arith.constant 0 : i32
    return %arg0, %c0_i32, %arg1 : i32, i32, i32
  }
  func.func @transform_2(%arg0: i32, %arg1: i32) -> (i32, i32, i32) {
    %c0_i32 = arith.constant 0 : i32
    %c0_i32_0 = arith.constant 0 : i32
    return %arg0, %c0_i32, %arg1 : i32, i32, i32
  }
}

</mosaic_0001>

<llo_original>
// kernel: _lambda_.8
$region0: #{_lambda_.8}
  #allocation0 [shape = 'u32[]', space=smem, size = 0x4, offset = 0x4, fixed_abs, tag = 'smem constant byte address 0x4 - core index']
  #allocation1 [shape = 'u32[144,128]{1,0:T(1,128)}', space=vmem, size = 0x12000, scoped, tag = 'internal scratch']
  %s0 = inlined_call_operand.vmem [shape: f32[2,128], index: 0, kind: input, shape index: {}]
  %s1 = inlined_call_operand.vmem [shape: bf16[128,32], index: 1, kind: input, shape index: {}]
  %s2 = inlined_call_operand.hbm [shape: f32[1,32], index: 2, kind: input, shape index: {}]
  %s3 = inlined_call_operand.vmem [shape: bf16[128,32], index: 3, kind: input, shape index: {}]
  %s4 = inlined_call_operand.hbm [shape: f32[1,32], index: 4, kind: input, shape index: {}]
  %s5 = inlined_call_operand.vmem [shape: f32[2,32], index: 5, kind: input, shape index: {}]
  %s6 = inlined_call_operand.vmem [shape: bf16[32,128], index: 6, kind: input, shape index: {}]
  %s7 = inlined_call_operand.hbm [shape: f32[1,128], index: 7, kind: input, shape index: {}]
  %s8 = inlined_call_operand.hbm [shape: f32[2,32], index: 8, kind: output, shape index: {0}]
  %s9 = inlined_call_operand.hbm [shape: f32[2,32], index: 9, kind: output, shape index: {1}]
  %s10 = inlined_call_operand.hbm [shape: f32[2,32], index: 10, kind: output, shape index: {2}]
  %s11 = inlined_call_operand.vmem [shape: f32[2,128], index: 11, kind: output, shape index: {3}]
  %12 = xla_tuple %s8, %s9, %s10, %s11
  %s13 = sld [smem:[#allocation0]]
  $region78: #{_lambda_.8} parent=0
    _
  %s15 = ssub.s32 1, %s13
  %s16 = scalar_select 0, %s15, %s13
  $region1: #{_lambda_.8} parent=0
    #allocation2 [shape = 'u8[512]{0}', space=vmem, size = 0x400, scoped, tag = 'input window, operand 2, single buffered']
    #allocation3 [shape = 's32[1]{0}', space=sflag, size = 0x4, scoped, tag = 'scoped memory for _lambda_.8']
    #allocation4 [shape = 's32[1]{0}', space=sflag, size = 0x4, scoped, tag = 'scoped memory for _lambda_.8']
    #allocation5 [shape = 'u8[512]{0}', space=vmem, size = 0x400, scoped, tag = 'input window, operand 4, single buffered']
    #allocation6 [shape = 's32[1]{0}', space=sflag, size = 0x4, scoped, tag = 'scoped memory for _lambda_.8']
    #allocation7 [shape = 'u8[512]{0}', space=vmem, size = 0x400, scoped, tag = 'input window, operand 7, single buffered']
    #allocation8 [shape = 'u8[1024]{0}', space=vmem, size = 0x400, scoped, tag = 'output window, operand 0, single buffered']
    #allocation9 [shape = 'u8[1024]{0}', space=vmem, size = 0x400, scoped, tag = 'output window, operand 1, single buffered']
    #allocation10 [shape = 's32[1]{0}', space=sflag, size = 0x4, scoped, tag = 'scoped memory for _lambda_.8']
    #allocation11 [shape = 'u8[1024]{0}', space=vmem, size = 0x400, scoped, tag = 'output window, operand 2, single buffered']
    %17 = vsyncpa [#allocation3], 0
    %18 = vsyncpa [#allocation6], 0
    %19 = vsyncpa [#allocation4], 0
    %20 = vsyncpa [#allocation10], 0
    // Predicated region
    $region2: #{_lambda_.8} parent=1 // pred_check
      _
    $region3: #{_lambda_.8} parent=1 // pred_check_branch
      %22 = sbr.rel (0) target = $region5
    $region4: #{_lambda_.8} parent=1 // pred_region
      _
    $region5: #{_lambda_.8} parent=1 // pred_fallthru
      _
    // Predicated region
    $region6: #{_lambda_.8} parent=1 // pred_check
      _
    $region7: #{_lambda_.8} parent=1 // pred_check_branch
      %24 = sbr.rel (0) target = $region9
    $region8: #{_lambda_.8} parent=1 // pred_region
      _
    $region9: #{_lambda_.8} parent=1 // pred_fallthru
      _
    // Predicated region
    $region10: #{_lambda_.8} parent=1 // pred_check
      _
    $region11: #{_lambda_.8} parent=1 // pred_check_branch
      %26 = sbr.rel (0) target = $region13
    $region12: #{_lambda_.8} parent=1 // pred_region
      %s28 = ssub.s32 16, 16
      %29 = vsyncadd [#allocation3], %s28
      %s31 = sshll.u32 [#allocation2], 4
      %s32 = int_to_ptr.vmem [resolvable:$true] %s31
      %34 = dma.hbm_to_vmem [thread:$0]  %s2, 16, %s32, [#allocation3]
    $region13: #{_lambda_.8} parent=1 // pred_fallthru
      _
    // Predicated region
    $region14: #{_lambda_.8} parent=1 // pred_check
      _
    $region15: #{_lambda_.8} parent=1 // pred_check_branch
      %36 = sbr.rel (0) target = $region17
    $region16: #{_lambda_.8} parent=1 // pred_region
      _
    $region17: #{_lambda_.8} parent=1 // pred_fallthru
      _
    // Predicated region
    $region18: #{_lambda_.8} parent=1 // pred_check
      _
    $region19: #{_lambda_.8} parent=1 // pred_check_branch
      %38 = sbr.rel (0) target = $region21
    $region20: #{_lambda_.8} parent=1 // pred_region
      %s40 = ssub.s32 16, 16
      %41 = vsyncadd [#allocation6], %s40
      %s43 = sshll.u32 [#allocation5], 4
      %s44 = int_to_ptr.vmem [resolvable:$true] %s43
      %46 = dma.hbm_to_vmem [thread:$0]  %s4, 16, %s44, [#allocation6]
    $region21: #{_lambda_.8} parent=1 // pred_fallthru
      _
    // Predicated region
    $region22: #{_lambda_.8} parent=1 // pred_check
      _
    $region23: #{_lambda_.8} parent=1 // pred_check_branch
      %48 = sbr.rel (0) target = $region25
    $region24: #{_lambda_.8} parent=1 // pred_region
      _
    $region25: #{_lambda_.8} parent=1 // pred_fallthru
      _
    // Predicated region
    $region26: #{_lambda_.8} parent=1 // pred_check
      _
    $region27: #{_lambda_.8} parent=1 // pred_check_branch
      %50 = sbr.rel (0) target = $region29
    $region28: #{_lambda_.8} parent=1 // pred_region
      _
    $region29: #{_lambda_.8} parent=1 // pred_fallthru
      _
    // Predicated region
    $region30: #{_lambda_.8} parent=1 // pred_check
      _
    $region31: #{_lambda_.8} parent=1 // pred_check_branch
      %52 = sbr.rel (0) target = $region33
    $region32: #{_lambda_.8} parent=1 // pred_region
      %s54 = ssub.s32 16, 16
      %55 = vsyncadd [#allocation6], %s54
      %s57 = sshll.u32 [#allocation7], 4
      %s58 = int_to_ptr.vmem [resolvable:$true] %s57
      %60 = dma.hbm_to_vmem [thread:$0]  %s7, 16, %s58, [#allocation6]
    $region33: #{_lambda_.8} parent=1 // pred_fallthru
      _
    // Predicated region
    $region34: #{_lambda_.8} parent=1 // pred_check
      _
    $region35: #{_lambda_.8} parent=1 // pred_check_branch
      %62 = sbr.rel (0) target = $region37
    $region36: #{_lambda_.8} parent=1 // pred_region
      %63 = dma.done [#allocation3], 16
    $region37: #{_lambda_.8} parent=1 // pred_fallthru
      _
    // Predicated region
    $region38: #{_lambda_.8} parent=1 // pred_check
      _
    $region39: #{_lambda_.8} parent=1 // pred_check_branch
      %65 = sbr.rel (0) target = $region41
    $region40: #{_lambda_.8} parent=1 // pred_region
      %66 = dma.done [#allocation6], 16
    $region41: #{_lambda_.8} parent=1 // pred_fallthru
      _
    // Predicated region
    $region42: #{_lambda_.8} parent=1 // pred_check
      _
    $region43: #{_lambda_.8} parent=1 // pred_check_branch
      %68 = sbr.rel (0) target = $region45
    $region44: #{_lambda_.8} parent=1 // pred_region
      %69 = dma.done [#allocation6], 16
    $region45: #{_lambda_.8} parent=1 // pred_fallthru
      _
    %v71 = vld [vmem:[%s0] sm:$0x3]
    %v72 = vpack.c.bf16 %v71, %v71
    %v73 = vld [vmem:[%s1] sm:$0xf]
    %v74 = vld [vmem:[%s1 + $0x4] sm:$0xf]
    %v75 = vld [vmem:[%s1 + $0x8] sm:$0xf]
    %v76 = vld [vmem:[%s1 + $0xc] sm:$0xf]
    %v77 = vld [vmem:[%s1 + $0x10] sm:$0xf]
    %v78 = vld [vmem:[%s1 + $0x14] sm:$0xf]
    %v79 = vld [vmem:[%s1 + $0x18] sm:$0xf]
    %v80 = vld [vmem:[%s1 + $0x1c] sm:$0xf]
    %v81 = vld [vmem:[%s1 + $0x20] sm:$0xf]
    %v82 = vld [vmem:[%s1 + $0x24] sm:$0xf]
    %v83 = vld [vmem:[%s1 + $0x28] sm:$0xf]
    %v84 = vld [vmem:[%s1 + $0x2c] sm:$0xf]
    %v85 = vld [vmem:[%s1 + $0x30] sm:$0xf]
    %v86 = vld [vmem:[%s1 + $0x34] sm:$0xf]
    %v87 = vld [vmem:[%s1 + $0x38] sm:$0xf]
    %v88 = vld [vmem:[%s1 + $0x3c] sm:$0xf]
    %v89 = vld [vmem:[#allocation2] sm:$0x1]
    %v91 = vlaneseq
    %v92 = vshrl.u32 %v91, 7
    %v93 = vsub.s32 0, %v92
    %v94 = vrot.slane %v89, %v93
    %v112 = vunpack.c.l.b16 %v73
    %v113 = vunpack.c.l.b16 %v74
    %v114 = vunpack.c.l.b16 %v75
    %v115 = vunpack.c.l.b16 %v76
    %v116 = vunpack.c.l.b16 %v77
    %v117 = vunpack.c.l.b16 %v78
    %v118 = vunpack.c.l.b16 %v79
    %v119 = vunpack.c.l.b16 %v80
    %v120 = vunpack.c.l.b16 %v81
    %v121 = vunpack.c.l.b16 %v82
    %v122 = vunpack.c.l.b16 %v83
    %v123 = vunpack.c.l.b16 %v84
    %v124 = vunpack.c.l.b16 %v85
    %v125 = vunpack.c.l.b16 %v86
    %v126 = vunpack.c.l.b16 %v87
    %v127 = vunpack.c.l.b16 %v88
    %v128 = vpack.c.b16 %v113, %v112
    %v129 = vpack.c.b16 %v115, %v114
    %v130 = vpack.c.b16 %v117, %v116
    %v131 = vpack.c.b16 %v119, %v118
    %v132 = vpack.c.b16 %v121, %v120
    %v133 = vpack.c.b16 %v123, %v122
    %v134 = vpack.c.b16 %v125, %v124
    %v135 = vpack.c.b16 %v127, %v126
    %144 = vmatprep.subr.bf16.mxu0 0
    %145 = vmatpush1.bf16.msra.mxu0 %v128
    %146 = vmatprep.subr.bf16.mxu0 0
    %147 = vmatpush1.bf16.msra.mxu0 %v129
    %148 = vmatprep.subr.bf16.mxu0 0
    %149 = vmatpush1.bf16.msra.mxu0 %v130
    %150 = vmatprep.subr.bf16.mxu0 0
    %151 = vmatpush1.bf16.msra.mxu0 %v131
    %152 = vmatprep.subr.bf16.mxu0 0
    %153 = vmatpush1.bf16.msra.mxu0 %v132
    %154 = vmatprep.subr.bf16.mxu0 0
    %155 = vmatpush1.bf16.msra.mxu0 %v133
    %156 = vmatprep.subr.bf16.mxu0 0
    %157 = vmatpush1.bf16.msra.mxu0 %v134
    %158 = vmatprep.subr.bf16.mxu0 0
    %159 = vmatpush1.bf16.msra.mxu0 %v135
    %160 = vmatprep.subr.bf16.mxu0 0
    %161 = vmatpush1.bf16.msra.mxu0 0
    %162 = vmatprep.subr.bf16.mxu0 0
    %163 = vmatpush1.bf16.msra.mxu0 0
    %164 = vmatprep.subr.bf16.mxu0 0
    %165 = vmatpush1.bf16.msra.mxu0 0
    %166 = vmatprep.subr.bf16.mxu0 0
    %167 = vmatpush1.bf16.msra.mxu0 0
    %168 = vmatprep.subr.bf16.mxu0 0
    %169 = vmatpush1.bf16.msra.mxu0 0
    %170 = vmatprep.subr.bf16.mxu0 0
    %171 = vmatpush1.bf16.msra.mxu0 0
    %172 = vmatprep.subr.bf16.mxu0 0
    %173 = vmatpush1.bf16.msra.mxu0 0
    %174 = vmatprep.subr.bf16.mxu0 0
    %175 = vmatpush1.bf16.msra.mxu0 0
    %176 = vmatprep.mubr.bf16.mxu0 0
    %177 = vmatmul.mubr.bf16.gmra.mrb[0].mxu0 %v72
    %v178 = vpop.f32.mrb[0].mxu0
    %v179 = vadd.f32 %v94, %v178
    %v180 = vpop.f32.mrb[0].mxu0
    %v181 = vpop.f32.mrb[0].mxu0
    %v182 = vpop.f32.mrb[0].mxu0
    %183 = vdwg.mxu0
    %v184 = vmax.f32 %v179, 0.0
    %v185 = vand.u32 2147483647, %v179
    %v186 = vsub.f32 0.0, %v185
    %v187 = vmul.f32 %v186, 1.442695
    %v188 = vpow.pop %v187
    %v189 = vadd.f32 %v188, 1.0
    %v190 = vlog2.pop %v189
    %v191 = vmul.f32 %v190, 0.6931472
    %v192 = vmul.f32 -0.5, %v188
    %v193 = vadd.f32 %v192, 1.0
    %v194 = vmul.f32 %v193, %v188
    %v195 = vand.u32 2147483647, %v188
    %vm196 = vcmp.lt.f32.partialorder %v195, 0.0004427343
    %v197 = vsel %vm196, %v194, %v191
    %v198 = vadd.f32 %v184, %v197
    %v199 = vtanh.pop %v198
    %v200 = vmul.f32 %v179, %v199
    %v201 = vld [vmem:[%s3] sm:$0xf]
    %v202 = vld [vmem:[%s3 + $0x4] sm:$0xf]
    %v203 = vld [vmem:[%s3 + $0x8] sm:$0xf]
    %v204 = vld [vmem:[%s3 + $0xc] sm:$0xf]
    %v205 = vld [vmem:[%s3 + $0x10] sm:$0xf]
    %v206 = vld [vmem:[%s3 + $0x14] sm:$0xf]
    %v207 = vld [vmem:[%s3 + $0x18] sm:$0xf]
    %v208 = vld [vmem:[%s3 + $0x1c] sm:$0xf]
    %v209 = vld [vmem:[%s3 + $0x20] sm:$0xf]
    %v210 = vld [vmem:[%s3 + $0x24] sm:$0xf]
    %v211 = vld [vmem:[%s3 + $0x28] sm:$0xf]
    %v212 = vld [vmem:[%s3 + $0x2c] sm:$0xf]
    %v213 = vld [vmem:[%s3 + $0x30] sm:$0xf]
    %v214 = vld [vmem:[%s3 + $0x34] sm:$0xf]
    %v215 = vld [vmem:[%s3 + $0x38] sm:$0xf]
    %v216 = vld [vmem:[%s3 + $0x3c] sm:$0xf]
    %v217 = vld [vmem:[#allocation5] sm:$0x1]
    %v219 = vlaneseq
    %v220 = vshrl.u32 %v219, 7
    %v221 = vsub.s32 0, %v220
    %v222 = vrot.slane %v217, %v221
    %v240 = vunpack.c.l.b16 %v201
    %v241 = vunpack.c.l.b16 %v202
    %v242 = vunpack.c.l.b16 %v203
    %v243 = vunpack.c.l.b16 %v204
    %v244 = vunpack.c.l.b16 %v205
    %v245 = vunpack.c.l.b16 %v206
    %v246 = vunpack.c.l.b16 %v207
    %v247 = vunpack.c.l.b16 %v208
    %v248 = vunpack.c.l.b16 %v209
    %v249 = vunpack.c.l.b16 %v210
    %v250 = vunpack.c.l.b16 %v211
    %v251 = vunpack.c.l.b16 %v212
    %v252 = vunpack.c.l.b16 %v213
    %v253 = vunpack.c.l.b16 %v214
    %v254 = vunpack.c.l.b16 %v215
    %v255 = vunpack.c.l.b16 %v216
    %v256 = vpack.c.b16 %v241, %v240
    %v257 = vpack.c.b16 %v243, %v242
    %v258 = vpack.c.b16 %v245, %v244
    %v259 = vpack.c.b16 %v247, %v246
    %v260 = vpack.c.b16 %v249, %v248
    %v261 = vpack.c.b16 %v251, %v250
    %v262 = vpack.c.b16 %v253, %v252
    %v263 = vpack.c.b16 %v255, %v254
    %272 = vmatprep.subr.bf16.mxu0 0
    %273 = vmatpush1.bf16.msra.mxu0 %v256
    %274 = vmatprep.subr.bf16.mxu0 0
    %275 = vmatpush1.bf16.msra.mxu0 %v257
    %276 = vmatprep.subr.bf16.mxu0 0
    %277 = vmatpush1.bf16.msra.mxu0 %v258
    %278 = vmatprep.subr.bf16.mxu0 0
    %279 = vmatpush1.bf16.msra.mxu0 %v259
    %280 = vmatprep.subr.bf16.mxu0 0
    %281 = vmatpush1.bf16.msra.mxu0 %v260
    %282 = vmatprep.subr.bf16.mxu0 0
    %283 = vmatpush1.bf16.msra.mxu0 %v261
    %284 = vmatprep.subr.bf16.mxu0 0
    %285 = vmatpush1.bf16.msra.mxu0 %v262
    %286 = vmatprep.subr.bf16.mxu0 0
    %287 = vmatpush1.bf16.msra.mxu0 %v263
    %288 = vmatprep.subr.bf16.mxu0 0
    %289 = vmatpush1.bf16.msra.mxu0 0
    %290 = vmatprep.subr.bf16.mxu0 0
    %291 = vmatpush1.bf16.msra.mxu0 0
    %292 = vmatprep.subr.bf16.mxu0 0
    %293 = vmatpush1.bf16.msra.mxu0 0
    %294 = vmatprep.subr.bf16.mxu0 0
    %295 = vmatpush1.bf16.msra.mxu0 0
    %296 = vmatprep.subr.bf16.mxu0 0
    %297 = vmatpush1.bf16.msra.mxu0 0
    %298 = vmatprep.subr.bf16.mxu0 0
    %299 = vmatpush1.bf16.msra.mxu0 0
    %300 = vmatprep.subr.bf16.mxu0 0
    %301 = vmatpush1.bf16.msra.mxu0 0
    %302 = vmatprep.subr.bf16.mxu0 0
    %303 = vmatpush1.bf16.msra.mxu0 0
    %304 = vmatprep.mubr.bf16.mxu0 0
    %305 = vmatmul.mubr.bf16.gmra.mrb[0].mxu0 %v72
    %v306 = vpop.f32.mrb[0].mxu0
    %v307 = vadd.f32 %v222, %v306
    %v308 = vpop.f32.mrb[0].mxu0
    %v309 = vpop.f32.mrb[0].mxu0
    %v310 = vpop.f32.mrb[0].mxu0
    %311 = vdwg.mxu0
    %v312 = vmax.f32 %v307, 0.0
    %v313 = vand.u32 2147483647, %v307
    %v314 = vsub.f32 0.0, %v313
    %v315 = vmul.f32 %v314, 1.442695
    %v316 = vpow.pop %v315
    %v317 = vadd.f32 %v316, 1.0
    %v318 = vlog2.pop %v317
    %v319 = vmul.f32 %v318, 0.6931472
    %v320 = vmul.f32 -0.5, %v316
    %v321 = vadd.f32 %v320, 1.0
    %v322 = vmul.f32 %v321, %v316
    %v323 = vand.u32 2147483647, %v316
    %vm324 = vcmp.lt.f32.partialorder %v323, 0.0004427343
    %v325 = vsel %vm324, %v322, %v319
    %v326 = vadd.f32 %v312, %v325
    %v327 = vtanh.pop %v326
    %v328 = vmul.f32 %v307, %v327
    %v329 = vld [vmem:[%s5] sm:$0x3]
    %v330 = vmul.f32 %v328, 1.442695
    %v331 = vpow.pop %v330
    %v332 = vmul.f32 %v329, %v331
    %v333 = vadd.f32 %v332, %v200
    %vm334 = vcmask 254976
    %335 = vst.msk [vmem:[#allocation8] sm:$0x3] %vm334, %v200
    %336 = vst.msk [vmem:[#allocation9] sm:$0x3] %vm334, %v328
    %337 = vst.msk [vmem:[#allocation11] sm:$0x3] %vm334, %v333
    %v338 = vpack.c.bf16 %v333, %v333
    %v339 = vld [vmem:[%s6] sm:$0xf]
    %v340 = vld [vmem:[%s6 + $0x4] sm:$0xf]
    %v341 = vld [vmem:[%s6 + $0x8] sm:$0xf]
    %v342 = vld [vmem:[%s6 + $0xc] sm:$0xf]
    %v343 = vld [vmem:[#allocation7] sm:$0x1]
    %v345 = vlaneseq
    %v346 = vshrl.u32 %v345, 7
    %v347 = vsub.s32 0, %v346
    %v348 = vrot.slane %v343, %v347
    %v354 = vunpack.c.l.b16 %v339
    %v355 = vunpack.c.l.b16 %v340
    %v356 = vunpack.c.l.b16 %v341
    %v357 = vunpack.c.l.b16 %v342
    %v358 = vpack.c.b16 %v355, %v354
    %v359 = vpack.c.b16 %v357, %v356
    %vm362 = vcmask 261120
    %v364 = vsel %vm362, %v338, 0
    %366 = vmatprep.subr.bf16.mxu0 0
    %367 = vmatpush1.bf16.msra.mxu0 %v358
    %368 = vmatprep.subr.bf16.mxu0 0
    %369 = vmatpush1.bf16.msra.mxu0 %v359
    %370 = vmatprep.subr.bf16.mxu0 0
    %371 = vmatpush1.bf16.msra.mxu0 0
    %372 = vmatprep.subr.bf16.mxu0 0
    %373 = vmatpush1.bf16.msra.mxu0 0
    %374 = vmatprep.subr.bf16.mxu0 0
    %375 = vmatpush1.bf16.msra.mxu0 0
    %376 = vmatprep.subr.bf16.mxu0 0
    %377 = vmatpush1.bf16.msra.mxu0 0
    %378 = vmatprep.subr.bf16.mxu0 0
    %379 = vmatpush1.bf16.msra.mxu0 0
    %380 = vmatprep.subr.bf16.mxu0 0
    %381 = vmatpush1.bf16.msra.mxu0 0
    %382 = vmatprep.subr.bf16.mxu0 0
    %383 = vmatpush1.bf16.msra.mxu0 0
    %384 = vmatprep.subr.bf16.mxu0 0
    %385 = vmatpush1.bf16.msra.mxu0 0
    %386 = vmatprep.subr.bf16.mxu0 0
    %387 = vmatpush1.bf16.msra.mxu0 0
    %388 = vmatprep.subr.bf16.mxu0 0
    %389 = vmatpush1.bf16.msra.mxu0 0
    %390 = vmatprep.subr.bf16.mxu0 0
    %391 = vmatpush1.bf16.msra.mxu0 0
    %392 = vmatprep.subr.bf16.mxu0 0
    %393 = vmatpush1.bf16.msra.mxu0 0
    %394 = vmatprep.subr.bf16.mxu0 0
    %395 = vmatpush1.bf16.msra.mxu0 0
    %396 = vmatprep.subr.bf16.mxu0 0
    %397 = vmatpush1.bf16.msra.mxu0 0
    %398 = vmatprep.mubr.bf16.mxu0 0
    %399 = vmatmul.mubr.bf16.gmra.mrb[0].mxu0 %v364
    %v400 = vpop.f32.mrb[0].mxu0
    %v401 = vadd.f32 %v348, %v400
    %v402 = vpop.f32.mrb[0].mxu0
    %v403 = vpop.f32.mrb[0].mxu0
    %v404 = vpop.f32.mrb[0].mxu0
    %405 = vdwg.mxu0
    %v406 = vmax.f32 %v401, 0.0
    %v407 = vand.u32 2147483647, %v401
    %v408 = vsub.f32 0.0, %v407
    %v409 = vmul.f32 %v408, 1.442695
    %v410 = vpow.pop %v409
    %v411 = vadd.f32 %v410, 1.0
    %v412 = vlog2.pop %v411
    %v413 = vmul.f32 %v412, 0.6931472
    %v414 = vmul.f32 -0.5, %v410
    %v415 = vadd.f32 %v414, 1.0
    %v416 = vmul.f32 %v415, %v410
    %v417 = vand.u32 2147483647, %v410
    %vm418 = vcmp.lt.f32.partialorder %v417, 0.0004427343
    %v419 = vsel %vm418, %v416, %v413
    %v420 = vadd.f32 %v406, %v419
    %v421 = vtanh.pop %v420
    %v422 = vmul.f32 %v401, %v421
    %423 = vst [vmem:[%s11] sm:$0x3] %v422
    // Predicated region
    $region46: #{_lambda_.8} parent=1 // pred_check
      _
    $region47: #{_lambda_.8} parent=1 // pred_check_branch
      %425 = sbr.rel (0) target = $region49
    $region48: #{_lambda_.8} parent=1 // pred_region
      %s427 = ssub.s32 32, 32
      %428 = vsyncadd [#allocation4], %s427
      %s430 = sshll.u32 [#allocation8], 4
      %s431 = int_to_ptr.vmem [resolvable:$true] %s430
      %433 = dma.vmem_to_hbm [thread:$0]  %s431, 32, %s8, [#allocation4]
    $region49: #{_lambda_.8} parent=1 // pred_fallthru
      _
    // Predicated region
    $region50: #{_lambda_.8} parent=1 // pred_check
      _
    $region51: #{_lambda_.8} parent=1 // pred_check_branch
      %435 = sbr.rel (0) target = $region53
    $region52: #{_lambda_.8} parent=1 // pred_region
      %s437 = ssub.s32 32, 32
      %438 = vsyncadd [#allocation10], %s437
      %s440 = sshll.u32 [#allocation9], 4
      %s441 = int_to_ptr.vmem [resolvable:$true] %s440
      %443 = dma.vmem_to_hbm [thread:$0]  %s441, 32, %s9, [#allocation10]
    $region53: #{_lambda_.8} parent=1 // pred_fallthru
      _
    // Predicated region
    $region54: #{_lambda_.8} parent=1 // pred_check
      _
    $region55: #{_lambda_.8} parent=1 // pred_check_branch
      %445 = sbr.rel (0) target = $region57
    $region56: #{_lambda_.8} parent=1 // pred_region
      %s447 = ssub.s32 32, 32
      %448 = vsyncadd [#allocation10], %s447
      %s450 = sshll.u32 [#allocation11], 4
      %s451 = int_to_ptr.vmem [resolvable:$true] %s450
      %453 = dma.vmem_to_hbm [thread:$0]  %s451, 32, %s10, [#allocation10]
    $region57: #{_lambda_.8} parent=1 // pred_fallthru
      _
    // Predicated region
    $region58: #{_lambda_.8} parent=1 // pred_check
      _
    $region59: #{_lambda_.8} parent=1 // pred_check_branch
      %455 = sbr.rel (0) target = $region61
    $region60: #{_lambda_.8} parent=1 // pred_region
      _
    $region61: #{_lambda_.8} parent=1 // pred_fallthru
      _
    // Predicated region
    $region62: #{_lambda_.8} parent=1 // pred_check
      _
    $region63: #{_lambda_.8} parent=1 // pred_check_branch
      %457 = sbr.rel (0) target = $region65
    $region64: #{_lambda_.8} parent=1 // pred_region
      %458 = dma.done [#allocation4], 32
    $region65: #{_lambda_.8} parent=1 // pred_fallthru
      _
    // Predicated region
    $region66: #{_lambda_.8} parent=1 // pred_check
      _
    $region67: #{_lambda_.8} parent=1 // pred_check_branch
      %460 = sbr.rel (0) target = $region69
    $region68: #{_lambda_.8} parent=1 // pred_region
      %461 = dma.done [#allocation10], 32
    $region69: #{_lambda_.8} parent=1 // pred_fallthru
      _
    // Predicated region
    $region70: #{_lambda_.8} parent=1 // pred_check
      _
    $region71: #{_lambda_.8} parent=1 // pred_check_branch
      %463 = sbr.rel (0) target = $region73
    $region72: #{_lambda_.8} parent=1 // pred_region
      %464 = dma.done [#allocation10], 32
    $region73: #{_lambda_.8} parent=1 // pred_fallthru
      _
    // Predicated region
    $region74: #{_lambda_.8} parent=1 // pred_check
      _
    $region75: #{_lambda_.8} parent=1 // pred_check_branch
      %466 = sbr.rel (0) target = $region77
    $region76: #{_lambda_.8} parent=1 // pred_region
      _
    $region77: #{_lambda_.8} parent=1 // pred_fallthru
      _
    %467 = vsyncpa [#allocation3], 1
    %468 = vsyncpa [#allocation6], 1
    %469 = vsyncpa [#allocation4], 1
    %470 = vsyncpa [#allocation10], 1

// kernel: _lambda_.7
$region0: #{_lambda_.7}
  #allocation0 [shape = 'u32[]', space=smem, size = 0x4, offset = 0x4, fixed_abs, tag = 'smem constant byte address 0x4 - core index']
  #allocation1 [shape = 'u32[144,128]{1,0:T(1,128)}', space=vmem, size = 0x12000, scoped, tag = 'internal scratch']
  %s0 = inlined_call_operand.vmem [shape: bf16[2,256,36], index: 0, kind: input, shape index: {}]
  %s1 = inlined_call_operand.vmem [shape: bf16[36,128], index: 1, kind: input, shape index: {}]
  %s2 = inlined_call_operand.hbm [shape: f32[1,128], index: 2, kind: input, shape index: {}]
  %s3 = inlined_call_operand.vmem [shape: f32[2,1,128], index: 3, kind: output, shape index: {}]
  %s4 = sld [smem:[#allocation0]]
  $region49: #{_lambda_.7} parent=0
    _
  %s6 = ssub.s32 1, %s4
  %s7 = scalar_select 0, %s6, %s4
  $region1: #{_lambda_.7} parent=0
    #allocation2 [shape = 'u8[512]{0}', space=vmem, size = 0x400, scoped, tag = 'input window, operand 2, single buffered']
    #allocation3 [shape = 's32[2]{0}', space=sflag, size = 0x8, scoped, tag = 'scoped memory for _lambda_.7']
    %8 = vsyncpa [#allocation3], 0
    loop: start=0, step=1, limit=4
    $region2: #{_lambda_.7} parent=1 // loop_pre_header
      _
    $region3: #{_lambda_.7} parent=1 // loop_header
      %s10 = sphi 0, %s14
      %p11 = scmp.ge.s32.totalorder %s10, 4
      %s20 = sphi 0, %s22
      %s23 = sphi 0, %s20
      %s24 = sphi 0, %s23
      %s40 = sphi 0, %s24
      %s44 = sphi 0, %s44
      %s46 = sphi 0, %s44
      %s47 = sphi 0, %s46
      %s61 = sphi 0, %s47
      %s65 = sphi 0, %s65
      %s67 = sphi 0, %s65
      %s68 = sphi 0, %s67
      %s82 = sphi 0, %s68
      %s88 = sphi 0, %s90
      %s91 = sphi 0, %s88
      %s92 = sphi 0, %s91
      %s108 = sphi 0, %s92
    $region4: #{_lambda_.7} parent=1 // loop_header_branch
      %13 = sbr.rel (%p11) target = $region8
    $region5: #{_lambda_.7} parent=1 // loop_body
      %s15 = ssub.s32 %s10, 1
      %s16 = ssub.s32 %s10, 2
      %s17 = sadd.s32 %s10, 1
      %s18 = ssub.s32 %s10, %s17
      %p19 = scmp.eq.s32.totalorder %s18, 0
      %s21 = sadd.s32 %s20, 1
      %s22 = scalar_select %p19, %s20, %s21
      %p25 = pneg %p19
      %p26 = scmp.eq.s32.totalorder %s10, 1
      %p27 = por %p25, %p26
      %p28 = scmp.ne.s32.totalorder %s20, %s23
      %p29 = scmp.eq.s32.totalorder %s10, 0
      %p30 = por %p28, %p29
      %p31 = scmp.ne.s32.totalorder %s20, %s23
      %p32 = scmp.eq.s32.totalorder %s15, 1
      %p33 = por %p31, %p32
      %p34 = scmp.ne.s32.totalorder %s23, %s24
      %p35 = scmp.eq.s32.totalorder %s15, 0
      %p36 = por %p34, %p35
      %p37 = scmp.ne.s32.totalorder %s23, %s24
      %p38 = scmp.eq.s32.totalorder %s16, 1
      %p39 = por %p37, %p38
      %p41 = scmp.ne.s32.totalorder %s24, %s40
      %p42 = scmp.eq.s32.totalorder %s16, 0
      %p43 = por %p41, %p42
      %s45 = sadd.s32 %s44, 1
      %p48 = scmp.eq.s32.totalorder %s10, 1
      %p49 = scmp.ne.s32.totalorder %s44, %s46
      %p50 = scmp.eq.s32.totalorder %s10, 0
      %p51 = por %p49, %p50
      %p52 = scmp.ne.s32.totalorder %s44, %s46
      %p53 = scmp.eq.s32.totalorder %s15, 1
      %p54 = por %p52, %p53
      %p55 = scmp.ne.s32.totalorder %s46, %s47
      %p56 = scmp.eq.s32.totalorder %s15, 0
      %p57 = por %p55, %p56
      %p58 = scmp.ne.s32.totalorder %s46, %s47
      %p59 = scmp.eq.s32.totalorder %s16, 1
      %p60 = por %p58, %p59
      %p62 = scmp.ne.s32.totalorder %s47, %s61
      %p63 = scmp.eq.s32.totalorder %s16, 0
      %p64 = por %p62, %p63
      %s66 = sadd.s32 %s65, 1
      %p69 = scmp.eq.s32.totalorder %s10, 1
      %p70 = scmp.ne.s32.totalorder %s65, %s67
      %p71 = scmp.eq.s32.totalorder %s10, 0
      %p72 = por %p70, %p71
      %p73 = scmp.ne.s32.totalorder %s65, %s67
      %p74 = scmp.eq.s32.totalorder %s15, 1
      %p75 = por %p73, %p74
      %p76 = scmp.ne.s32.totalorder %s67, %s68
      %p77 = scmp.eq.s32.totalorder %s15, 0
      %p78 = por %p76, %p77
      %p79 = scmp.ne.s32.totalorder %s67, %s68
      %p80 = scmp.eq.s32.totalorder %s16, 1
      %p81 = por %p79, %p80
      %p83 = scmp.ne.s32.totalorder %s68, %s82
      %p84 = scmp.eq.s32.totalorder %s16, 0
      %p85 = por %p83, %p84
      %s86 = ssub.s32 %s10, %s17
      %p87 = scmp.eq.s32.totalorder %s86, 0
      %s89 = sadd.s32 %s88, 1
      %s90 = scalar_select %p87, %s88, %s89
      %p93 = pneg %p87
      %p94 = scmp.eq.s32.totalorder %s10, 1
      %p95 = por %p93, %p94
      %p96 = scmp.ne.s32.totalorder %s88, %s91
      %p97 = scmp.eq.s32.totalorder %s10, 0
      %p98 = por %p96, %p97
      %p99 = scmp.ne.s32.totalorder %s88, %s91
      %p100 = scmp.eq.s32.totalorder %s15, 1
      %p101 = por %p99, %p100
      %p102 = scmp.ne.s32.totalorder %s91, %s92
      %p103 = scmp.eq.s32.totalorder %s15, 0
      %p104 = por %p102, %p103
      %p105 = scmp.ne.s32.totalorder %s91, %s92
      %p106 = scmp.eq.s32.totalorder %s16, 1
      %p107 = por %p105, %p106
      %p109 = scmp.ne.s32.totalorder %s92, %s108
      %p110 = scmp.eq.s32.totalorder %s16, 0
      %p111 = por %p109, %p110
      %p112 = scmp.le.s32.totalorder 1, %s10
      %p113 = scmp.lt.s32.totalorder %s10, 3
      %p114 = pnand %p112, %p113
      %p115 = pneg %p114
      // Predicated region
      $region9: #{_lambda_.7} parent=5 // pred_check
        _
      $region10: #{_lambda_.7} parent=5 // pred_check_branch
        %117 = sbr.rel (%p114) target = $region12
      $region11: #{_lambda_.7} parent=5 // pred_region
        %s118 = ssub.s32 %s10, 1
        // Predicated region
        $region13: #{_lambda_.7} parent=11 // pred_check
          %p119 = pneg %p57
        $region14: #{_lambda_.7} parent=11 // pred_check_branch
          %121 = sbr.rel (%p119) target = $region16
        $region15: #{_lambda_.7} parent=11 // pred_region
          _
        $region16: #{_lambda_.7} parent=11 // pred_fallthru
          _
        // Predicated region
        $region17: #{_lambda_.7} parent=11 // pred_check
          %p122 = pneg %p78
        $region18: #{_lambda_.7} parent=11 // pred_check_branch
          %124 = sbr.rel (%p122) target = $region20
        $region19: #{_lambda_.7} parent=11 // pred_region
          %s126 = ssub.s32 16, 16
          %127 = vsyncadd [#allocation3], %s126
          %s129 = sshll.u32 [#allocation2], 4
          %s130 = int_to_ptr.vmem [resolvable:$true] %s129
          %132 = dma.hbm_to_vmem [thread:$0]  %s2, 16, %s130, [#allocation3]
        $region20: #{_lambda_.7} parent=11 // pred_fallthru
          _
      $region12: #{_lambda_.7} parent=5 // pred_fallthru
        _
      %p133 = scmp.lt.s32.totalorder %s10, 2
      // Predicated region
      $region21: #{_lambda_.7} parent=5 // pred_check
        %p134 = pneg %p133
      $region22: #{_lambda_.7} parent=5 // pred_check_branch
        %136 = sbr.rel (%p134) target = $region24
      $region23: #{_lambda_.7} parent=5 // pred_region
        // Predicated region
        $region25: #{_lambda_.7} parent=23 // pred_check
          %p137 = pneg %p30
        $region26: #{_lambda_.7} parent=23 // pred_check_branch
          %139 = sbr.rel (%p137) target = $region28
        $region27: #{_lambda_.7} parent=23 // pred_region
          %p140 = scmp.lt.s32.totalorder %s10, 1
          %s141 = scalar_select %p140, %s10, 1
          %s142 = smul.addr %s141, 32
          %s143 = smul.addr %s142, 4
          %s144 = scalar_lea.vmem %s0, %s143
        $region28: #{_lambda_.7} parent=23 // pred_fallthru
          _
      $region24: #{_lambda_.7} parent=5 // pred_fallthru
        _
      %p145 = scmp.le.s32.totalorder 1, %s10
      %p146 = scmp.lt.s32.totalorder %s10, 3
      %p147 = pnand %p145, %p146
      %p148 = pneg %p147
      // Predicated region
      $region29: #{_lambda_.7} parent=5 // pred_check
        _
      $region30: #{_lambda_.7} parent=5 // pred_check_branch
        %150 = sbr.rel (%p147) target = $region32
      $region31: #{_lambda_.7} parent=5 // pred_region
        %s151 = ssub.s32 %s10, 1
        // Predicated region
        $region33: #{_lambda_.7} parent=31 // pred_check
          %p152 = pneg %p78
        $region34: #{_lambda_.7} parent=31 // pred_check_branch
          %154 = sbr.rel (%p152) target = $region36
        $region35: #{_lambda_.7} parent=31 // pred_region
          %155 = dma.done [#allocation3], 16
        $region36: #{_lambda_.7} parent=31 // pred_fallthru
          _
        %p156 = scmp.lt.s32.totalorder %s15, 1
        %s157 = scalar_select %p156, %s15, 1
        %s158 = smul.addr %s157, 32
        %s159 = smul.addr %s158, 4
        %s160 = scalar_lea.vmem %s0, %s159
        %p161 = pneg %p36
        %p162 = pneg %p33
        %p163 = pneg %p57
        %p164 = pneg %p54
        %p165 = pneg %p78
        %p166 = pneg %p75
        %p167 = pneg %p104
        %p168 = pneg %p101
        %p169 = scmp.lt.s32.totalorder %s15, 1
        %s170 = scalar_select %p169, %s15, 1
        %s171 = scalar_lea.vmem %s3, %s170
        %p172 = scmp.lt.s32.totalorder %s15, 1
        %s173 = scalar_select %p172, %s15, 1
        %s174 = smul.addr %s173, 32
        %s175 = smul.addr %s174, 4
        %s176 = scalar_lea.vmem %s0, %s175
        %p177 = scmp.lt.s32.totalorder %s15, 1
        %s178 = scalar_select %p177, %s15, 1
        %s179 = scalar_lea.vmem %s3, %s178
        %v181 = vld [vmem:[%s176] sm:$0xf]
        %v182 = vld [vmem:[%s176 + $0x4] sm:$0xf]
        %v183 = vld [vmem:[%s176 + $0x8] sm:$0xf]
        %v184 = vld [vmem:[%s176 + $0xc] sm:$0xf]
        %v185 = vld [vmem:[%s176 + $0x10] sm:$0xf]
        %v186 = vld [vmem:[%s176 + $0x14] sm:$0xf]
        %v187 = vld [vmem:[%s176 + $0x18] sm:$0xf]
        %v188 = vld [vmem:[%s176 + $0x1c] sm:$0xf]
        %v189 = vld [vmem:[%s176 + $0x20] sm:$0xf]
        %v190 = vld [vmem:[%s176 + $0x24] sm:$0xf]
        %v191 = vld [vmem:[%s176 + $0x28] sm:$0xf]
        %v192 = vld [vmem:[%s176 + $0x2c] sm:$0xf]
        %v193 = vld [vmem:[%s176 + $0x30] sm:$0xf]
        %v194 = vld [vmem:[%s176 + $0x34] sm:$0xf]
        %v195 = vld [vmem:[%s176 + $0x38] sm:$0xf]
        %v196 = vld [vmem:[%s176 + $0x3c] sm:$0xf]
        %v197 = vld [vmem:[%s176 + $0x40] sm:$0xf]
        %v198 = vld [vmem:[%s176 + $0x44] sm:$0xf]
        %v199 = vld [vmem:[%s176 + $0x48] sm:$0xf]
        %v200 = vld [vmem:[%s176 + $0x4c] sm:$0xf]
        %v201 = vld [vmem:[%s176 + $0x50] sm:$0xf]
        %v202 = vld [vmem:[%s176 + $0x54] sm:$0xf]
        %v203 = vld [vmem:[%s176 + $0x58] sm:$0xf]
        %v204 = vld [vmem:[%s176 + $0x5c] sm:$0xf]
        %v205 = vld [vmem:[%s176 + $0x60] sm:$0xf]
        %v206 = vld [vmem:[%s176 + $0x64] sm:$0xf]
        %v207 = vld [vmem:[%s176 + $0x68] sm:$0xf]
        %v208 = vld [vmem:[%s176 + $0x6c] sm:$0xf]
        %v209 = vld [vmem:[%s176 + $0x70] sm:$0xf]
        %v210 = vld [vmem:[%s176 + $0x74] sm:$0xf]
        %v211 = vld [vmem:[%s176 + $0x78] sm:$0xf]
        %v212 = vld [vmem:[%s176 + $0x7c] sm:$0xf]
        %v213 = vld [vmem:[%s1] sm:$0xf]
        %v214 = vld [vmem:[%s1 + $0x4] sm:$0xf]
        %v215 = vld [vmem:[%s1 + $0x8] sm:$0xf]
        %v216 = vld [vmem:[%s1 + $0xc] sm:$0xf]
        %v217 = vld [vmem:[%s1 + $0x10] sm:$0x3]
        %v218 = vld [vmem:[#allocation2] sm:$0x1]
        %v220 = vlaneseq
        %v221 = vshrl.u32 %v220, 7
        %v222 = vsub.s32 0, %v221
        %v223 = vrot.slane %v218, %v222
        %v257 = vunpack.c.l.b16 %v181
        %v258 = vunpack.c.l.b16 %v182
        %v259 = vunpack.c.l.b16 %v183
        %v260 = vunpack.c.l.b16 %v184
        %v261 = vunpack.c.l.b16 %v185
        %v262 = vunpack.c.l.b16 %v186
        %v263 = vunpack.c.l.b16 %v187
        %v264 = vunpack.c.l.b16 %v188
        %v265 = vunpack.c.l.b16 %v189
        %v266 = vunpack.c.l.b16 %v190
        %v267 = vunpack.c.l.b16 %v191
        %v268 = vunpack.c.l.b16 %v192
        %v269 = vunpack.c.l.b16 %v193
        %v270 = vunpack.c.l.b16 %v194
        %v271 = vunpack.c.l.b16 %v195
        %v272 = vunpack.c.l.b16 %v196
        %v273 = vunpack.c.l.b16 %v197
        %v274 = vunpack.c.l.b16 %v198
        %v275 = vunpack.c.l.b16 %v199
        %v276 = vunpack.c.l.b16 %v200
        %v277 = vunpack.c.l.b16 %v201
        %v278 = vunpack.c.l.b16 %v202
        %v279 = vunpack.c.l.b16 %v203
        %v280 = vunpack.c.l.b16 %v204
        %v281 = vunpack.c.l.b16 %v205
        %v282 = vunpack.c.l.b16 %v206
        %v283 = vunpack.c.l.b16 %v207
        %v284 = vunpack.c.l.b16 %v208
        %v285 = vunpack.c.l.b16 %v209
        %v286 = vunpack.c.l.b16 %v210
        %v287 = vunpack.c.l.b16 %v211
        %v288 = vunpack.c.l.b16 %v212
        %v289 = vpack.c.b16 %v258, %v257
        %v290 = vpack.c.b16 %v260, %v259
        %v291 = vpack.c.b16 %v262, %v261
        %v292 = vpack.c.b16 %v264, %v263
        %v293 = vpack.c.b16 %v266, %v265
        %v294 = vpack.c.b16 %v268, %v267
        %v295 = vpack.c.b16 %v270, %v269
        %v296 = vpack.c.b16 %v272, %v271
        %v297 = vpack.c.b16 %v274, %v273
        %v298 = vpack.c.b16 %v276, %v275
        %v299 = vpack.c.b16 %v278, %v277
        %v300 = vpack.c.b16 %v280, %v279
        %v301 = vpack.c.b16 %v282, %v281
        %v302 = vpack.c.b16 %v284, %v283
        %v303 = vpack.c.b16 %v286, %v285
        %v304 = vpack.c.b16 %v288, %v287
        %v310 = vunpack.c.l.b16 %v213
        %v311 = vunpack.c.l.b16 %v214
        %v312 = vunpack.c.l.b16 %v215
        %v313 = vunpack.c.l.b16 %v216
        %v314 = vunpack.c.l.b16 %v217
        %v315 = vpack.c.b16 %v311, %v310
        %v316 = vpack.c.b16 %v313, %v312
        %v317 = vpack.c.b16 %v314, %v314
        %vm320 = vcmask 293888
        %v322 = vsel %vm320, %v289, 0
        %v325 = vsel %vm320, %v290, 0
        %v328 = vsel %vm320, %v291, 0
        %v331 = vsel %vm320, %v292, 0
        %v334 = vsel %vm320, %v293, 0
        %v337 = vsel %vm320, %v294, 0
        %v340 = vsel %vm320, %v295, 0
        %v343 = vsel %vm320, %v296, 0
        %v346 = vsel %vm320, %v297, 0
        %v349 = vsel %vm320, %v298, 0
        %v352 = vsel %vm320, %v299, 0
        %v355 = vsel %vm320, %v300, 0
        %v358 = vsel %vm320, %v301, 0
        %v361 = vsel %vm320, %v302, 0
        %v364 = vsel %vm320, %v303, 0
        %v367 = vsel %vm320, %v304, 0
        %vm369 = vcmask 1041408
        %v371 = vsel %vm369, %v317, 0
        %373 = vmatprep.subr.bf16.mxu0 0
        %374 = vmatpush1.bf16.msra.mxu0 %v315
        %375 = vmatprep.subr.bf16.mxu0 0
        %376 = vmatpush1.bf16.msra.mxu0 %v316
        %377 = vmatprep.subr.bf16.mxu0 0
        %378 = vmatpush1.bf16.msra.mxu0 %v371
        %379 = vmatprep.subr.bf16.mxu0 0
        %380 = vmatpush1.bf16.msra.mxu0 0
        %381 = vmatprep.subr.bf16.mxu0 0
        %382 = vmatpush1.bf16.msra.mxu0 0
        %383 = vmatprep.subr.bf16.mxu0 0
        %384 = vmatpush1.bf16.msra.mxu0 0
        %385 = vmatprep.subr.bf16.mxu0 0
        %386 = vmatpush1.bf16.msra.mxu0 0
        %387 = vmatprep.subr.bf16.mxu0 0
        %388 = vmatpush1.bf16.msra.mxu0 0
        %389 = vmatprep.subr.bf16.mxu0 0
        %390 = vmatpush1.bf16.msra.mxu0 0
        %391 = vmatprep.subr.bf16.mxu0 0
        %392 = vmatpush1.bf16.msra.mxu0 0
        %393 = vmatprep.subr.bf16.mxu0 0
        %394 = vmatpush1.bf16.msra.mxu0 0
        %395 = vmatprep.subr.bf16.mxu0 0
        %396 = vmatpush1.bf16.msra.mxu0 0
        %397 = vmatprep.subr.bf16.mxu0 0
        %398 = vmatpush1.bf16.msra.mxu0 0
        %399 = vmatprep.subr.bf16.mxu0 0
        %400 = vmatpush1.bf16.msra.mxu0 0
        %401 = vmatprep.subr.bf16.mxu0 0
        %402 = vmatpush1.bf16.msra.mxu0 0
        %403 = vmatprep.subr.bf16.mxu0 0
        %404 = vmatpush1.bf16.msra.mxu0 0
        %405 = vmatprep.mubr.bf16.mxu0 0
        %406 = vmatmul.mubr.bf16.gmra.mrb[0].mxu0 %v322
        %v407 = vpop.f32.mrb[0].mxu0
        %v408 = vadd.f32 %v223, %v407
        %v409 = vpop.f32.mrb[0].mxu0
        %v410 = vpop.f32.mrb[0].mxu0
        %v411 = vadd.f32 %v223, %v410
        %v412 = vpop.f32.mrb[0].mxu0
        %413 = vmatprep.mubr.bf16.mxu0 0
        %414 = vmatmul.mubr.bf16.gmra.mrb[0].mxu0 %v325
        %v415 = vpop.f32.mrb[0].mxu0
        %v416 = vadd.f32 %v223, %v415
        %v417 = vpop.f32.mrb[0].mxu0
        %v418 = vpop.f32.mrb[0].mxu0
        %v419 = vadd.f32 %v223, %v418
        %v420 = vpop.f32.mrb[0].mxu0
        %421 = vmatprep.mubr.bf16.mxu0 0
        %422 = vmatmul.mubr.bf16.gmra.mrb[0].mxu0 %v328
        %v423 = vpop.f32.mrb[0].mxu0
        %v424 = vadd.f32 %v223, %v423
        %v425 = vpop.f32.mrb[0].mxu0
        %v426 = vpop.f32.mrb[0].mxu0
        %v427 = vadd.f32 %v223, %v426
        %v428 = vpop.f32.mrb[0].mxu0
        %429 = vmatprep.mubr.bf16.mxu0 0
        %430 = vmatmul.mubr.bf16.gmra.mrb[0].mxu0 %v331
        %v431 = vpop.f32.mrb[0].mxu0
        %v432 = vadd.f32 %v223, %v431
        %v433 = vpop.f32.mrb[0].mxu0
        %v434 = vpop.f32.mrb[0].mxu0
        %v435 = vadd.f32 %v223, %v434
        %v436 = vpop.f32.mrb[0].mxu0
        %437 = vmatprep.mubr.bf16.mxu0 0
        %438 = vmatmul.mubr.bf16.gmra.mrb[0].mxu0 %v334
        %v439 = vpop.f32.mrb[0].mxu0
        %v440 = vadd.f32 %v223, %v439
        %v441 = vpop.f32.mrb[0].mxu0
        %v442 = vpop.f32.mrb[0].mxu0
        %v443 = vadd.f32 %v223, %v442
        %v444 = vpop.f32.mrb[0].mxu0
        %445 = vmatprep.mubr.bf16.mxu0 0
        %446 = vmatmul.mubr.bf16.gmra.mrb[0].mxu0 %v337
        %v447 = vpop.f32.mrb[0].mxu0
        %v448 = vadd.f32 %v223, %v447
        %v449 = vpop.f32.mrb[0].mxu0
        %v450 = vpop.f32.mrb[0].mxu0
        %v451 = vadd.f32 %v223, %v450
        %v452 = vpop.f32.mrb[0].mxu0
        %453 = vmatprep.mubr.bf16.mxu0 0
        %454 = vmatmul.mubr.bf16.gmra.mrb[0].mxu0 %v340
        %v455 = vpop.f32.mrb[0].mxu0
        %v456 = vadd.f32 %v223, %v455
        %v457 = vpop.f32.mrb[0].mxu0
        %v458 = vpop.f32.mrb[0].mxu0
        %v459 = vadd.f32 %v223, %v458
        %v460 = vpop.f32.mrb[0].mxu0
        %461 = vmatprep.mubr.bf16.mxu0 0
        %462 = vmatmul.mubr.bf16.gmra.mrb[0].mxu0 %v343
        %v463 = vpop.f32.mrb[0].mxu0
        %v464 = vadd.f32 %v223, %v463
        %v465 = vpop.f32.mrb[0].mxu0
        %v466 = vpop.f32.mrb[0].mxu0
        %v467 = vadd.f32 %v223, %v466
        %v468 = vpop.f32.mrb[0].mxu0
        %469 = vmatprep.mubr.bf16.mxu0 0
        %470 = vmatmul.mubr.bf16.gmra.mrb[0].mxu0 %v346
        %v471 = vpop.f32.mrb[0].mxu0
        %v472 = vadd.f32 %v223, %v471
        %v473 = vpop.f32.mrb[0].mxu0
        %v474 = vpop.f32.mrb[0].mxu0
        %v475 = vadd.f32 %v223, %v474
        %v476 = vpop.f32.mrb[0].mxu0
        %477 = vmatprep.mubr.bf16.mxu0 0
        %478 = vmatmul.mubr.bf16.gmra.mrb[0].mxu0 %v349
        %v479 = vpop.f32.mrb[0].mxu0
        %v480 = vadd.f32 %v223, %v479
        %v481 = vpop.f32.mrb[0].mxu0
        %v482 = vpop.f32.mrb[0].mxu0
        %v483 = vadd.f32 %v223, %v482
        %v484 = vpop.f32.mrb[0].mxu0
        %485 = vmatprep.mubr.bf16.mxu0 0
        %486 = vmatmul.mubr.bf16.gmra.mrb[0].mxu0 %v352
        %v487 = vpop.f32.mrb[0].mxu0
        %v488 = vadd.f32 %v223, %v487
        %v489 = vpop.f32.mrb[0].mxu0
        %v490 = vpop.f32.mrb[0].mxu0
        %v491 = vadd.f32 %v223, %v490
        %v492 = vpop.f32.mrb[0].mxu0
        %493 = vmatprep.mubr.bf16.mxu0 0
        %494 = vmatmul.mubr.bf16.gmra.mrb[0].mxu0 %v355
        %v495 = vpop.f32.mrb[0].mxu0
        %v496 = vadd.f32 %v223, %v495
        %v497 = vpop.f32.mrb[0].mxu0
        %v498 = vpop.f32.mrb[0].mxu0
        %v499 = vadd.f32 %v223, %v498
        %v500 = vpop.f32.mrb[0].mxu0
        %501 = vmatprep.mubr.bf16.mxu0 0
        %502 = vmatmul.mubr.bf16.gmra.mrb[0].mxu0 %v358
        %v503 = vpop.f32.mrb[0].mxu0
        %v504 = vadd.f32 %v223, %v503
        %v505 = vpop.f32.mrb[0].mxu0
        %v506 = vpop.f32.mrb[0].mxu0
        %v507 = vadd.f32 %v223, %v506
        %v508 = vpop.f32.mrb[0].mxu0
        %509 = vmatprep.mubr.bf16.mxu0 0
        %510 = vmatmul.mubr.bf16.gmra.mrb[0].mxu0 %v361
        %v511 = vpop.f32.mrb[0].mxu0
        %v512 = vadd.f32 %v223, %v511
        %v513 = vpop.f32.mrb[0].mxu0
        %v514 = vpop.f32.mrb[0].mxu0
        %v515 = vadd.f32 %v223, %v514
        %v516 = vpop.f32.mrb[0].mxu0
        %517 = vmatprep.mubr.bf16.mxu0 0
        %518 = vmatmul.mubr.bf16.gmra.mrb[0].mxu0 %v364
        %v519 = vpop.f32.mrb[0].mxu0
        %v520 = vadd.f32 %v223, %v519
        %v521 = vpop.f32.mrb[0].mxu0
        %v522 = vpop.f32.mrb[0].mxu0
        %v523 = vadd.f32 %v223, %v522
        %v524 = vpop.f32.mrb[0].mxu0
        %525 = vmatprep.mubr.bf16.mxu0 0
        %526 = vmatmul.mubr.bf16.gmra.mrb[0].mxu0 %v367
        %v527 = vpop.f32.mrb[0].mxu0
        %v528 = vadd.f32 %v223, %v527
        %v529 = vpop.f32.mrb[0].mxu0
        %v530 = vpop.f32.mrb[0].mxu0
        %v531 = vadd.f32 %v223, %v530
        %v532 = vpop.f32.mrb[0].mxu0
        %533 = vdwg.mxu0
        %v534 = vmax.f32 %v408, 0.0
        %v535 = vmax.f32 %v411, 0.0
        %v536 = vmax.f32 %v416, 0.0
        %v537 = vmax.f32 %v419, 0.0
        %v538 = vmax.f32 %v424, 0.0
        %v539 = vmax.f32 %v427, 0.0
        %v540 = vmax.f32 %v432, 0.0
        %v541 = vmax.f32 %v435, 0.0
        %v542 = vmax.f32 %v440, 0.0
        %v543 = vmax.f32 %v443, 0.0
        %v544 = vmax.f32 %v448, 0.0
        %v545 = vmax.f32 %v451, 0.0
        %v546 = vmax.f32 %v456, 0.0
        %v547 = vmax.f32 %v459, 0.0
        %v548 = vmax.f32 %v464, 0.0
        %v549 = vmax.f32 %v467, 0.0
        %v550 = vmax.f32 %v472, 0.0
        %v551 = vmax.f32 %v475, 0.0
        %v552 = vmax.f32 %v480, 0.0
        %v553 = vmax.f32 %v483, 0.0
        %v554 = vmax.f32 %v488, 0.0
        %v555 = vmax.f32 %v491, 0.0
        %v556 = vmax.f32 %v496, 0.0
        %v557 = vmax.f32 %v499, 0.0
        %v558 = vmax.f32 %v504, 0.0
        %v559 = vmax.f32 %v507, 0.0
        %v560 = vmax.f32 %v512, 0.0
        %v561 = vmax.f32 %v515, 0.0
        %v562 = vmax.f32 %v520, 0.0
        %v563 = vmax.f32 %v523, 0.0
        %v564 = vmax.f32 %v528, 0.0
        %v565 = vmax.f32 %v531, 0.0
        %v566 = vadd.f32 %v534, %v535
        %v567 = vadd.f32 %v566, %v536
        %v568 = vadd.f32 %v567, %v537
        %v569 = vadd.f32 %v568, %v538
        %v570 = vadd.f32 %v569, %v539
        %v571 = vadd.f32 %v570, %v540
        %v572 = vadd.f32 %v571, %v541
        %v573 = vadd.f32 %v572, %v542
        %v574 = vadd.f32 %v573, %v543
        %v575 = vadd.f32 %v574, %v544
        %v576 = vadd.f32 %v575, %v545
        %v577 = vadd.f32 %v576, %v546
        %v578 = vadd.f32 %v577, %v547
        %v579 = vadd.f32 %v578, %v548
        %v580 = vadd.f32 %v579, %v549
        %v581 = vadd.f32 %v580, %v550
        %v582 = vadd.f32 %v581, %v551
        %v583 = vadd.f32 %v582, %v552
        %v584 = vadd.f32 %v583, %v553
        %v585 = vadd.f32 %v584, %v554
        %v586 = vadd.f32 %v585, %v555
        %v587 = vadd.f32 %v586, %v556
        %v588 = vadd.f32 %v587, %v557
        %v589 = vadd.f32 %v588, %v558
        %v590 = vadd.f32 %v589, %v559
        %v591 = vadd.f32 %v590, %v560
        %v592 = vadd.f32 %v591, %v561
        %v593 = vadd.f32 %v592, %v562
        %v594 = vadd.f32 %v593, %v563
        %v595 = vadd.f32 %v594, %v564
        %v596 = vadd.f32 %v595, %v565
        %v597 = vrot.slane %v596, 4
        %v598 = vadd.f32 %v596, %v597
        %v599 = vrot.slane %v598, 2
        %v600 = vadd.f32 %v598, %v599
        %v601 = vrot.slane %v600, 1
        %v602 = vadd.f32 %v600, %v601
        %v603 = vrcp.pop 256.0
        %v604 = vmul.f32 %v602, %v603
        %605 = vst [vmem:[%s179] sm:$0x1] %v604
        %p606 = scmp.lt.s32.totalorder %s15, 1
        %s607 = scalar_select %p606, %s15, 1
        %s608 = scalar_lea.vmem %s3, %s607
        // Predicated region
        $region37: #{_lambda_.7} parent=31 // pred_check
          %p609 = pneg %p101
        $region38: #{_lambda_.7} parent=31 // pred_check_branch
          %611 = sbr.rel (%p609) target = $region40
        $region39: #{_lambda_.7} parent=31 // pred_region
          _
        $region40: #{_lambda_.7} parent=31 // pred_fallthru
          _
      $region32: #{_lambda_.7} parent=5 // pred_fallthru
        _
      %p612 = scmp.le.s32.totalorder 2, %s10
      // Predicated region
      $region41: #{_lambda_.7} parent=5 // pred_check
        %p613 = pneg %p612
      $region42: #{_lambda_.7} parent=5 // pred_check_branch
        %615 = sbr.rel (%p613) target = $region44
      $region43: #{_lambda_.7} parent=5 // pred_region
        %s616 = ssub.s32 %s10, 2
        // Predicated region
        $region45: #{_lambda_.7} parent=43 // pred_check
          %p617 = pneg %p107
        $region46: #{_lambda_.7} parent=43 // pred_check_branch
          %619 = sbr.rel (%p617) target = $region48
        $region47: #{_lambda_.7} parent=43 // pred_region
          %p620 = scmp.lt.s32.totalorder %s16, 1
          %s621 = scalar_select %p620, %s16, 1
          %s622 = scalar_lea.vmem %s3, %s621
        $region48: #{_lambda_.7} parent=43 // pred_fallthru
          _
      $region44: #{_lambda_.7} parent=5 // pred_fallthru
        _
    $region6: #{_lambda_.7} parent=1 // loop_footer
      %s14 = sadd.s32 1, %s10
    $region7: #{_lambda_.7} parent=1 // loop_footer_branch
      %9 = sbr.rel target = $region3
    $region8: #{_lambda_.7} parent=1 // loop_exit
      _
    %623 = vsyncpa [#allocation3], 1
    %s624 = scalar_lea.sflag [#allocation3], 1
    %625 = vsyncpa %s624, 1

// kernel: reverse
$region0: #{reverse}
  #allocation0 [shape = 's32[1]{0}', space=sflag, size = 0x4, scoped, tag = 'scoped memory for reverse']
  %s0 = inlined_call_operand.vmem [shape: bf16[288,32,3,3], index: 0, kind: input, shape index: {}]
  %s1 = inlined_call_operand.vmem [shape: bf16[288,32,3,3], index: 1, kind: output, shape index: {}]
  %s2 = scalar_lea.vmem %s0, 384
  %v3 = vld [vmem:[%s2] sm:$0xf]
  %v4 = vunpack.c.l.bf16 %v3
  %v5 = vunpack.c.h.bf16 %v3
  %s6 = scalar_lea.vmem %s0, 240
  %v7 = vld [vmem:[%s6] sm:$0xf]
  %v8 = vunpack.c.l.bf16 %v7
  %v9 = vunpack.c.h.bf16 %v7
  %s10 = scalar_lea.vmem %s1, 144
  %s11 = scalar_lea.vmem %s0, 96
  %v12 = vld [vmem:[%s11] sm:$0xf]
  %v13 = vunpack.c.l.bf16 %v12
  %v14 = vunpack.c.h.bf16 %v12
  %s15 = scalar_lea.vmem %s1, 288
  %s16 = scalar_lea.vmem %s0, 336
  %v17 = vld [vmem:[%s16] sm:$0xf]
  %v18 = vunpack.c.l.bf16 %v17
  %v19 = vunpack.c.h.bf16 %v17
  %s20 = scalar_lea.vmem %s1, 48
  %s21 = scalar_lea.vmem %s0, 192
  %v22 = vld [vmem:[%s21] sm:$0xf]
  %v23 = vunpack.c.l.bf16 %v22
  %v24 = vunpack.c.h.bf16 %v22
  %s25 = scalar_lea.vmem %s1, 192
  %s26 = scalar_lea.vmem %s0, 48
  %v27 = vld [vmem:[%s26] sm:$0xf]
  %v28 = vunpack.c.l.bf16 %v27
  %v29 = vunpack.c.h.bf16 %v27
  %s30 = scalar_lea.vmem %s1, 336
  %s31 = scalar_lea.vmem %s0, 288
  %v32 = vld [vmem:[%s31] sm:$0xf]
  %v33 = vunpack.c.l.bf16 %v32
  %v34 = vunpack.c.h.bf16 %v32
  %s35 = scalar_lea.vmem %s1, 96
  %s36 = scalar_lea.vmem %s0, 144
  %v37 = vld [vmem:[%s36] sm:$0xf]
  %v38 = vunpack.c.l.bf16 %v37
  %v39 = vunpack.c.h.bf16 %v37
  %s40 = scalar_lea.vmem %s1, 240
  %v41 = vld [vmem:[%s0] sm:$0xf]
  %v42 = vunpack.c.l.bf16 %v41
  %v43 = vunpack.c.h.bf16 %v41
  %s44 = scalar_lea.vmem %s1, 384
  %s45 = scalar_lea.vmem %s0, 396
  %v46 = vld [vmem:[%s45] sm:$0xf]
  %v47 = vunpack.c.l.bf16 %v46
  %v48 = vunpack.c.h.bf16 %v46
  %s49 = scalar_lea.vmem %s1, 12
  %s50 = scalar_lea.vmem %s0, 252
  %v51 = vld [vmem:[%s50] sm:$0xf]
  %v52 = vunpack.c.l.bf16 %v51
  %v53 = vunpack.c.h.bf16 %v51
  %s54 = scalar_lea.vmem %s1, 156
  %s55 = scalar_lea.vmem %s0, 108
  %v56 = vld [vmem:[%s55] sm:$0xf]
  %v57 = vunpack.c.l.bf16 %v56
  %v58 = vunpack.c.h.bf16 %v56
  %s59 = scalar_lea.vmem %s1, 300
  %s60 = scalar_lea.vmem %s0, 348
  %v61 = vld [vmem:[%s60] sm:$0xf]
  %v62 = vunpack.c.l.bf16 %v61
  %v63 = vunpack.c.h.bf16 %v61
  %s64 = scalar_lea.vmem %s1, 60
  %s65 = scalar_lea.vmem %s0, 204
  %v66 = vld [vmem:[%s65] sm:$0xf]
  %v67 = vunpack.c.l.bf16 %v66
  %v68 = vunpack.c.h.bf16 %v66
  %s69 = scalar_lea.vmem %s1, 204
  %s70 = scalar_lea.vmem %s0, 60
  %v71 = vld [vmem:[%s70] sm:$0xf]
  %v72 = vunpack.c.l.bf16 %v71
  %v73 = vunpack.c.h.bf16 %v71
  %s74 = scalar_lea.vmem %s1, 348
  %s75 = scalar_lea.vmem %s0, 300
  %v76 = vld [vmem:[%s75] sm:$0xf]
  %v77 = vunpack.c.l.bf16 %v76
  %v78 = vunpack.c.h.bf16 %v76
  %s79 = scalar_lea.vmem %s1, 108
  %s80 = scalar_lea.vmem %s0, 156
  %v81 = vld [vmem:[%s80] sm:$0xf]
  %v82 = vunpack.c.l.bf16 %v81
  %v83 = vunpack.c.h.bf16 %v81
  %s84 = scalar_lea.vmem %s1, 252
  %s85 = scalar_lea.vmem %s0, 12
  %v86 = vld [vmem:[%s85] sm:$0xf]
  %v87 = vunpack.c.l.bf16 %v86
  %v88 = vunpack.c.h.bf16 %v86
  %s89 = scalar_lea.vmem %s1, 396
  %s90 = scalar_lea.vmem %s0, 408
  %v91 = vld [vmem:[%s90] sm:$0xf]
  %v92 = vunpack.c.l.bf16 %v91
  %v93 = vunpack.c.h.bf16 %v91
  %s94 = scalar_lea.vmem %s1, 24
  %s95 = scalar_lea.vmem %s0, 264
  %v96 = vld [vmem:[%s95] sm:$0xf]
  %v97 = vunpack.c.l.bf16 %v96
  %v98 = vunpack.c.h.bf16 %v96
  %s99 = scalar_lea.vmem %s1, 168
  %s100 = scalar_lea.vmem %s0, 120
  %v101 = vld [vmem:[%s100] sm:$0xf]
  %v102 = vunpack.c.l.bf16 %v101
  %v103 = vunpack.c.h.bf16 %v101
  %s104 = scalar_lea.vmem %s1, 312
  %s105 = scalar_lea.vmem %s0, 360
  %v106 = vld [vmem:[%s105] sm:$0xf]
  %v107 = vunpack.c.l.bf16 %v106
  %v108 = vunpack.c.h.bf16 %v106
  %s109 = scalar_lea.vmem %s1, 72
  %s110 = scalar_lea.vmem %s0, 216
  %v111 = vld [vmem:[%s110] sm:$0xf]
  %v112 = vunpack.c.l.bf16 %v111
  %v113 = vunpack.c.h.bf16 %v111
  %s114 = scalar_lea.vmem %s1, 216
  %s115 = scalar_lea.vmem %s0, 72
  %v116 = vld [vmem:[%s115] sm:$0xf]
  %v117 = vunpack.c.l.bf16 %v116
  %v118 = vunpack.c.h.bf16 %v116
  %s119 = scalar_lea.vmem %s1, 360
  %s120 = scalar_lea.vmem %s0, 312
  %v121 = vld [vmem:[%s120] sm:$0xf]
  %v122 = vunpack.c.l.bf16 %v121
  %v123 = vunpack.c.h.bf16 %v121
  %s124 = scalar_lea.vmem %s1, 120
  %s125 = scalar_lea.vmem %s0, 168
  %v126 = vld [vmem:[%s125] sm:$0xf]
  %v127 = vunpack.c.l.bf16 %v126
  %v128 = vunpack.c.h.bf16 %v126
  %s129 = scalar_lea.vmem %s1, 264
  %s130 = scalar_lea.vmem %s0, 24
  %v131 = vld [vmem:[%s130] sm:$0xf]
  %v132 = vunpack.c.l.bf16 %v131
  %v133 = vunpack.c.h.bf16 %v131
  %s134 = scalar_lea.vmem %s1, 408
  %s135 = scalar_lea.vmem %s0, 420
  %v136 = vld [vmem:[%s135] sm:$0xf]
  %v137 = vunpack.c.l.bf16 %v136
  %v138 = vunpack.c.h.bf16 %v136
  %s139 = scalar_lea.vmem %s1, 36
  %s140 = scalar_lea.vmem %s0, 276
  %v141 = vld [vmem:[%s140] sm:$0xf]
  %v142 = vunpack.c.l.bf16 %v141
  %v143 = vunpack.c.h.bf16 %v141
  %s144 = scalar_lea.vmem %s1, 180
  %s145 = scalar_lea.vmem %s0, 132
  %v146 = vld [vmem:[%s145] sm:$0xf]
  %v147 = vunpack.c.l.bf16 %v146
  %v148 = vunpack.c.h.bf16 %v146
  %s149 = scalar_lea.vmem %s1, 324
  %s150 = scalar_lea.vmem %s0, 372
  %v151 = vld [vmem:[%s150] sm:$0xf]
  %v152 = vunpack.c.l.bf16 %v151
  %v153 = vunpack.c.h.bf16 %v151
  %s154 = scalar_lea.vmem %s1, 84
  %s155 = scalar_lea.vmem %s0, 228
  %v156 = vld [vmem:[%s155] sm:$0xf]
  %v157 = vunpack.c.l.bf16 %v156
  %v158 = vunpack.c.h.bf16 %v156
  %s159 = scalar_lea.vmem %s1, 228
  %s160 = scalar_lea.vmem %s0, 84
  %v161 = vld [vmem:[%s160] sm:$0xf]
  %v162 = vunpack.c.l.bf16 %v161
  %v163 = vunpack.c.h.bf16 %v161
  %s164 = scalar_lea.vmem %s1, 372
  %s165 = scalar_lea.vmem %s0, 324
  %v166 = vld [vmem:[%s165] sm:$0xf]
  %v167 = vunpack.c.l.bf16 %v166
  %v168 = vunpack.c.h.bf16 %v166
  %s169 = scalar_lea.vmem %s1, 132
  %s170 = scalar_lea.vmem %s0, 180
  %v171 = vld [vmem:[%s170] sm:$0xf]
  %v172 = vunpack.c.l.bf16 %v171
  %v173 = vunpack.c.h.bf16 %v171
  %s174 = scalar_lea.vmem %s1, 276
  %s175 = scalar_lea.vmem %s0, 36
  %v176 = vld [vmem:[%s175] sm:$0xf]
  %v177 = vunpack.c.l.bf16 %v176
  %v178 = vunpack.c.h.bf16 %v176
  %s179 = scalar_lea.vmem %s1, 420
  %s180 = scalar_lea.vmem %s0, 388
  %v181 = vld [vmem:[%s180] sm:$0xf]
  %v182 = vunpack.c.l.bf16 %v181
  %v183 = vunpack.c.h.bf16 %v181
  %s184 = scalar_lea.vmem %s1, 4
  %s186 = ssub.s32 0, 4
  %s187 = scalar_lea.vmem %s184, %s186
  %v188 = vpack.c.bf16 %v182, %v4
  %189 = vst [vmem:[%s187] sm:$0xff] %v188
  %s190 = scalar_lea.vmem %s0, 244
  %v191 = vld [vmem:[%s190] sm:$0xf]
  %v192 = vunpack.c.l.bf16 %v191
  %v193 = vunpack.c.h.bf16 %v191
  %s194 = scalar_lea.vmem %s1, 148
  %s196 = ssub.s32 0, 4
  %s197 = scalar_lea.vmem %s194, %s196
  %v198 = vpack.c.bf16 %v192, %v8
  %199 = vst [vmem:[%s197] sm:$0xff] %v198
  %s200 = scalar_lea.vmem %s0, 100
  %v201 = vld [vmem:[%s200] sm:$0xf]
  %v202 = vunpack.c.l.bf16 %v201
  %v203 = vunpack.c.h.bf16 %v201
  %s204 = scalar_lea.vmem %s1, 292
  %s206 = ssub.s32 0, 4
  %s207 = scalar_lea.vmem %s204, %s206
  %v208 = vpack.c.bf16 %v202, %v13
  %209 = vst [vmem:[%s207] sm:$0xff] %v208
  %s210 = scalar_lea.vmem %s0, 340
  %v211 = vld [vmem:[%s210] sm:$0xf]
  %v212 = vunpack.c.l.bf16 %v211
  %v213 = vunpack.c.h.bf16 %v211
  %s214 = scalar_lea.vmem %s1, 52
  %s216 = ssub.s32 0, 4
  %s217 = scalar_lea.vmem %s214, %s216
  %v218 = vpack.c.bf16 %v212, %v18
  %219 = vst [vmem:[%s217] sm:$0xff] %v218
  %s220 = scalar_lea.vmem %s0, 196
  %v221 = vld [vmem:[%s220] sm:$0xf]
  %v222 = vunpack.c.l.bf16 %v221
  %v223 = vunpack.c.h.bf16 %v221
  %s224 = scalar_lea.vmem %s1, 196
  %s226 = ssub.s32 0, 4
  %s227 = scalar_lea.vmem %s224, %s226
  %v228 = vpack.c.bf16 %v222, %v23
  %229 = vst [vmem:[%s227] sm:$0xff] %v228
  %s230 = scalar_lea.vmem %s0, 52
  %v231 = vld [vmem:[%s230] sm:$0xf]
  %v232 = vunpack.c.l.bf16 %v231
  %v233 = vunpack.c.h.bf16 %v231
  %s234 = scalar_lea.vmem %s1, 340
  %s236 = ssub.s32 0, 4
  %s237 = scalar_lea.vmem %s234, %s236
  %v238 = vpack.c.bf16 %v232, %v28
  %239 = vst [vmem:[%s237] sm:$0xff] %v238
  %s240 = scalar_lea.vmem %s0, 292
  %v241 = vld [vmem:[%s240] sm:$0xf]
  %v242 = vunpack.c.l.bf16 %v241
  %v243 = vunpack.c.h.bf16 %v241
  %s244 = scalar_lea.vmem %s1, 100
  %s246 = ssub.s32 0, 4
  %s247 = scalar_lea.vmem %s244, %s246
  %v248 = vpack.c.bf16 %v242, %v33
  %249 = vst [vmem:[%s247] sm:$0xff] %v248
  %s250 = scalar_lea.vmem %s0, 148
  %v251 = vld [vmem:[%s250] sm:$0xf]
  %v252 = vunpack.c.l.bf16 %v251
  %v253 = vunpack.c.h.bf16 %v251
  %s254 = scalar_lea.vmem %s1, 244
  %s256 = ssub.s32 0, 4
  %s257 = scalar_lea.vmem %s254, %s256
  %v258 = vpack.c.bf16 %v252, %v38
  %259 = vst [vmem:[%s257] sm:$0xff] %v258
  %s260 = scalar_lea.vmem %s0, 4
  %v261 = vld [vmem:[%s260] sm:$0xf]
  %v262 = vunpack.c.l.bf16 %v261
  %v263 = vunpack.c.h.bf16 %v261
  %s264 = scalar_lea.vmem %s1, 388
  %s266 = ssub.s32 0, 4
  %s267 = scalar_lea.vmem %s264, %s266
  %v268 = vpack.c.bf16 %v262, %v42
  %269 = vst [vmem:[%s267] sm:$0xff] %v268
  %s270 = scalar_lea.vmem %s0, 400
  %v271 = vld [vmem:[%s270] sm:$0xf]
  %v272 = vunpack.c.l.bf16 %v271
  %v273 = vunpack.c.h.bf16 %v271
  %s274 = scalar_lea.vmem %s1, 16
  %s276 = ssub.s32 0, 4
  %s277 = scalar_lea.vmem %s274, %s276
  %v278 = vpack.c.bf16 %v272, %v47
  %279 = vst [vmem:[%s277] sm:$0xff] %v278
  %s280 = scalar_lea.vmem %s0, 256
  %v281 = vld [vmem:[%s280] sm:$0xf]
  %v282 = vunpack.c.l.bf16 %v281
  %v283 = vunpack.c.h.bf16 %v281
  %s284 = scalar_lea.vmem %s1, 160
  %s286 = ssub.s32 0, 4
  %s287 = scalar_lea.vmem %s284, %s286
  %v288 = vpack.c.bf16 %v282, %v52
  %289 = vst [vmem:[%s287] sm:$0xff] %v288
  %s290 = scalar_lea.vmem %s0, 112
  %v291 = vld [vmem:[%s290] sm:$0xf]
  %v292 = vunpack.c.l.bf16 %v291
  %v293 = vunpack.c.h.bf16 %v291
  %s294 = scalar_lea.vmem %s1, 304
  %s296 = ssub.s32 0, 4
  %s297 = scalar_lea.vmem %s294, %s296
  %v298 = vpack.c.bf16 %v292, %v57
  %299 = vst [vmem:[%s297] sm:$0xff] %v298
  %s300 = scalar_lea.vmem %s0, 352
  %v301 = vld [vmem:[%s300] sm:$0xf]
  %v302 = vunpack.c.l.bf16 %v301
  %v303 = vunpack.c.h.bf16 %v301
  %s304 = scalar_lea.vmem %s1, 64
  %s306 = ssub.s32 0, 4
  %s307 = scalar_lea.vmem %s304, %s306
  %v308 = vpack.c.bf16 %v302, %v62
  %309 = vst [vmem:[%s307] sm:$0xff] %v308
  %s310 = scalar_lea.vmem %s0, 208
  %v311 = vld [vmem:[%s310] sm:$0xf]
  %v312 = vunpack.c.l.bf16 %v311
  %v313 = vunpack.c.h.bf16 %v311
  %s314 = scalar_lea.vmem %s1, 208
  %s316 = ssub.s32 0, 4
  %s317 = scalar_lea.vmem %s314, %s316
  %v318 = vpack.c.bf16 %v312, %v67
  %319 = vst [vmem:[%s317] sm:$0xff] %v318
  %s320 = scalar_lea.vmem %s0, 64
  %v321 = vld [vmem:[%s320] sm:$0xf]
  %v322 = vunpack.c.l.bf16 %v321
  %v323 = vunpack.c.h.bf16 %v321
  %s324 = scalar_lea.vmem %s1, 352
  %s326 = ssub.s32 0, 4
  %s327 = scalar_lea.vmem %s324, %s326
  %v328 = vpack.c.bf16 %v322, %v72
  %329 = vst [vmem:[%s327] sm:$0xff] %v328
  %s330 = scalar_lea.vmem %s0, 304
  %v331 = vld [vmem:[%s330] sm:$0xf]
  %v332 = vunpack.c.l.bf16 %v331
  %v333 = vunpack.c.h.bf16 %v331
  %s334 = scalar_lea.vmem %s1, 112
  %s336 = ssub.s32 0, 4
  %s337 = scalar_lea.vmem %s334, %s336
  %v338 = vpack.c.bf16 %v332, %v77
  %339 = vst [vmem:[%s337] sm:$0xff] %v338
  %s340 = scalar_lea.vmem %s0, 160
  %v341 = vld [vmem:[%s340] sm:$0xf]
  %v342 = vunpack.c.l.bf16 %v341
  %v343 = vunpack.c.h.bf16 %v341
  %s344 = scalar_lea.vmem %s1, 256
  %s346 = ssub.s32 0, 4
  %s347 = scalar_lea.vmem %s344, %s346
  %v348 = vpack.c.bf16 %v342, %v82
  %349 = vst [vmem:[%s347] sm:$0xff] %v348
  %s350 = scalar_lea.vmem %s0, 16
  %v351 = vld [vmem:[%s350] sm:$0xf]
  %v352 = vunpack.c.l.bf16 %v351
  %v353 = vunpack.c.h.bf16 %v351
  %s354 = scalar_lea.vmem %s1, 400
  %s356 = ssub.s32 0, 4
  %s357 = scalar_lea.vmem %s354, %s356
  %v358 = vpack.c.bf16 %v352, %v87
  %359 = vst [vmem:[%s357] sm:$0xff] %v358
  %s360 = scalar_lea.vmem %s0, 412
  %v361 = vld [vmem:[%s360] sm:$0xf]
  %v362 = vunpack.c.l.bf16 %v361
  %v363 = vunpack.c.h.bf16 %v361
  %s364 = scalar_lea.vmem %s1, 28
  %s366 = ssub.s32 0, 4
  %s367 = scalar_lea.vmem %s364, %s366
  %v368 = vpack.c.bf16 %v362, %v92
  %369 = vst [vmem:[%s367] sm:$0xff] %v368
  %s370 = scalar_lea.vmem %s0, 268
  %v371 = vld [vmem:[%s370] sm:$0xf]
  %v372 = vunpack.c.l.bf16 %v371
  %v373 = vunpack.c.h.bf16 %v371
  %s374 = scalar_lea.vmem %s1, 172
  %s376 = ssub.s32 0, 4
  %s377 = scalar_lea.vmem %s374, %s376
  %v378 = vpack.c.bf16 %v372, %v97
  %379 = vst [vmem:[%s377] sm:$0xff] %v378
  %s380 = scalar_lea.vmem %s0, 124
  %v381 = vld [vmem:[%s380] sm:$0xf]
  %v382 = vunpack.c.l.bf16 %v381
  %v383 = vunpack.c.h.bf16 %v381
  %s384 = scalar_lea.vmem %s1, 316
  %s386 = ssub.s32 0, 4
  %s387 = scalar_lea.vmem %s384, %s386
  %v388 = vpack.c.bf16 %v382, %v102
  %389 = vst [vmem:[%s387] sm:$0xff] %v388
  %s390 = scalar_lea.vmem %s0, 364
  %v391 = vld [vmem:[%s390] sm:$0xf]
  %v392 = vunpack.c.l.bf16 %v391
  %v393 = vunpack.c.h.bf16 %v391
  %s394 = scalar_lea.vmem %s1, 76
  %s396 = ssub.s32 0, 4
  %s397 = scalar_lea.vmem %s394, %s396
  %v398 = vpack.c.bf16 %v392, %v107
  %399 = vst [vmem:[%s397] sm:$0xff] %v398
  %s400 = scalar_lea.vmem %s0, 220
  %v401 = vld [vmem:[%s400] sm:$0xf]
  %v402 = vunpack.c.l.bf16 %v401
  %v403 = vunpack.c.h.bf16 %v401
  %s404 = scalar_lea.vmem %s1, 220
  %s406 = ssub.s32 0, 4
  %s407 = scalar_lea.vmem %s404, %s406
  %v408 = vpack.c.bf16 %v402, %v112
  %409 = vst [vmem:[%s407] sm:$0xff] %v408
  %s410 = scalar_lea.vmem %s0, 76
  %v411 = vld [vmem:[%s410] sm:$0xf]
  %v412 = vunpack.c.l.bf16 %v411
  %v413 = vunpack.c.h.bf16 %v411
  %s414 = scalar_lea.vmem %s1, 364
  %s416 = ssub.s32 0, 4
  %s417 = scalar_lea.vmem %s414, %s416
  %v418 = vpack.c.bf16 %v412, %v117
  %419 = vst [vmem:[%s417] sm:$0xff] %v418
  %s420 = scalar_lea.vmem %s0, 316
  %v421 = vld [vmem:[%s420] sm:$0xf]
  %v422 = vunpack.c.l.bf16 %v421
  %v423 = vunpack.c.h.bf16 %v421
  %s424 = scalar_lea.vmem %s1, 124
  %s426 = ssub.s32 0, 4
  %s427 = scalar_lea.vmem %s424, %s426
  %v428 = vpack.c.bf16 %v422, %v122
  %429 = vst [vmem:[%s427] sm:$0xff] %v428
  %s430 = scalar_lea.vmem %s0, 172
  %v431 = vld [vmem:[%s430] sm:$0xf]
  %v432 = vunpack.c.l.bf16 %v431
  %v433 = vunpack.c.h.bf16 %v431
  %s434 = scalar_lea.vmem %s1, 268
  %s436 = ssub.s32 0, 4
  %s437 = scalar_lea.vmem %s434, %s436
  %v438 = vpack.c.bf16 %v432, %v127
  %439 = vst [vmem:[%s437] sm:$0xff] %v438
  %s440 = scalar_lea.vmem %s0, 28
  %v441 = vld [vmem:[%s440] sm:$0xf]
  %v442 = vunpack.c.l.bf16 %v441
  %v443 = vunpack.c.h.bf16 %v441
  %s444 = scalar_lea.vmem %s1, 412
  %s446 = ssub.s32 0, 4
  %s447 = scalar_lea.vmem %s444, %s446
  %v448 = vpack.c.bf16 %v442, %v132
  %449 = vst [vmem:[%s447] sm:$0xff] %v448
  %s450 = scalar_lea.vmem %s0, 424
  %v451 = vld [vmem:[%s450] sm:$0xf]
  %v452 = vunpack.c.l.bf16 %v451
  %v453 = vunpack.c.h.bf16 %v451
  %s454 = scalar_lea.vmem %s1, 40
  %s456 = ssub.s32 0, 4
  %s457 = scalar_lea.vmem %s454, %s456
  %v458 = vpack.c.bf16 %v452, %v137
  %459 = vst [vmem:[%s457] sm:$0xff] %v458
  %s460 = scalar_lea.vmem %s0, 280
  %v461 = vld [vmem:[%s460] sm:$0xf]
  %v462 = vunpack.c.l.bf16 %v461
  %v463 = vunpack.c.h.bf16 %v461
  %s464 = scalar_lea.vmem %s1, 184
  %s466 = ssub.s32 0, 4
  %s467 = scalar_lea.vmem %s464, %s466
  %v468 = vpack.c.bf16 %v462, %v142
  %469 = vst [vmem:[%s467] sm:$0xff] %v468
  %s470 = scalar_lea.vmem %s0, 136
  %v471 = vld [vmem:[%s470] sm:$0xf]
  %v472 = vunpack.c.l.bf16 %v471
  %v473 = vunpack.c.h.bf16 %v471
  %s474 = scalar_lea.vmem %s1, 328
  %s476 = ssub.s32 0, 4
  %s477 = scalar_lea.vmem %s474, %s476
  %v478 = vpack.c.bf16 %v472, %v147
  %479 = vst [vmem:[%s477] sm:$0xff] %v478
  %s480 = scalar_lea.vmem %s0, 376
  %v481 = vld [vmem:[%s480] sm:$0xf]
  %v482 = vunpack.c.l.bf16 %v481
  %v483 = vunpack.c.h.bf16 %v481
  %s484 = scalar_lea.vmem %s1, 88
  %s486 = ssub.s32 0, 4
  %s487 = scalar_lea.vmem %s484, %s486
  %v488 = vpack.c.bf16 %v482, %v152
  %489 = vst [vmem:[%s487] sm:$0xff] %v488
  %s490 = scalar_lea.vmem %s0, 232
  %v491 = vld [vmem:[%s490] sm:$0xf]
  %v492 = vunpack.c.l.bf16 %v491
  %v493 = vunpack.c.h.bf16 %v491
  %s494 = scalar_lea.vmem %s1, 232
  %s496 = ssub.s32 0, 4
  %s497 = scalar_lea.vmem %s494, %s496
  %v498 = vpack.c.bf16 %v492, %v157
  %499 = vst [vmem:[%s497] sm:$0xff] %v498
  %s500 = scalar_lea.vmem %s0, 88
  %v501 = vld [vmem:[%s500] sm:$0xf]
  %v502 = vunpack.c.l.bf16 %v501
  %v503 = vunpack.c.h.bf16 %v501
  %s504 = scalar_lea.vmem %s1, 376
  %s506 = ssub.s32 0, 4
  %s507 = scalar_lea.vmem %s504, %s506
  %v508 = vpack.c.bf16 %v502, %v162
  %509 = vst [vmem:[%s507] sm:$0xff] %v508
  %s510 = scalar_lea.vmem %s0, 328
  %v511 = vld [vmem:[%s510] sm:$0xf]
  %v512 = vunpack.c.l.bf16 %v511
  %v513 = vunpack.c.h.bf16 %v511
  %s514 = scalar_lea.vmem %s1, 136
  %s516 = ssub.s32 0, 4
  %s517 = scalar_lea.vmem %s514, %s516
  %v518 = vpack.c.bf16 %v512, %v167
  %519 = vst [vmem:[%s517] sm:$0xff] %v518
  %s520 = scalar_lea.vmem %s0, 184
  %v521 = vld [vmem:[%s520] sm:$0xf]
  %v522 = vunpack.c.l.bf16 %v521
  %v523 = vunpack.c.h.bf16 %v521
  %s524 = scalar_lea.vmem %s1, 280
  %s526 = ssub.s32 0, 4
  %s527 = scalar_lea.vmem %s524, %s526
  %v528 = vpack.c.bf16 %v522, %v172
  %529 = vst [vmem:[%s527] sm:$0xff] %v528
  %s530 = scalar_lea.vmem %s0, 40
  %v531 = vld [vmem:[%s530] sm:$0xf]
  %v532 = vunpack.c.l.bf16 %v531
  %v533 = vunpack.c.h.bf16 %v531
  %s534 = scalar_lea.vmem %s1, 424
  %s536 = ssub.s32 0, 4
  %s537 = scalar_lea.vmem %s534, %s536
  %v538 = vpack.c.bf16 %v532, %v177
  %539 = vst [vmem:[%s537] sm:$0xff] %v538
  %s540 = scalar_lea.vmem %s0, 392
  %v541 = vld [vmem:[%s540] sm:$0xf]
  %v542 = vunpack.c.l.bf16 %v541
  %v543 = vunpack.c.h.bf16 %v541
  %s544 = scalar_lea.vmem %s1, 8
  %v545 = vpack.c.bf16 0.0, %v542
  %546 = vst [vmem:[%s544] sm:$0xf] %v545
  %s547 = scalar_lea.vmem %s0, 248
  %v548 = vld [vmem:[%s547] sm:$0xf]
  %v549 = vunpack.c.l.bf16 %v548
  %v550 = vunpack.c.h.bf16 %v548
  %s551 = scalar_lea.vmem %s1, 152
  %v552 = vpack.c.bf16 0.0, %v549
  %553 = vst [vmem:[%s551] sm:$0xf] %v552
  %s554 = scalar_lea.vmem %s0, 104
  %v555 = vld [vmem:[%s554] sm:$0xf]
  %v556 = vunpack.c.l.bf16 %v555
  %v557 = vunpack.c.h.bf16 %v555
  %s558 = scalar_lea.vmem %s1, 296
  %v559 = vpack.c.bf16 0.0, %v556
  %560 = vst [vmem:[%s558] sm:$0xf] %v559
  %s561 = scalar_lea.vmem %s0, 344
  %v562 = vld [vmem:[%s561] sm:$0xf]
  %v563 = vunpack.c.l.bf16 %v562
  %v564 = vunpack.c.h.bf16 %v562
  %s565 = scalar_lea.vmem %s1, 56
  %v566 = vpack.c.bf16 0.0, %v563
  %567 = vst [vmem:[%s565] sm:$0xf] %v566
  %s568 = scalar_lea.vmem %s0, 200
  %v569 = vld [vmem:[%s568] sm:$0xf]
  %v570 = vunpack.c.l.bf16 %v569
  %v571 = vunpack.c.h.bf16 %v569
  %s572 = scalar_lea.vmem %s1, 200
  %v573 = vpack.c.bf16 0.0, %v570
  %574 = vst [vmem:[%s572] sm:$0xf] %v573
  %s575 = scalar_lea.vmem %s0, 56
  %v576 = vld [vmem:[%s575] sm:$0xf]
  %v577 = vunpack.c.l.bf16 %v576
  %v578 = vunpack.c.h.bf16 %v576
  %s579 = scalar_lea.vmem %s1, 344
  %v580 = vpack.c.bf16 0.0, %v577
  %581 = vst [vmem:[%s579] sm:$0xf] %v580
  %s582 = scalar_lea.vmem %s0, 296
  %v583 = vld [vmem:[%s582] sm:$0xf]
  %v584 = vunpack.c.l.bf16 %v583
  %v585 = vunpack.c.h.bf16 %v583
  %s586 = scalar_lea.vmem %s1, 104
  %v587 = vpack.c.bf16 0.0, %v584
  %588 = vst [vmem:[%s586] sm:$0xf] %v587
  %s589 = scalar_lea.vmem %s0, 152
  %v590 = vld [vmem:[%s589] sm:$0xf]
  %v591 = vunpack.c.l.bf16 %v590
  %v592 = vunpack.c.h.bf16 %v590
  %s593 = scalar_lea.vmem %s1, 248
  %v594 = vpack.c.bf16 0.0, %v591
  %595 = vst [vmem:[%s593] sm:$0xf] %v594
  %s596 = scalar_lea.vmem %s0, 8
  %v597 = vld [vmem:[%s596] sm:$0xf]
  %v598 = vunpack.c.l.bf16 %v597
  %v599 = vunpack.c.h.bf16 %v597
  %s600 = scalar_lea.vmem %s1, 392
  %v601 = vpack.c.bf16 0.0, %v598
  %602 = vst [vmem:[%s600] sm:$0xf] %v601
  %s603 = scalar_lea.vmem %s0, 404
  %v604 = vld [vmem:[%s603] sm:$0xf]
  %v605 = vunpack.c.l.bf16 %v604
  %v606 = vunpack.c.h.bf16 %v604
  %s607 = scalar_lea.vmem %s1, 20
  %v608 = vpack.c.bf16 0.0, %v605
  %609 = vst [vmem:[%s607] sm:$0xf] %v608
  %s610 = scalar_lea.vmem %s0, 260
  %v611 = vld [vmem:[%s610] sm:$0xf]
  %v612 = vunpack.c.l.bf16 %v611
  %v613 = vunpack.c.h.bf16 %v611
  %s614 = scalar_lea.vmem %s1, 164
  %v615 = vpack.c.bf16 0.0, %v612
  %616 = vst [vmem:[%s614] sm:$0xf] %v615
  %s617 = scalar_lea.vmem %s0, 116
  %v618 = vld [vmem:[%s617] sm:$0xf]
  %v619 = vunpack.c.l.bf16 %v618
  %v620 = vunpack.c.h.bf16 %v618
  %s621 = scalar_lea.vmem %s1, 308
  %v622 = vpack.c.bf16 0.0, %v619
  %623 = vst [vmem:[%s621] sm:$0xf] %v622
  %s624 = scalar_lea.vmem %s0, 356
  %v625 = vld [vmem:[%s624] sm:$0xf]
  %v626 = vunpack.c.l.bf16 %v625
  %v627 = vunpack.c.h.bf16 %v625
  %s628 = scalar_lea.vmem %s1, 68
  %v629 = vpack.c.bf16 0.0, %v626
  %630 = vst [vmem:[%s628] sm:$0xf] %v629
  %s631 = scalar_lea.vmem %s0, 212
  %v632 = vld [vmem:[%s631] sm:$0xf]
  %v633 = vunpack.c.l.bf16 %v632
  %v634 = vunpack.c.h.bf16 %v632
  %s635 = scalar_lea.vmem %s1, 212
  %v636 = vpack.c.bf16 0.0, %v633
  %637 = vst [vmem:[%s635] sm:$0xf] %v636
  %s638 = scalar_lea.vmem %s0, 68
  %v639 = vld [vmem:[%s638] sm:$0xf]
  %v640 = vunpack.c.l.bf16 %v639
  %v641 = vunpack.c.h.bf16 %v639
  %s642 = scalar_lea.vmem %s1, 356
  %v643 = vpack.c.bf16 0.0, %v640
  %644 = vst [vmem:[%s642] sm:$0xf] %v643
  %s645 = scalar_lea.vmem %s0, 308
  %v646 = vld [vmem:[%s645] sm:$0xf]
  %v647 = vunpack.c.l.bf16 %v646
  %v648 = vunpack.c.h.bf16 %v646
  %s649 = scalar_lea.vmem %s1, 116
  %v650 = vpack.c.bf16 0.0, %v647
  %651 = vst [vmem:[%s649] sm:$0xf] %v650
  %s652 = scalar_lea.vmem %s0, 164
  %v653 = vld [vmem:[%s652] sm:$0xf]
  %v654 = vunpack.c.l.bf16 %v653
  %v655 = vunpack.c.h.bf16 %v653
  %s656 = scalar_lea.vmem %s1, 260
  %v657 = vpack.c.bf16 0.0, %v654
  %658 = vst [vmem:[%s656] sm:$0xf] %v657
  %s659 = scalar_lea.vmem %s0, 20
  %v660 = vld [vmem:[%s659] sm:$0xf]
  %v661 = vunpack.c.l.bf16 %v660
  %v662 = vunpack.c.h.bf16 %v660
  %s663 = scalar_lea.vmem %s1, 404
  %v664 = vpack.c.bf16 0.0, %v661
  %665 = vst [vmem:[%s663] sm:$0xf] %v664
  %s666 = scalar_lea.vmem %s0, 416
  %v667 = vld [vmem:[%s666] sm:$0xf]
  %v668 = vunpack.c.l.bf16 %v667
  %v669 = vunpack.c.h.bf16 %v667
  %s670 = scalar_lea.vmem %s1, 32
  %v671 = vpack.c.bf16 0.0, %v668
  %672 = vst [vmem:[%s670] sm:$0xf] %v671
  %s673 = scalar_lea.vmem %s0, 272
  %v674 = vld [vmem:[%s673] sm:$0xf]
  %v675 = vunpack.c.l.bf16 %v674
  %v676 = vunpack.c.h.bf16 %v674
  %s677 = scalar_lea.vmem %s1, 176
  %v678 = vpack.c.bf16 0.0, %v675
  %679 = vst [vmem:[%s677] sm:$0xf] %v678
  %s680 = scalar_lea.vmem %s0, 128
  %v681 = vld [vmem:[%s680] sm:$0xf]
  %v682 = vunpack.c.l.bf16 %v681
  %v683 = vunpack.c.h.bf16 %v681
  %s684 = scalar_lea.vmem %s1, 320
  %v685 = vpack.c.bf16 0.0, %v682
  %686 = vst [vmem:[%s684] sm:$0xf] %v685
  %s687 = scalar_lea.vmem %s0, 368
  %v688 = vld [vmem:[%s687] sm:$0xf]
  %v689 = vunpack.c.l.bf16 %v688
  %v690 = vunpack.c.h.bf16 %v688
  %s691 = scalar_lea.vmem %s1, 80
  %v692 = vpack.c.bf16 0.0, %v689
  %693 = vst [vmem:[%s691] sm:$0xf] %v692
  %s694 = scalar_lea.vmem %s0, 224
  %v695 = vld [vmem:[%s694] sm:$0xf]
  %v696 = vunpack.c.l.bf16 %v695
  %v697 = vunpack.c.h.bf16 %v695
  %s698 = scalar_lea.vmem %s1, 224
  %v699 = vpack.c.bf16 0.0, %v696
  %700 = vst [vmem:[%s698] sm:$0xf] %v699
  %s701 = scalar_lea.vmem %s0, 80
  %v702 = vld [vmem:[%s701] sm:$0xf]
  %v703 = vunpack.c.l.bf16 %v702
  %v704 = vunpack.c.h.bf16 %v702
  %s705 = scalar_lea.vmem %s1, 368
  %v706 = vpack.c.bf16 0.0, %v703
  %707 = vst [vmem:[%s705] sm:$0xf] %v706
  %s708 = scalar_lea.vmem %s0, 320
  %v709 = vld [vmem:[%s708] sm:$0xf]
  %v710 = vunpack.c.l.bf16 %v709
  %v711 = vunpack.c.h.bf16 %v709
  %s712 = scalar_lea.vmem %s1, 128
  %v713 = vpack.c.bf16 0.0, %v710
  %714 = vst [vmem:[%s712] sm:$0xf] %v713
  %s715 = scalar_lea.vmem %s0, 176
  %v716 = vld [vmem:[%s715] sm:$0xf]
  %v717 = vunpack.c.l.bf16 %v716
  %v718 = vunpack.c.h.bf16 %v716
  %s719 = scalar_lea.vmem %s1, 272
  %v720 = vpack.c.bf16 0.0, %v717
  %721 = vst [vmem:[%s719] sm:$0xf] %v720
  %s722 = scalar_lea.vmem %s0, 32
  %v723 = vld [vmem:[%s722] sm:$0xf]
  %v724 = vunpack.c.l.bf16 %v723
  %v725 = vunpack.c.h.bf16 %v723
  %s726 = scalar_lea.vmem %s1, 416
  %v727 = vpack.c.bf16 0.0, %v724
  %728 = vst [vmem:[%s726] sm:$0xf] %v727
  %s729 = scalar_lea.vmem %s0, 428
  %v730 = vld [vmem:[%s729] sm:$0xf]
  %v731 = vunpack.c.l.bf16 %v730
  %v732 = vunpack.c.h.bf16 %v730
  %s733 = scalar_lea.vmem %s1, 44
  %v734 = vpack.c.bf16 0.0, %v731
  %735 = vst [vmem:[%s733] sm:$0xf] %v734
  %s736 = scalar_lea.vmem %s0, 284
  %v737 = vld [vmem:[%s736] sm:$0xf]
  %v738 = vunpack.c.l.bf16 %v737
  %v739 = vunpack.c.h.bf16 %v737
  %s740 = scalar_lea.vmem %s1, 188
  %v741 = vpack.c.bf16 0.0, %v738
  %742 = vst [vmem:[%s740] sm:$0xf] %v741
  %s743 = scalar_lea.vmem %s0, 140
  %v744 = vld [vmem:[%s743] sm:$0xf]
  %v745 = vunpack.c.l.bf16 %v744
  %v746 = vunpack.c.h.bf16 %v744
  %s747 = scalar_lea.vmem %s1, 332
  %v748 = vpack.c.bf16 0.0, %v745
  %749 = vst [vmem:[%s747] sm:$0xf] %v748
  %s750 = scalar_lea.vmem %s0, 380
  %v751 = vld [vmem:[%s750] sm:$0xf]
  %v752 = vunpack.c.l.bf16 %v751
  %v753 = vunpack.c.h.bf16 %v751
  %s754 = scalar_lea.vmem %s1, 92
  %v755 = vpack.c.bf16 0.0, %v752
  %756 = vst [vmem:[%s754] sm:$0xf] %v755
  %s757 = scalar_lea.vmem %s0, 236
  %v758 = vld [vmem:[%s757] sm:$0xf]
  %v759 = vunpack.c.l.bf16 %v758
  %v760 = vunpack.c.h.bf16 %v758
  %s761 = scalar_lea.vmem %s1, 236
  %v762 = vpack.c.bf16 0.0, %v759
  %763 = vst [vmem:[%s761] sm:$0xf] %v762
  %s764 = scalar_lea.vmem %s0, 92
  %v765 = vld [vmem:[%s764] sm:$0xf]
  %v766 = vunpack.c.l.bf16 %v765
  %v767 = vunpack.c.h.bf16 %v765
  %s768 = scalar_lea.vmem %s1, 380
  %v769 = vpack.c.bf16 0.0, %v766
  %770 = vst [vmem:[%s768] sm:$0xf] %v769
  %s771 = scalar_lea.vmem %s0, 332
  %v772 = vld [vmem:[%s771] sm:$0xf]
  %v773 = vunpack.c.l.bf16 %v772
  %v774 = vunpack.c.h.bf16 %v772
  %s775 = scalar_lea.vmem %s1, 140
  %v776 = vpack.c.bf16 0.0, %v773
  %777 = vst [vmem:[%s775] sm:$0xf] %v776
  %s778 = scalar_lea.vmem %s0, 188
  %v779 = vld [vmem:[%s778] sm:$0xf]
  %v780 = vunpack.c.l.bf16 %v779
  %v781 = vunpack.c.h.bf16 %v779
  %s782 = scalar_lea.vmem %s1, 284
  %v783 = vpack.c.bf16 0.0, %v780
  %784 = vst [vmem:[%s782] sm:$0xf] %v783
  %s785 = scalar_lea.vmem %s0, 44
  %v786 = vld [vmem:[%s785] sm:$0xf]
  %v787 = vunpack.c.l.bf16 %v786
  %v788 = vunpack.c.h.bf16 %v786
  %s789 = scalar_lea.vmem %s1, 428
  %v790 = vpack.c.bf16 0.0, %v787
  %791 = vst [vmem:[%s789] sm:$0xf] %v790

// kernel: _lambda_.9
$region0: #{_lambda_.9}
  #allocation0 [shape = 'u32[]', space=smem, size = 0x4, offset = 0x4, fixed_abs, tag = 'smem constant byte address 0x4 - core index']
  #allocation1 [shape = 'u32[144,128]{1,0:T(1,128)}', space=vmem, size = 0x12000, scoped, tag = 'internal scratch']
  %s0 = inlined_call_operand.vmem [shape: bf16[128,288], index: 0, kind: input, shape index: {}]
  %s1 = inlined_call_operand.vmem [shape: bf16[2,288,4], index: 1, kind: input, shape index: {}]
  %s2 = inlined_call_operand.vmem [shape: f32[2,128,4], index: 2, kind: output, shape index: {}]
  %s3 = sld [smem:[#allocation0]]
  $region41: #{_lambda_.9} parent=0
    _
  %s5 = ssub.s32 1, %s3
  %s6 = scalar_select 0, %s5, %s3
  loop: start=0, step=1, limit=4
  $region2: #{_lambda_.9} parent=0 // loop_pre_header
    _
  $region3: #{_lambda_.9} parent=0 // loop_header
    %s8 = sphi 0, %s12
    %p9 = scmp.ge.s32.totalorder %s8, 4
    %s15 = sphi 0, %s27
    %s16 = sphi 0, %s23
    %s17 = sphi 0, %s15
    %s18 = sphi 0, %s16
    %s19 = sphi 0, %s17
    %s20 = sphi 0, %s18
    %s28 = sphi 0, %s28
    %s30 = sphi 0, %s28
    %s31 = sphi 0, %s30
    %s45 = sphi 0, %s31
    %s53 = sphi 0, %s55
    %s56 = sphi 0, %s53
    %s57 = sphi 0, %s56
    %s73 = sphi 0, %s57
    %s81 = sphi 0, %s83
    %s84 = sphi 0, %s81
    %s85 = sphi 0, %s84
    %s101 = sphi 0, %s85
  $region4: #{_lambda_.9} parent=0 // loop_header_branch
    %11 = sbr.rel (%p9) target = $region8
  $region5: #{_lambda_.9} parent=0 // loop_body
    %s13 = ssub.s32 %s8, 1
    %s14 = ssub.s32 %s8, 2
    %s21 = sadd.s32 1, %s16
    %p22 = scmp.ge.s32.totalorder %s21, 1
    %s23 = scalar_select %p22, 0, %s21
    %s24 = sadd.s32 1, %s15
    %s25 = scalar_select %p22, %s24, %s15
    %p26 = scmp.ge.s32.totalorder %s25, 2
    %s27 = scalar_select %p26, 0, %s25
    %s29 = sadd.s32 %s28, 1
    %p32 = scmp.eq.s32.totalorder %s8, 1
    %p33 = scmp.ne.s32.totalorder %s28, %s30
    %p34 = scmp.eq.s32.totalorder %s8, 0
    %p35 = por %p33, %p34
    %p36 = scmp.ne.s32.totalorder %s28, %s30
    %p37 = scmp.eq.s32.totalorder %s13, 1
    %p38 = por %p36, %p37
    %p39 = scmp.ne.s32.totalorder %s30, %s31
    %p40 = scmp.eq.s32.totalorder %s13, 0
    %p41 = por %p39, %p40
    %p42 = scmp.ne.s32.totalorder %s30, %s31
    %p43 = scmp.eq.s32.totalorder %s14, 1
    %p44 = por %p42, %p43
    %p46 = scmp.ne.s32.totalorder %s31, %s45
    %p47 = scmp.eq.s32.totalorder %s14, 0
    %p48 = por %p46, %p47
    %s49 = ssub.s32 %s15, %s27
    %s50 = ssub.s32 %s16, %s23
    %s51 = sor.u32 %s49, %s50
    %p52 = scmp.eq.s32.totalorder %s51, 0
    %s54 = sadd.s32 %s53, 1
    %s55 = scalar_select %p52, %s53, %s54
    %p58 = pneg %p52
    %p59 = scmp.eq.s32.totalorder %s8, 1
    %p60 = por %p58, %p59
    %p61 = scmp.ne.s32.totalorder %s53, %s56
    %p62 = scmp.eq.s32.totalorder %s8, 0
    %p63 = por %p61, %p62
    %p64 = scmp.ne.s32.totalorder %s53, %s56
    %p65 = scmp.eq.s32.totalorder %s13, 1
    %p66 = por %p64, %p65
    %p67 = scmp.ne.s32.totalorder %s56, %s57
    %p68 = scmp.eq.s32.totalorder %s13, 0
    %p69 = por %p67, %p68
    %p70 = scmp.ne.s32.totalorder %s56, %s57
    %p71 = scmp.eq.s32.totalorder %s14, 1
    %p72 = por %p70, %p71
    %p74 = scmp.ne.s32.totalorder %s57, %s73
    %p75 = scmp.eq.s32.totalorder %s14, 0
    %p76 = por %p74, %p75
    %s77 = ssub.s32 %s15, %s27
    %s78 = ssub.s32 %s16, %s23
    %s79 = sor.u32 %s77, %s78
    %p80 = scmp.eq.s32.totalorder %s79, 0
    %s82 = sadd.s32 %s81, 1
    %s83 = scalar_select %p80, %s81, %s82
    %p86 = pneg %p80
    %p87 = scmp.eq.s32.totalorder %s8, 1
    %p88 = por %p86, %p87
    %p89 = scmp.ne.s32.totalorder %s81, %s84
    %p90 = scmp.eq.s32.totalorder %s8, 0
    %p91 = por %p89, %p90
    %p92 = scmp.ne.s32.totalorder %s81, %s84
    %p93 = scmp.eq.s32.totalorder %s13, 1
    %p94 = por %p92, %p93
    %p95 = scmp.ne.s32.totalorder %s84, %s85
    %p96 = scmp.eq.s32.totalorder %s13, 0
    %p97 = por %p95, %p96
    %p98 = scmp.ne.s32.totalorder %s84, %s85
    %p99 = scmp.eq.s32.totalorder %s14, 1
    %p100 = por %p98, %p99
    %p102 = scmp.ne.s32.totalorder %s85, %s101
    %p103 = scmp.eq.s32.totalorder %s14, 0
    %p104 = por %p102, %p103
    %p105 = scmp.le.s32.totalorder 1, %s8
    %p106 = scmp.lt.s32.totalorder %s8, 3
    %p107 = pnand %p105, %p106
    %p108 = pneg %p107
    // Predicated region
    $region9: #{_lambda_.9} parent=5 // pred_check
      _
    $region10: #{_lambda_.9} parent=5 // pred_check_branch
      %110 = sbr.rel (%p107) target = $region12
    $region11: #{_lambda_.9} parent=5 // pred_region
      %s111 = ssub.s32 %s8, 1
      // Predicated region
      $region13: #{_lambda_.9} parent=11 // pred_check
        %p112 = pneg %p41
      $region14: #{_lambda_.9} parent=11 // pred_check_branch
        %114 = sbr.rel (%p112) target = $region16
      $region15: #{_lambda_.9} parent=11 // pred_region
        _
      $region16: #{_lambda_.9} parent=11 // pred_fallthru
        _
    $region12: #{_lambda_.9} parent=5 // pred_fallthru
      _
    %p115 = scmp.lt.s32.totalorder %s8, 2
    // Predicated region
    $region17: #{_lambda_.9} parent=5 // pred_check
      %p116 = pneg %p115
    $region18: #{_lambda_.9} parent=5 // pred_check_branch
      %118 = sbr.rel (%p116) target = $region20
    $region19: #{_lambda_.9} parent=5 // pred_region
      // Predicated region
      $region21: #{_lambda_.9} parent=19 // pred_check
        %p119 = pneg %p63
      $region22: #{_lambda_.9} parent=19 // pred_check_branch
        %121 = sbr.rel (%p119) target = $region24
      $region23: #{_lambda_.9} parent=19 // pred_region
        %p122 = scmp.lt.s32.totalorder %s15, 1
        %s123 = scalar_select %p122, %s15, 1
        %p124 = scmp.lt.s32.totalorder %s16, 0
        %s125 = scalar_select %p124, %s16, 0
        %s126 = smul.addr %s123, 36
        %s127 = sadd.s32 %s125, %s126
        %s128 = smul.addr %s127, 4
        %s129 = scalar_lea.vmem %s1, %s128
      $region24: #{_lambda_.9} parent=19 // pred_fallthru
        _
    $region20: #{_lambda_.9} parent=5 // pred_fallthru
      _
    %p130 = scmp.le.s32.totalorder 1, %s8
    %p131 = scmp.lt.s32.totalorder %s8, 3
    %p132 = pnand %p130, %p131
    %p133 = pneg %p132
    // Predicated region
    $region25: #{_lambda_.9} parent=5 // pred_check
      _
    $region26: #{_lambda_.9} parent=5 // pred_check_branch
      %135 = sbr.rel (%p132) target = $region28
    $region27: #{_lambda_.9} parent=5 // pred_region
      %s136 = ssub.s32 %s8, 1
      %p137 = pneg %p41
      %p138 = pneg %p38
      %p139 = scmp.lt.s32.totalorder %s17, 1
      %s140 = scalar_select %p139, %s17, 1
      %p141 = scmp.lt.s32.totalorder %s18, 0
      %s142 = scalar_select %p141, %s18, 0
      %s143 = smul.addr %s140, 36
      %s144 = sadd.s32 %s142, %s143
      %s145 = smul.addr %s144, 4
      %s146 = scalar_lea.vmem %s1, %s145
      %p147 = pneg %p69
      %p148 = pneg %p66
      %p149 = pneg %p97
      %p150 = pneg %p94
      %p151 = scmp.lt.s32.totalorder %s17, 1
      %s152 = scalar_select %p151, %s17, 1
      %p153 = scmp.lt.s32.totalorder %s18, 0
      %s154 = scalar_select %p153, %s18, 0
      %s155 = smul.addr %s152, 16
      %s156 = sadd.s32 %s154, %s155
      %s157 = smul.addr %s156, 8
      %s158 = scalar_lea.vmem %s2, %s157
      %p159 = scmp.lt.s32.totalorder %s17, 1
      %s160 = scalar_select %p159, %s17, 1
      %p161 = scmp.lt.s32.totalorder %s18, 0
      %s162 = scalar_select %p161, %s18, 0
      %s163 = smul.addr %s160, 36
      %s164 = sadd.s32 %s162, %s163
      %s165 = smul.addr %s164, 4
      %s166 = scalar_lea.vmem %s1, %s165
      %p167 = scmp.lt.s32.totalorder %s17, 1
      %s168 = scalar_select %p167, %s17, 1
      %p169 = scmp.lt.s32.totalorder %s18, 0
      %s170 = scalar_select %p169, %s18, 0
      %s171 = smul.addr %s168, 16
      %s172 = sadd.s32 %s170, %s171
      %s173 = smul.addr %s172, 8
      %s174 = scalar_lea.vmem %s2, %s173
      %v176 = vld [vmem:[%s0] sm:$0xff]
      %v177 = vld [vmem:[%s0 + $0x8] sm:$0xf]
      %v178 = vld [vmem:[%s0 + $0xc] sm:$0xff]
      %v179 = vld [vmem:[%s0 + $0x14] sm:$0xf]
      %v180 = vld [vmem:[%s0 + $0x18] sm:$0xff]
      %v181 = vld [vmem:[%s0 + $0x20] sm:$0xf]
      %v182 = vld [vmem:[%s0 + $0x24] sm:$0xff]
      %v183 = vld [vmem:[%s0 + $0x2c] sm:$0xf]
      %v184 = vld [vmem:[%s0 + $0x30] sm:$0xff]
      %v185 = vld [vmem:[%s0 + $0x38] sm:$0xf]
      %v186 = vld [vmem:[%s0 + $0x3c] sm:$0xff]
      %v187 = vld [vmem:[%s0 + $0x44] sm:$0xf]
      %v188 = vld [vmem:[%s0 + $0x48] sm:$0xff]
      %v189 = vld [vmem:[%s0 + $0x50] sm:$0xf]
      %v190 = vld [vmem:[%s0 + $0x54] sm:$0xff]
      %v191 = vld [vmem:[%s0 + $0x5c] sm:$0xf]
      %v192 = vld [vmem:[%s0 + $0x60] sm:$0xff]
      %v193 = vld [vmem:[%s0 + $0x68] sm:$0xf]
      %v194 = vld [vmem:[%s0 + $0x6c] sm:$0xff]
      %v195 = vld [vmem:[%s0 + $0x74] sm:$0xf]
      %v196 = vld [vmem:[%s0 + $0x78] sm:$0xff]
      %v197 = vld [vmem:[%s0 + $0x80] sm:$0xf]
      %v198 = vld [vmem:[%s0 + $0x84] sm:$0xff]
      %v199 = vld [vmem:[%s0 + $0x8c] sm:$0xf]
      %v200 = vld [vmem:[%s0 + $0x90] sm:$0xff]
      %v201 = vld [vmem:[%s0 + $0x98] sm:$0xf]
      %v202 = vld [vmem:[%s0 + $0x9c] sm:$0xff]
      %v203 = vld [vmem:[%s0 + $0xa4] sm:$0xf]
      %v204 = vld [vmem:[%s0 + $0xa8] sm:$0xff]
      %v205 = vld [vmem:[%s0 + $0xb0] sm:$0xf]
      %v206 = vld [vmem:[%s0 + $0xb4] sm:$0xff]
      %v207 = vld [vmem:[%s0 + $0xbc] sm:$0xf]
      %v208 = vld [vmem:[%s166] sm:$0xf]
      %v209 = vld [vmem:[%s166 + $0x4] sm:$0xf]
      %v210 = vld [vmem:[%s166 + $0x8] sm:$0xf]
      %v211 = vld [vmem:[%s166 + $0xc] sm:$0xf]
      %v212 = vld [vmem:[%s166 + $0x10] sm:$0xf]
      %v213 = vld [vmem:[%s166 + $0x14] sm:$0xf]
      %v214 = vld [vmem:[%s166 + $0x18] sm:$0xf]
      %v215 = vld [vmem:[%s166 + $0x1c] sm:$0xf]
      %v216 = vld [vmem:[%s166 + $0x20] sm:$0xf]
      %v217 = vld [vmem:[%s166 + $0x24] sm:$0xf]
      %v218 = vld [vmem:[%s166 + $0x28] sm:$0xf]
      %v219 = vld [vmem:[%s166 + $0x2c] sm:$0xf]
      %v220 = vld [vmem:[%s166 + $0x30] sm:$0xf]
      %v221 = vld [vmem:[%s166 + $0x34] sm:$0xf]
      %v222 = vld [vmem:[%s166 + $0x38] sm:$0xf]
      %v223 = vld [vmem:[%s166 + $0x3c] sm:$0xf]
      %v224 = vld [vmem:[%s166 + $0x40] sm:$0xf]
      %v225 = vld [vmem:[%s166 + $0x44] sm:$0xf]
      %v226 = vld [vmem:[%s166 + $0x48] sm:$0xf]
      %v227 = vld [vmem:[%s166 + $0x4c] sm:$0xf]
      %v228 = vld [vmem:[%s166 + $0x50] sm:$0xf]
      %v229 = vld [vmem:[%s166 + $0x54] sm:$0xf]
      %v230 = vld [vmem:[%s166 + $0x58] sm:$0xf]
      %v231 = vld [vmem:[%s166 + $0x5c] sm:$0xf]
      %v232 = vld [vmem:[%s166 + $0x60] sm:$0xf]
      %v233 = vld [vmem:[%s166 + $0x64] sm:$0xf]
      %v234 = vld [vmem:[%s166 + $0x68] sm:$0xf]
      %v235 = vld [vmem:[%s166 + $0x6c] sm:$0xf]
      %v236 = vld [vmem:[%s166 + $0x70] sm:$0xf]
      %v237 = vld [vmem:[%s166 + $0x74] sm:$0xf]
      %v238 = vld [vmem:[%s166 + $0x78] sm:$0xf]
      %v239 = vld [vmem:[%s166 + $0x7c] sm:$0xf]
      %v240 = vld [vmem:[%s166 + $0x80] sm:$0xf]
      %v241 = vld [vmem:[%s166 + $0x84] sm:$0xf]
      %v242 = vld [vmem:[%s166 + $0x88] sm:$0xf]
      %v243 = vld [vmem:[%s166 + $0x8c] sm:$0xf]
      %v276 = vunpack.c.l.b16 %v176
      %v277 = vunpack.c.h.b16 %v176
      %v278 = vunpack.c.l.b16 %v177
      %v279 = vunpack.c.l.b16 %v178
      %v280 = vunpack.c.h.b16 %v178
      %v281 = vunpack.c.l.b16 %v179
      %v282 = vunpack.c.l.b16 %v180
      %v283 = vunpack.c.h.b16 %v180
      %v284 = vunpack.c.l.b16 %v181
      %v285 = vunpack.c.l.b16 %v182
      %v286 = vunpack.c.h.b16 %v182
      %v287 = vunpack.c.l.b16 %v183
      %v288 = vunpack.c.l.b16 %v184
      %v289 = vunpack.c.h.b16 %v184
      %v290 = vunpack.c.l.b16 %v185
      %v291 = vunpack.c.l.b16 %v186
      %v292 = vunpack.c.h.b16 %v186
      %v293 = vunpack.c.l.b16 %v187
      %v294 = vunpack.c.l.b16 %v188
      %v295 = vunpack.c.h.b16 %v188
      %v296 = vunpack.c.l.b16 %v189
      %v297 = vunpack.c.l.b16 %v190
      %v298 = vunpack.c.h.b16 %v190
      %v299 = vunpack.c.l.b16 %v191
      %v300 = vunpack.c.l.b16 %v192
      %v301 = vunpack.c.h.b16 %v192
      %v302 = vunpack.c.l.b16 %v193
      %v303 = vunpack.c.l.b16 %v194
      %v304 = vunpack.c.h.b16 %v194
      %v305 = vunpack.c.l.b16 %v195
      %v306 = vunpack.c.l.b16 %v196
      %v307 = vunpack.c.h.b16 %v196
      %v308 = vunpack.c.l.b16 %v197
      %v309 = vunpack.c.l.b16 %v198
      %v310 = vunpack.c.h.b16 %v198
      %v311 = vunpack.c.l.b16 %v199
      %v312 = vunpack.c.l.b16 %v200
      %v313 = vunpack.c.h.b16 %v200
      %v314 = vunpack.c.l.b16 %v201
      %v315 = vunpack.c.l.b16 %v202
      %v316 = vunpack.c.h.b16 %v202
      %v317 = vunpack.c.l.b16 %v203
      %v318 = vunpack.c.l.b16 %v204
      %v319 = vunpack.c.h.b16 %v204
      %v320 = vunpack.c.l.b16 %v205
      %v321 = vunpack.c.l.b16 %v206
      %v322 = vunpack.c.h.b16 %v206
      %v323 = vunpack.c.l.b16 %v207
      %v324 = vpack.c.b16 %v279, %v276
      %v325 = vpack.c.b16 %v280, %v277
      %v326 = vpack.c.b16 %v281, %v278
      %v327 = vpack.c.b16 %v285, %v282
      %v328 = vpack.c.b16 %v286, %v283
      %v329 = vpack.c.b16 %v287, %v284
      %v330 = vpack.c.b16 %v291, %v288
      %v331 = vpack.c.b16 %v292, %v289
      %v332 = vpack.c.b16 %v293, %v290
      %v333 = vpack.c.b16 %v297, %v294
      %v334 = vpack.c.b16 %v298, %v295
      %v335 = vpack.c.b16 %v299, %v296
      %v336 = vpack.c.b16 %v303, %v300
      %v337 = vpack.c.b16 %v304, %v301
      %v338 = vpack.c.b16 %v305, %v302
      %v339 = vpack.c.b16 %v309, %v306
      %v340 = vpack.c.b16 %v310, %v307
      %v341 = vpack.c.b16 %v311, %v308
      %v342 = vpack.c.b16 %v315, %v312
      %v343 = vpack.c.b16 %v316, %v313
      %v344 = vpack.c.b16 %v317, %v314
      %v345 = vpack.c.b16 %v321, %v318
      %v346 = vpack.c.b16 %v322, %v319
      %v347 = vpack.c.b16 %v323, %v320
      %v400 = vunpack.c.l.b16 %v208
      %v401 = vunpack.c.l.b16 %v209
      %v402 = vunpack.c.l.b16 %v210
      %v403 = vunpack.c.l.b16 %v211
      %v404 = vunpack.c.l.b16 %v212
      %v405 = vunpack.c.l.b16 %v213
      %v406 = vunpack.c.l.b16 %v214
      %v407 = vunpack.c.l.b16 %v215
      %v408 = vunpack.c.l.b16 %v216
      %v409 = vunpack.c.l.b16 %v217
      %v410 = vunpack.c.l.b16 %v218
      %v411 = vunpack.c.l.b16 %v219
      %v412 = vunpack.c.l.b16 %v220
      %v413 = vunpack.c.l.b16 %v221
      %v414 = vunpack.c.l.b16 %v222
      %v415 = vunpack.c.l.b16 %v223
      %v416 = vunpack.c.l.b16 %v224
      %v417 = vunpack.c.l.b16 %v225
      %v418 = vunpack.c.l.b16 %v226
      %v419 = vunpack.c.l.b16 %v227
      %v420 = vunpack.c.l.b16 %v228
      %v421 = vunpack.c.l.b16 %v229
      %v422 = vunpack.c.l.b16 %v230
      %v423 = vunpack.c.l.b16 %v231
      %v424 = vunpack.c.l.b16 %v232
      %v425 = vunpack.c.l.b16 %v233
      %v426 = vunpack.c.l.b16 %v234
      %v427 = vunpack.c.l.b16 %v235
      %v428 = vunpack.c.l.b16 %v236
      %v429 = vunpack.c.l.b16 %v237
      %v430 = vunpack.c.l.b16 %v238
      %v431 = vunpack.c.l.b16 %v239
      %v432 = vunpack.c.l.b16 %v240
      %v433 = vunpack.c.l.b16 %v241
      %v434 = vunpack.c.l.b16 %v242
      %v435 = vunpack.c.l.b16 %v243
      %v436 = vpack.c.b16 %v401, %v400
      %v437 = vpack.c.b16 %v403, %v402
      %v438 = vpack.c.b16 %v405, %v404
      %v439 = vpack.c.b16 %v407, %v406
      %v440 = vpack.c.b16 %v409, %v408
      %v441 = vpack.c.b16 %v411, %v410
      %v442 = vpack.c.b16 %v413, %v412
      %v443 = vpack.c.b16 %v415, %v414
      %v444 = vpack.c.b16 %v417, %v416
      %v445 = vpack.c.b16 %v419, %v418
      %v446 = vpack.c.b16 %v421, %v420
      %v447 = vpack.c.b16 %v423, %v422
      %v448 = vpack.c.b16 %v425, %v424
      %v449 = vpack.c.b16 %v427, %v426
      %v450 = vpack.c.b16 %v429, %v428
      %v451 = vpack.c.b16 %v431, %v430
      %v452 = vpack.c.b16 %v433, %v432
      %v453 = vpack.c.b16 %v435, %v434
      %vm472 = vcmask 261120
      %v474 = vsel %vm472, %v326, 0
      %v477 = vsel %vm472, %v329, 0
      %v480 = vsel %vm472, %v332, 0
      %v483 = vsel %vm472, %v335, 0
      %v486 = vsel %vm472, %v338, 0
      %v489 = vsel %vm472, %v341, 0
      %v492 = vsel %vm472, %v344, 0
      %v495 = vsel %vm472, %v347, 0
      %497 = vmatprep.subr.bf16.mxu0 0
      %498 = vmatpush1.bf16.msra.mxu0 %v436
      %499 = vmatprep.subr.bf16.mxu0 0
      %500 = vmatpush1.bf16.msra.mxu0 %v437
      %501 = vmatprep.subr.bf16.mxu0 0
      %502 = vmatpush1.bf16.msra.mxu0 %v438
      %503 = vmatprep.subr.bf16.mxu0 0
      %504 = vmatpush1.bf16.msra.mxu0 %v439
      %505 = vmatprep.subr.bf16.mxu0 0
      %506 = vmatpush1.bf16.msra.mxu0 %v440
      %507 = vmatprep.subr.bf16.mxu0 0
      %508 = vmatpush1.bf16.msra.mxu0 %v441
      %509 = vmatprep.subr.bf16.mxu0 0
      %510 = vmatpush1.bf16.msra.mxu0 %v442
      %511 = vmatprep.subr.bf16.mxu0 0
      %512 = vmatpush1.bf16.msra.mxu0 %v443
      %513 = vmatprep.subr.bf16.mxu0 0
      %514 = vmatpush1.bf16.msra.mxu0 %v444
      %515 = vmatprep.subr.bf16.mxu0 0
      %516 = vmatpush1.bf16.msra.mxu0 %v445
      %517 = vmatprep.subr.bf16.mxu0 0
      %518 = vmatpush1.bf16.msra.mxu0 %v446
      %519 = vmatprep.subr.bf16.mxu0 0
      %520 = vmatpush1.bf16.msra.mxu0 %v447
      %521 = vmatprep.subr.bf16.mxu0 0
      %522 = vmatpush1.bf16.msra.mxu0 %v448
      %523 = vmatprep.subr.bf16.mxu0 0
      %524 = vmatpush1.bf16.msra.mxu0 %v449
      %525 = vmatprep.subr.bf16.mxu0 0
      %526 = vmatpush1.bf16.msra.mxu0 %v450
      %527 = vmatprep.subr.bf16.mxu0 0
      %528 = vmatpush1.bf16.msra.mxu0 %v451
      %529 = vmatprep.mubr.bf16.mxu0 %v325
      %530 = vmatmul.mubr.bf16.gmra.mrb[0].mxu0 %v324
      %v531 = vpop.f32.mrb[0].mxu0
      %v532 = vadd.f32 0.0, %v531
      %v533 = vpop.f32.mrb[0].mxu0
      %v534 = vpop.f32.mrb[0].mxu0
      %v535 = vadd.f32 0.0, %v534
      %v536 = vpop.f32.mrb[0].mxu0
      %537 = vmatprep.mubr.bf16.mxu0 %v328
      %538 = vmatmul.mubr.bf16.gmra.mrb[0].mxu0 %v327
      %v539 = vpop.f32.mrb[0].mxu0
      %v540 = vadd.f32 0.0, %v539
      %v541 = vpop.f32.mrb[0].mxu0
      %v542 = vpop.f32.mrb[0].mxu0
      %v543 = vadd.f32 0.0, %v542
      %v544 = vpop.f32.mrb[0].mxu0
      %545 = vmatprep.mubr.bf16.mxu0 %v331
      %546 = vmatmul.mubr.bf16.gmra.mrb[0].mxu0 %v330
      %v547 = vpop.f32.mrb[0].mxu0
      %v548 = vadd.f32 0.0, %v547
      %v549 = vpop.f32.mrb[0].mxu0
      %v550 = vpop.f32.mrb[0].mxu0
      %v551 = vadd.f32 0.0, %v550
      %v552 = vpop.f32.mrb[0].mxu0
      %553 = vmatprep.mubr.bf16.mxu0 %v334
      %554 = vmatmul.mubr.bf16.gmra.mrb[0].mxu0 %v333
      %v555 = vpop.f32.mrb[0].mxu0
      %v556 = vadd.f32 0.0, %v555
      %v557 = vpop.f32.mrb[0].mxu0
      %v558 = vpop.f32.mrb[0].mxu0
      %v559 = vadd.f32 0.0, %v558
      %v560 = vpop.f32.mrb[0].mxu0
      %561 = vmatprep.mubr.bf16.mxu0 %v337
      %562 = vmatmul.mubr.bf16.gmra.mrb[0].mxu0 %v336
      %v563 = vpop.f32.mrb[0].mxu0
      %v564 = vadd.f32 0.0, %v563
      %v565 = vpop.f32.mrb[0].mxu0
      %v566 = vpop.f32.mrb[0].mxu0
      %v567 = vadd.f32 0.0, %v566
      %v568 = vpop.f32.mrb[0].mxu0
      %569 = vmatprep.mubr.bf16.mxu0 %v340
      %570 = vmatmul.mubr.bf16.gmra.mrb[0].mxu0 %v339
      %v571 = vpop.f32.mrb[0].mxu0
      %v572 = vadd.f32 0.0, %v571
      %v573 = vpop.f32.mrb[0].mxu0
      %v574 = vpop.f32.mrb[0].mxu0
      %v575 = vadd.f32 0.0, %v574
      %v576 = vpop.f32.mrb[0].mxu0
      %577 = vmatprep.mubr.bf16.mxu0 %v343
      %578 = vmatmul.mubr.bf16.gmra.mrb[0].mxu0 %v342
      %v579 = vpop.f32.mrb[0].mxu0
      %v580 = vadd.f32 0.0, %v579
      %v581 = vpop.f32.mrb[0].mxu0
      %v582 = vpop.f32.mrb[0].mxu0
      %v583 = vadd.f32 0.0, %v582
      %v584 = vpop.f32.mrb[0].mxu0
      %585 = vmatprep.mubr.bf16.mxu0 %v346
      %586 = vmatmul.mubr.bf16.gmra.mrb[0].mxu0 %v345
      %v587 = vpop.f32.mrb[0].mxu0
      %v588 = vadd.f32 0.0, %v587
      %v589 = vpop.f32.mrb[0].mxu0
      %v590 = vpop.f32.mrb[0].mxu0
      %v591 = vadd.f32 0.0, %v590
      %v592 = vpop.f32.mrb[0].mxu0
      %593 = vdwg.mxu0
      %594 = vmatprep.subr.bf16.mxu0 0
      %595 = vmatpush1.bf16.msra.mxu0 %v452
      %596 = vmatprep.subr.bf16.mxu0 0
      %597 = vmatpush1.bf16.msra.mxu0 %v453
      %598 = vmatprep.subr.bf16.mxu0 0
      %599 = vmatpush1.bf16.msra.mxu0 0
      %600 = vmatprep.subr.bf16.mxu0 0
      %601 = vmatpush1.bf16.msra.mxu0 0
      %602 = vmatprep.subr.bf16.mxu0 0
      %603 = vmatpush1.bf16.msra.mxu0 0
      %604 = vmatprep.subr.bf16.mxu0 0
      %605 = vmatpush1.bf16.msra.mxu0 0
      %606 = vmatprep.subr.bf16.mxu0 0
      %607 = vmatpush1.bf16.msra.mxu0 0
      %608 = vmatprep.subr.bf16.mxu0 0
      %609 = vmatpush1.bf16.msra.mxu0 0
      %610 = vmatprep.subr.bf16.mxu0 0
      %611 = vmatpush1.bf16.msra.mxu0 0
      %612 = vmatprep.subr.bf16.mxu0 0
      %613 = vmatpush1.bf16.msra.mxu0 0
      %614 = vmatprep.subr.bf16.mxu0 0
      %615 = vmatpush1.bf16.msra.mxu0 0
      %616 = vmatprep.subr.bf16.mxu0 0
      %617 = vmatpush1.bf16.msra.mxu0 0
      %618 = vmatprep.subr.bf16.mxu0 0
      %619 = vmatpush1.bf16.msra.mxu0 0
      %620 = vmatprep.subr.bf16.mxu0 0
      %621 = vmatpush1.bf16.msra.mxu0 0
      %622 = vmatprep.subr.bf16.mxu0 0
      %623 = vmatpush1.bf16.msra.mxu0 0
      %624 = vmatprep.subr.bf16.mxu0 0
      %625 = vmatpush1.bf16.msra.mxu0 0
      %626 = vmatprep.mubr.bf16.mxu0 0
      %627 = vmatmul.mubr.bf16.gmra.mrb[0].mxu0 %v474
      %v628 = vpop.f32.mrb[0].mxu0
      %v629 = vadd.f32 %v532, %v628
      %v630 = vpop.f32.mrb[0].mxu0
      %v631 = vpop.f32.mrb[0].mxu0
      %v632 = vadd.f32 %v535, %v631
      %v633 = vpop.f32.mrb[0].mxu0
      %634 = vmatprep.mubr.bf16.mxu0 0
      %635 = vmatmul.mubr.bf16.gmra.mrb[0].mxu0 %v477
      %v636 = vpop.f32.mrb[0].mxu0
      %v637 = vadd.f32 %v540, %v636
      %v638 = vpop.f32.mrb[0].mxu0
      %v639 = vpop.f32.mrb[0].mxu0
      %v640 = vadd.f32 %v543, %v639
      %v641 = vpop.f32.mrb[0].mxu0
      %642 = vmatprep.mubr.bf16.mxu0 0
      %643 = vmatmul.mubr.bf16.gmra.mrb[0].mxu0 %v480
      %v644 = vpop.f32.mrb[0].mxu0
      %v645 = vadd.f32 %v548, %v644
      %v646 = vpop.f32.mrb[0].mxu0
      %v647 = vpop.f32.mrb[0].mxu0
      %v648 = vadd.f32 %v551, %v647
      %v649 = vpop.f32.mrb[0].mxu0
      %650 = vmatprep.mubr.bf16.mxu0 0
      %651 = vmatmul.mubr.bf16.gmra.mrb[0].mxu0 %v483
      %v652 = vpop.f32.mrb[0].mxu0
      %v653 = vadd.f32 %v556, %v652
      %v654 = vpop.f32.mrb[0].mxu0
      %v655 = vpop.f32.mrb[0].mxu0
      %v656 = vadd.f32 %v559, %v655
      %v657 = vpop.f32.mrb[0].mxu0
      %658 = vmatprep.mubr.bf16.mxu0 0
      %659 = vmatmul.mubr.bf16.gmra.mrb[0].mxu0 %v486
      %v660 = vpop.f32.mrb[0].mxu0
      %v661 = vadd.f32 %v564, %v660
      %v662 = vpop.f32.mrb[0].mxu0
      %v663 = vpop.f32.mrb[0].mxu0
      %v664 = vadd.f32 %v567, %v663
      %v665 = vpop.f32.mrb[0].mxu0
      %666 = vmatprep.mubr.bf16.mxu0 0
      %667 = vmatmul.mubr.bf16.gmra.mrb[0].mxu0 %v489
      %v668 = vpop.f32.mrb[0].mxu0
      %v669 = vadd.f32 %v572, %v668
      %v670 = vpop.f32.mrb[0].mxu0
      %v671 = vpop.f32.mrb[0].mxu0
      %v672 = vadd.f32 %v575, %v671
      %v673 = vpop.f32.mrb[0].mxu0
      %674 = vmatprep.mubr.bf16.mxu0 0
      %675 = vmatmul.mubr.bf16.gmra.mrb[0].mxu0 %v492
      %v676 = vpop.f32.mrb[0].mxu0
      %v677 = vadd.f32 %v580, %v676
      %v678 = vpop.f32.mrb[0].mxu0
      %v679 = vpop.f32.mrb[0].mxu0
      %v680 = vadd.f32 %v583, %v679
      %v681 = vpop.f32.mrb[0].mxu0
      %682 = vmatprep.mubr.bf16.mxu0 0
      %683 = vmatmul.mubr.bf16.gmra.mrb[0].mxu0 %v495
      %v684 = vpop.f32.mrb[0].mxu0
      %v685 = vadd.f32 %v588, %v684
      %v686 = vpop.f32.mrb[0].mxu0
      %v687 = vpop.f32.mrb[0].mxu0
      %v688 = vadd.f32 %v591, %v687
      %v689 = vpop.f32.mrb[0].mxu0
      %690 = vdwg.mxu0
      %vm691 = vcmp.ge.f32.partialorder %v629, 0.0
      %vm692 = vcmp.ge.f32.partialorder %v632, 0.0
      %vm693 = vcmp.ge.f32.partialorder %v637, 0.0
      %vm694 = vcmp.ge.f32.partialorder %v640, 0.0
      %vm695 = vcmp.ge.f32.partialorder %v645, 0.0
      %vm696 = vcmp.ge.f32.partialorder %v648, 0.0
      %vm697 = vcmp.ge.f32.partialorder %v653, 0.0
      %vm698 = vcmp.ge.f32.partialorder %v656, 0.0
      %vm699 = vcmp.ge.f32.partialorder %v661, 0.0
      %vm700 = vcmp.ge.f32.partialorder %v664, 0.0
      %vm701 = vcmp.ge.f32.partialorder %v669, 0.0
      %vm702 = vcmp.ge.f32.partialorder %v672, 0.0
      %vm703 = vcmp.ge.f32.partialorder %v677, 0.0
      %vm704 = vcmp.ge.f32.partialorder %v680, 0.0
      %vm705 = vcmp.ge.f32.partialorder %v685, 0.0
      %vm706 = vcmp.ge.f32.partialorder %v688, 0.0
      %v707 = vmul.f32 %v629, 0.2
      %v708 = vmul.f32 %v632, 0.2
      %v709 = vmul.f32 %v637, 0.2
      %v710 = vmul.f32 %v640, 0.2
      %v711 = vmul.f32 %v645, 0.2
      %v712 = vmul.f32 %v648, 0.2
      %v713 = vmul.f32 %v653, 0.2
      %v714 = vmul.f32 %v656, 0.2
      %v715 = vmul.f32 %v661, 0.2
      %v716 = vmul.f32 %v664, 0.2
      %v717 = vmul.f32 %v669, 0.2
      %v718 = vmul.f32 %v672, 0.2
      %v719 = vmul.f32 %v677, 0.2
      %v720 = vmul.f32 %v680, 0.2
      %v721 = vmul.f32 %v685, 0.2
      %v722 = vmul.f32 %v688, 0.2
      %v723 = vsel %vm691, %v629, %v707
      %v724 = vsel %vm692, %v632, %v708
      %v725 = vsel %vm693, %v637, %v709
      %v726 = vsel %vm694, %v640, %v710
      %v727 = vsel %vm695, %v645, %v711
      %v728 = vsel %vm696, %v648, %v712
      %v729 = vsel %vm697, %v653, %v713
      %v730 = vsel %vm698, %v656, %v714
      %v731 = vsel %vm699, %v661, %v715
      %v732 = vsel %vm700, %v664, %v716
      %v733 = vsel %vm701, %v669, %v717
      %v734 = vsel %vm702, %v672, %v718
      %v735 = vsel %vm703, %v677, %v719
      %v736 = vsel %vm704, %v680, %v720
      %v737 = vsel %vm705, %v685, %v721
      %v738 = vsel %vm706, %v688, %v722
      %vm739 = vcmask 31744
      %740 = vst.msk [vmem:[%s174] sm:$0xff] %vm739, %v723
      %741 = vst.msk [vmem:[%s174 + $0x8] sm:$0xff] %vm739, %v724
      %742 = vst.msk [vmem:[%s174 + $0x10] sm:$0xff] %vm739, %v725
      %743 = vst.msk [vmem:[%s174 + $0x18] sm:$0xff] %vm739, %v726
      %744 = vst.msk [vmem:[%s174 + $0x20] sm:$0xff] %vm739, %v727
      %745 = vst.msk [vmem:[%s174 + $0x28] sm:$0xff] %vm739, %v728
      %746 = vst.msk [vmem:[%s174 + $0x30] sm:$0xff] %vm739, %v729
      %747 = vst.msk [vmem:[%s174 + $0x38] sm:$0xff] %vm739, %v730
      %748 = vst.msk [vmem:[%s174 + $0x40] sm:$0xff] %vm739, %v731
      %749 = vst.msk [vmem:[%s174 + $0x48] sm:$0xff] %vm739, %v732
      %750 = vst.msk [vmem:[%s174 + $0x50] sm:$0xff] %vm739, %v733
      %751 = vst.msk [vmem:[%s174 + $0x58] sm:$0xff] %vm739, %v734
      %752 = vst.msk [vmem:[%s174 + $0x60] sm:$0xff] %vm739, %v735
      %753 = vst.msk [vmem:[%s174 + $0x68] sm:$0xff] %vm739, %v736
      %754 = vst.msk [vmem:[%s174 + $0x70] sm:$0xff] %vm739, %v737
      %755 = vst.msk [vmem:[%s174 + $0x78] sm:$0xff] %vm739, %v738
      %p756 = scmp.lt.s32.totalorder %s17, 1
      %s757 = scalar_select %p756, %s17, 1
      %p758 = scmp.lt.s32.totalorder %s18, 0
      %s759 = scalar_select %p758, %s18, 0
      %s760 = smul.addr %s757, 16
      %s761 = sadd.s32 %s759, %s760
      %s762 = smul.addr %s761, 8
      %s763 = scalar_lea.vmem %s2, %s762
      // Predicated region
      $region29: #{_lambda_.9} parent=27 // pred_check
        %p764 = pneg %p94
      $region30: #{_lambda_.9} parent=27 // pred_check_branch
        %766 = sbr.rel (%p764) target = $region32
      $region31: #{_lambda_.9} parent=27 // pred_region
        _
      $region32: #{_lambda_.9} parent=27 // pred_fallthru
        _
    $region28: #{_lambda_.9} parent=5 // pred_fallthru
      _
    %p767 = scmp.le.s32.totalorder 2, %s8
    // Predicated region
    $region33: #{_lambda_.9} parent=5 // pred_check
      %p768 = pneg %p767
    $region34: #{_lambda_.9} parent=5 // pred_check_branch
      %770 = sbr.rel (%p768) target = $region36
    $region35: #{_lambda_.9} parent=5 // pred_region
      %s771 = ssub.s32 %s8, 2
      // Predicated region
      $region37: #{_lambda_.9} parent=35 // pred_check
        %p772 = pneg %p100
      $region38: #{_lambda_.9} parent=35 // pred_check_branch
        %774 = sbr.rel (%p772) target = $region40
      $region39: #{_lambda_.9} parent=35 // pred_region
        %p775 = scmp.lt.s32.totalorder %s19, 1
        %s776 = scalar_select %p775, %s19, 1
        %p777 = scmp.lt.s32.totalorder %s20, 0
        %s778 = scalar_select %p777, %s20, 0
        %s779 = smul.addr %s776, 16
        %s780 = sadd.s32 %s778, %s779
        %s781 = smul.addr %s780, 8
        %s782 = scalar_lea.vmem %s2, %s781
      $region40: #{_lambda_.9} parent=35 // pred_fallthru
        _
    $region36: #{_lambda_.9} parent=5 // pred_fallthru
      _
  $region6: #{_lambda_.9} parent=0 // loop_footer
    %s12 = sadd.s32 1, %s8
  $region7: #{_lambda_.9} parent=0 // loop_footer_branch
    %7 = sbr.rel target = $region3
  $region8: #{_lambda_.9} parent=0 // loop_exit
    _

// kernel: _lambda_.10
$region0: #{_lambda_.10}
  #allocation0 [shape = 'u32[]', space=smem, size = 0x4, offset = 0x4, fixed_abs, tag = 'smem constant byte address 0x4 - core index']
  #allocation1 [shape = 'u32[144,128]{1,0:T(1,128)}', space=vmem, size = 0x12000, scoped, tag = 'internal scratch']
  %s0 = inlined_call_operand.vmem [shape: bf16[64,288], index: 0, kind: input, shape index: {}]
  %s1 = inlined_call_operand.vmem [shape: bf16[2,288,16], index: 1, kind: input, shape index: {}]
  %s2 = inlined_call_operand.vmem [shape: f32[2,64,16], index: 2, kind: output, shape index: {}]
  %s3 = sld [smem:[#allocation0]]
  $region41: #{_lambda_.10} parent=0
    _
  %s5 = ssub.s32 1, %s3
  %s6 = scalar_select 0, %s5, %s3
  loop: start=0, step=1, limit=4
  $region2: #{_lambda_.10} parent=0 // loop_pre_header
    _
  $region3: #{_lambda_.10} parent=0 // loop_header
    %s8 = sphi 0, %s12
    %p9 = scmp.ge.s32.totalorder %s8, 4
    %s15 = sphi 0, %s27
    %s16 = sphi 0, %s23
    %s17 = sphi 0, %s15
    %s18 = sphi 0, %s16
    %s19 = sphi 0, %s17
    %s20 = sphi 0, %s18
    %s28 = sphi 0, %s28
    %s30 = sphi 0, %s28
    %s31 = sphi 0, %s30
    %s45 = sphi 0, %s31
    %s53 = sphi 0, %s55
    %s56 = sphi 0, %s53
    %s57 = sphi 0, %s56
    %s73 = sphi 0, %s57
    %s81 = sphi 0, %s83
    %s84 = sphi 0, %s81
    %s85 = sphi 0, %s84
    %s101 = sphi 0, %s85
  $region4: #{_lambda_.10} parent=0 // loop_header_branch
    %11 = sbr.rel (%p9) target = $region8
  $region5: #{_lambda_.10} parent=0 // loop_body
    %s13 = ssub.s32 %s8, 1
    %s14 = ssub.s32 %s8, 2
    %s21 = sadd.s32 1, %s16
    %p22 = scmp.ge.s32.totalorder %s21, 1
    %s23 = scalar_select %p22, 0, %s21
    %s24 = sadd.s32 1, %s15
    %s25 = scalar_select %p22, %s24, %s15
    %p26 = scmp.ge.s32.totalorder %s25, 2
    %s27 = scalar_select %p26, 0, %s25
    %s29 = sadd.s32 %s28, 1
    %p32 = scmp.eq.s32.totalorder %s8, 1
    %p33 = scmp.ne.s32.totalorder %s28, %s30
    %p34 = scmp.eq.s32.totalorder %s8, 0
    %p35 = por %p33, %p34
    %p36 = scmp.ne.s32.totalorder %s28, %s30
    %p37 = scmp.eq.s32.totalorder %s13, 1
    %p38 = por %p36, %p37
    %p39 = scmp.ne.s32.totalorder %s30, %s31
    %p40 = scmp.eq.s32.totalorder %s13, 0
    %p41 = por %p39, %p40
    %p42 = scmp.ne.s32.totalorder %s30, %s31
    %p43 = scmp.eq.s32.totalorder %s14, 1
    %p44 = por %p42, %p43
    %p46 = scmp.ne.s32.totalorder %s31, %s45
    %p47 = scmp.eq.s32.totalorder %s14, 0
    %p48 = por %p46, %p47
    %s49 = ssub.s32 %s15, %s27
    %s50 = ssub.s32 %s16, %s23
    %s51 = sor.u32 %s49, %s50
    %p52 = scmp.eq.s32.totalorder %s51, 0
    %s54 = sadd.s32 %s53, 1
    %s55 = scalar_select %p52, %s53, %s54
    %p58 = pneg %p52
    %p59 = scmp.eq.s32.totalorder %s8, 1
    %p60 = por %p58, %p59
    %p61 = scmp.ne.s32.totalorder %s53, %s56
    %p62 = scmp.eq.s32.totalorder %s8, 0
    %p63 = por %p61, %p62
    %p64 = scmp.ne.s32.totalorder %s53, %s56
    %p65 = scmp.eq.s32.totalorder %s13, 1
    %p66 = por %p64, %p65
    %p67 = scmp.ne.s32.totalorder %s56, %s57
    %p68 = scmp.eq.s32.totalorder %s13, 0
    %p69 = por %p67, %p68
    %p70 = scmp.ne.s32.totalorder %s56, %s57
    %p71 = scmp.eq.s32.totalorder %s14, 1
    %p72 = por %p70, %p71
    %p74 = scmp.ne.s32.totalorder %s57, %s73
    %p75 = scmp.eq.s32.totalorder %s14, 0
    %p76 = por %p74, %p75
    %s77 = ssub.s32 %s15, %s27
    %s78 = ssub.s32 %s16, %s23
    %s79 = sor.u32 %s77, %s78
    %p80 = scmp.eq.s32.totalorder %s79, 0
    %s82 = sadd.s32 %s81, 1
    %s83 = scalar_select %p80, %s81, %s82
    %p86 = pneg %p80
    %p87 = scmp.eq.s32.totalorder %s8, 1
    %p88 = por %p86, %p87
    %p89 = scmp.ne.s32.totalorder %s81, %s84
    %p90 = scmp.eq.s32.totalorder %s8, 0
    %p91 = por %p89, %p90
    %p92 = scmp.ne.s32.totalorder %s81, %s84
    %p93 = scmp.eq.s32.totalorder %s13, 1
    %p94 = por %p92, %p93
    %p95 = scmp.ne.s32.totalorder %s84, %s85
    %p96 = scmp.eq.s32.totalorder %s13, 0
    %p97 = por %p95, %p96
    %p98 = scmp.ne.s32.totalorder %s84, %s85
    %p99 = scmp.eq.s32.totalorder %s14, 1
    %p100 = por %p98, %p99
    %p102 = scmp.ne.s32.totalorder %s85, %s101
    %p103 = scmp.eq.s32.totalorder %s14, 0
    %p104 = por %p102, %p103
    %p105 = scmp.le.s32.totalorder 1, %s8
    %p106 = scmp.lt.s32.totalorder %s8, 3
    %p107 = pnand %p105, %p106
    %p108 = pneg %p107
    // Predicated region
    $region9: #{_lambda_.10} parent=5 // pred_check
      _
    $region10: #{_lambda_.10} parent=5 // pred_check_branch
      %110 = sbr.rel (%p107) target = $region12
    $region11: #{_lambda_.10} parent=5 // pred_region
      %s111 = ssub.s32 %s8, 1
      // Predicated region
      $region13: #{_lambda_.10} parent=11 // pred_check
        %p112 = pneg %p41
      $region14: #{_lambda_.10} parent=11 // pred_check_branch
        %114 = sbr.rel (%p112) target = $region16
      $region15: #{_lambda_.10} parent=11 // pred_region
        _
      $region16: #{_lambda_.10} parent=11 // pred_fallthru
        _
    $region12: #{_lambda_.10} parent=5 // pred_fallthru
      _
    %p115 = scmp.lt.s32.totalorder %s8, 2
    // Predicated region
    $region17: #{_lambda_.10} parent=5 // pred_check
      %p116 = pneg %p115
    $region18: #{_lambda_.10} parent=5 // pred_check_branch
      %118 = sbr.rel (%p116) target = $region20
    $region19: #{_lambda_.10} parent=5 // pred_region
      // Predicated region
      $region21: #{_lambda_.10} parent=19 // pred_check
        %p119 = pneg %p63
      $region22: #{_lambda_.10} parent=19 // pred_check_branch
        %121 = sbr.rel (%p119) target = $region24
      $region23: #{_lambda_.10} parent=19 // pred_region
        %p122 = scmp.lt.s32.totalorder %s15, 1
        %s123 = scalar_select %p122, %s15, 1
        %p124 = scmp.lt.s32.totalorder %s16, 0
        %s125 = scalar_select %p124, %s16, 0
        %s126 = smul.addr %s123, 36
        %s127 = sadd.s32 %s125, %s126
        %s128 = smul.addr %s127, 4
        %s129 = scalar_lea.vmem %s1, %s128
      $region24: #{_lambda_.10} parent=19 // pred_fallthru
        _
    $region20: #{_lambda_.10} parent=5 // pred_fallthru
      _
    %p130 = scmp.le.s32.totalorder 1, %s8
    %p131 = scmp.lt.s32.totalorder %s8, 3
    %p132 = pnand %p130, %p131
    %p133 = pneg %p132
    // Predicated region
    $region25: #{_lambda_.10} parent=5 // pred_check
      _
    $region26: #{_lambda_.10} parent=5 // pred_check_branch
      %135 = sbr.rel (%p132) target = $region28
    $region27: #{_lambda_.10} parent=5 // pred_region
      %s136 = ssub.s32 %s8, 1
      %p137 = pneg %p41
      %p138 = pneg %p38
      %p139 = scmp.lt.s32.totalorder %s17, 1
      %s140 = scalar_select %p139, %s17, 1
      %p141 = scmp.lt.s32.totalorder %s18, 0
      %s142 = scalar_select %p141, %s18, 0
      %s143 = smul.addr %s140, 36
      %s144 = sadd.s32 %s142, %s143
      %s145 = smul.addr %s144, 4
      %s146 = scalar_lea.vmem %s1, %s145
      %p147 = pneg %p69
      %p148 = pneg %p66
      %p149 = pneg %p97
      %p150 = pneg %p94
      %p151 = scmp.lt.s32.totalorder %s17, 1
      %s152 = scalar_select %p151, %s17, 1
      %p153 = scmp.lt.s32.totalorder %s18, 0
      %s154 = scalar_select %p153, %s18, 0
      %s155 = smul.addr %s152, 8
      %s156 = sadd.s32 %s154, %s155
      %s157 = smul.addr %s156, 8
      %s158 = scalar_lea.vmem %s2, %s157
      %p159 = scmp.lt.s32.totalorder %s17, 1
      %s160 = scalar_select %p159, %s17, 1
      %p161 = scmp.lt.s32.totalorder %s18, 0
      %s162 = scalar_select %p161, %s18, 0
      %s163 = smul.addr %s160, 36
      %s164 = sadd.s32 %s162, %s163
      %s165 = smul.addr %s164, 4
      %s166 = scalar_lea.vmem %s1, %s165
      %p167 = scmp.lt.s32.totalorder %s17, 1
      %s168 = scalar_select %p167, %s17, 1
      %p169 = scmp.lt.s32.totalorder %s18, 0
      %s170 = scalar_select %p169, %s18, 0
      %s171 = smul.addr %s168, 8
      %s172 = sadd.s32 %s170, %s171
      %s173 = smul.addr %s172, 8
      %s174 = scalar_lea.vmem %s2, %s173
      %v176 = vld [vmem:[%s0] sm:$0xff]
      %v177 = vld [vmem:[%s0 + $0x8] sm:$0xf]
      %v178 = vld [vmem:[%s0 + $0xc] sm:$0xff]
      %v179 = vld [vmem:[%s0 + $0x14] sm:$0xf]
      %v180 = vld [vmem:[%s0 + $0x18] sm:$0xff]
      %v181 = vld [vmem:[%s0 + $0x20] sm:$0xf]
      %v182 = vld [vmem:[%s0 + $0x24] sm:$0xff]
      %v183 = vld [vmem:[%s0 + $0x2c] sm:$0xf]
      %v184 = vld [vmem:[%s0 + $0x30] sm:$0xff]
      %v185 = vld [vmem:[%s0 + $0x38] sm:$0xf]
      %v186 = vld [vmem:[%s0 + $0x3c] sm:$0xff]
      %v187 = vld [vmem:[%s0 + $0x44] sm:$0xf]
      %v188 = vld [vmem:[%s0 + $0x48] sm:$0xff]
      %v189 = vld [vmem:[%s0 + $0x50] sm:$0xf]
      %v190 = vld [vmem:[%s0 + $0x54] sm:$0xff]
      %v191 = vld [vmem:[%s0 + $0x5c] sm:$0xf]
      %v192 = vld [vmem:[%s166] sm:$0xf]
      %v193 = vld [vmem:[%s166 + $0x4] sm:$0xf]
      %v194 = vld [vmem:[%s166 + $0x8] sm:$0xf]
      %v195 = vld [vmem:[%s166 + $0xc] sm:$0xf]
      %v196 = vld [vmem:[%s166 + $0x10] sm:$0xf]
      %v197 = vld [vmem:[%s166 + $0x14] sm:$0xf]
      %v198 = vld [vmem:[%s166 + $0x18] sm:$0xf]
      %v199 = vld [vmem:[%s166 + $0x1c] sm:$0xf]
      %v200 = vld [vmem:[%s166 + $0x20] sm:$0xf]
      %v201 = vld [vmem:[%s166 + $0x24] sm:$0xf]
      %v202 = vld [vmem:[%s166 + $0x28] sm:$0xf]
      %v203 = vld [vmem:[%s166 + $0x2c] sm:$0xf]
      %v204 = vld [vmem:[%s166 + $0x30] sm:$0xf]
      %v205 = vld [vmem:[%s166 + $0x34] sm:$0xf]
      %v206 = vld [vmem:[%s166 + $0x38] sm:$0xf]
      %v207 = vld [vmem:[%s166 + $0x3c] sm:$0xf]
      %v208 = vld [vmem:[%s166 + $0x40] sm:$0xf]
      %v209 = vld [vmem:[%s166 + $0x44] sm:$0xf]
      %v210 = vld [vmem:[%s166 + $0x48] sm:$0xf]
      %v211 = vld [vmem:[%s166 + $0x4c] sm:$0xf]
      %v212 = vld [vmem:[%s166 + $0x50] sm:$0xf]
      %v213 = vld [vmem:[%s166 + $0x54] sm:$0xf]
      %v214 = vld [vmem:[%s166 + $0x58] sm:$0xf]
      %v215 = vld [vmem:[%s166 + $0x5c] sm:$0xf]
      %v216 = vld [vmem:[%s166 + $0x60] sm:$0xf]
      %v217 = vld [vmem:[%s166 + $0x64] sm:$0xf]
      %v218 = vld [vmem:[%s166 + $0x68] sm:$0xf]
      %v219 = vld [vmem:[%s166 + $0x6c] sm:$0xf]
      %v220 = vld [vmem:[%s166 + $0x70] sm:$0xf]
      %v221 = vld [vmem:[%s166 + $0x74] sm:$0xf]
      %v222 = vld [vmem:[%s166 + $0x78] sm:$0xf]
      %v223 = vld [vmem:[%s166 + $0x7c] sm:$0xf]
      %v224 = vld [vmem:[%s166 + $0x80] sm:$0xf]
      %v225 = vld [vmem:[%s166 + $0x84] sm:$0xf]
      %v226 = vld [vmem:[%s166 + $0x88] sm:$0xf]
      %v227 = vld [vmem:[%s166 + $0x8c] sm:$0xf]
      %v244 = vunpack.c.l.b16 %v176
      %v245 = vunpack.c.h.b16 %v176
      %v246 = vunpack.c.l.b16 %v177
      %v247 = vunpack.c.l.b16 %v178
      %v248 = vunpack.c.h.b16 %v178
      %v249 = vunpack.c.l.b16 %v179
      %v250 = vunpack.c.l.b16 %v180
      %v251 = vunpack.c.h.b16 %v180
      %v252 = vunpack.c.l.b16 %v181
      %v253 = vunpack.c.l.b16 %v182
      %v254 = vunpack.c.h.b16 %v182
      %v255 = vunpack.c.l.b16 %v183
      %v256 = vunpack.c.l.b16 %v184
      %v257 = vunpack.c.h.b16 %v184
      %v258 = vunpack.c.l.b16 %v185
      %v259 = vunpack.c.l.b16 %v186
      %v260 = vunpack.c.h.b16 %v186
      %v261 = vunpack.c.l.b16 %v187
      %v262 = vunpack.c.l.b16 %v188
      %v263 = vunpack.c.h.b16 %v188
      %v264 = vunpack.c.l.b16 %v189
      %v265 = vunpack.c.l.b16 %v190
      %v266 = vunpack.c.h.b16 %v190
      %v267 = vunpack.c.l.b16 %v191
      %v268 = vpack.c.b16 %v247, %v244
      %v269 = vpack.c.b16 %v248, %v245
      %v270 = vpack.c.b16 %v249, %v246
      %v271 = vpack.c.b16 %v253, %v250
      %v272 = vpack.c.b16 %v254, %v251
      %v273 = vpack.c.b16 %v255, %v252
      %v274 = vpack.c.b16 %v259, %v256
      %v275 = vpack.c.b16 %v260, %v257
      %v276 = vpack.c.b16 %v261, %v258
      %v277 = vpack.c.b16 %v265, %v262
      %v278 = vpack.c.b16 %v266, %v263
      %v279 = vpack.c.b16 %v267, %v264
      %v324 = vunpack.c.l.b16 %v192
      %v325 = vunpack.c.l.b16 %v193
      %v326 = vunpack.c.l.b16 %v194
      %v327 = vunpack.c.l.b16 %v195
      %v328 = vunpack.c.l.b16 %v196
      %v329 = vunpack.c.l.b16 %v197
      %v330 = vunpack.c.l.b16 %v198
      %v331 = vunpack.c.l.b16 %v199
      %v332 = vunpack.c.l.b16 %v200
      %v333 = vunpack.c.l.b16 %v201
      %v334 = vunpack.c.l.b16 %v202
      %v335 = vunpack.c.l.b16 %v203
      %v336 = vunpack.c.l.b16 %v204
      %v337 = vunpack.c.l.b16 %v205
      %v338 = vunpack.c.l.b16 %v206
      %v339 = vunpack.c.l.b16 %v207
      %v340 = vunpack.c.l.b16 %v208
      %v341 = vunpack.c.l.b16 %v209
      %v342 = vunpack.c.l.b16 %v210
      %v343 = vunpack.c.l.b16 %v211
      %v344 = vunpack.c.l.b16 %v212
      %v345 = vunpack.c.l.b16 %v213
      %v346 = vunpack.c.l.b16 %v214
      %v347 = vunpack.c.l.b16 %v215
      %v348 = vunpack.c.l.b16 %v216
      %v349 = vunpack.c.l.b16 %v217
      %v350 = vunpack.c.l.b16 %v218
      %v351 = vunpack.c.l.b16 %v219
      %v352 = vunpack.c.l.b16 %v220
      %v353 = vunpack.c.l.b16 %v221
      %v354 = vunpack.c.l.b16 %v222
      %v355 = vunpack.c.l.b16 %v223
      %v356 = vunpack.c.l.b16 %v224
      %v357 = vunpack.c.l.b16 %v225
      %v358 = vunpack.c.l.b16 %v226
      %v359 = vunpack.c.l.b16 %v227
      %v360 = vpack.c.b16 %v325, %v324
      %v361 = vpack.c.b16 %v327, %v326
      %v362 = vpack.c.b16 %v329, %v328
      %v363 = vpack.c.b16 %v331, %v330
      %v364 = vpack.c.b16 %v333, %v332
      %v365 = vpack.c.b16 %v335, %v334
      %v366 = vpack.c.b16 %v337, %v336
      %v367 = vpack.c.b16 %v339, %v338
      %v368 = vpack.c.b16 %v341, %v340
      %v369 = vpack.c.b16 %v343, %v342
      %v370 = vpack.c.b16 %v345, %v344
      %v371 = vpack.c.b16 %v347, %v346
      %v372 = vpack.c.b16 %v349, %v348
      %v373 = vpack.c.b16 %v351, %v350
      %v374 = vpack.c.b16 %v353, %v352
      %v375 = vpack.c.b16 %v355, %v354
      %v376 = vpack.c.b16 %v357, %v356
      %v377 = vpack.c.b16 %v359, %v358
      %vm396 = vcmask 261120
      %v398 = vsel %vm396, %v270, 0
      %v401 = vsel %vm396, %v273, 0
      %v404 = vsel %vm396, %v276, 0
      %v407 = vsel %vm396, %v279, 0
      %409 = vmatprep.subr.bf16.mxu0 0
      %410 = vmatpush1.bf16.msra.mxu0 %v360
      %411 = vmatprep.subr.bf16.mxu0 0
      %412 = vmatpush1.bf16.msra.mxu0 %v361
      %413 = vmatprep.subr.bf16.mxu0 0
      %414 = vmatpush1.bf16.msra.mxu0 %v362
      %415 = vmatprep.subr.bf16.mxu0 0
      %416 = vmatpush1.bf16.msra.mxu0 %v363
      %417 = vmatprep.subr.bf16.mxu0 0
      %418 = vmatpush1.bf16.msra.mxu0 %v364
      %419 = vmatprep.subr.bf16.mxu0 0
      %420 = vmatpush1.bf16.msra.mxu0 %v365
      %421 = vmatprep.subr.bf16.mxu0 0
      %422 = vmatpush1.bf16.msra.mxu0 %v366
      %423 = vmatprep.subr.bf16.mxu0 0
      %424 = vmatpush1.bf16.msra.mxu0 %v367
      %425 = vmatprep.subr.bf16.mxu0 0
      %426 = vmatpush1.bf16.msra.mxu0 %v368
      %427 = vmatprep.subr.bf16.mxu0 0
      %428 = vmatpush1.bf16.msra.mxu0 %v369
      %429 = vmatprep.subr.bf16.mxu0 0
      %430 = vmatpush1.bf16.msra.mxu0 %v370
      %431 = vmatprep.subr.bf16.mxu0 0
      %432 = vmatpush1.bf16.msra.mxu0 %v371
      %433 = vmatprep.subr.bf16.mxu0 0
      %434 = vmatpush1.bf16.msra.mxu0 %v372
      %435 = vmatprep.subr.bf16.mxu0 0
      %436 = vmatpush1.bf16.msra.mxu0 %v373
      %437 = vmatprep.subr.bf16.mxu0 0
      %438 = vmatpush1.bf16.msra.mxu0 %v374
      %439 = vmatprep.subr.bf16.mxu0 0
      %440 = vmatpush1.bf16.msra.mxu0 %v375
      %441 = vmatprep.mubr.bf16.mxu0 %v269
      %442 = vmatmul.mubr.bf16.gmra.mrb[0].mxu0 %v268
      %v443 = vpop.f32.mrb[0].mxu0
      %v444 = vadd.f32 0.0, %v443
      %v445 = vpop.f32.mrb[0].mxu0
      %v446 = vpop.f32.mrb[0].mxu0
      %v447 = vadd.f32 0.0, %v446
      %v448 = vpop.f32.mrb[0].mxu0
      %449 = vmatprep.mubr.bf16.mxu0 %v272
      %450 = vmatmul.mubr.bf16.gmra.mrb[0].mxu0 %v271
      %v451 = vpop.f32.mrb[0].mxu0
      %v452 = vadd.f32 0.0, %v451
      %v453 = vpop.f32.mrb[0].mxu0
      %v454 = vpop.f32.mrb[0].mxu0
      %v455 = vadd.f32 0.0, %v454
      %v456 = vpop.f32.mrb[0].mxu0
      %457 = vmatprep.mubr.bf16.mxu0 %v275
      %458 = vmatmul.mubr.bf16.gmra.mrb[0].mxu0 %v274
      %v459 = vpop.f32.mrb[0].mxu0
      %v460 = vadd.f32 0.0, %v459
      %v461 = vpop.f32.mrb[0].mxu0
      %v462 = vpop.f32.mrb[0].mxu0
      %v463 = vadd.f32 0.0, %v462
      %v464 = vpop.f32.mrb[0].mxu0
      %465 = vmatprep.mubr.bf16.mxu0 %v278
      %466 = vmatmul.mubr.bf16.gmra.mrb[0].mxu0 %v277
      %v467 = vpop.f32.mrb[0].mxu0
      %v468 = vadd.f32 0.0, %v467
      %v469 = vpop.f32.mrb[0].mxu0
      %v470 = vpop.f32.mrb[0].mxu0
      %v471 = vadd.f32 0.0, %v470
      %v472 = vpop.f32.mrb[0].mxu0
      %473 = vdwg.mxu0
      %474 = vmatprep.subr.bf16.mxu0 0
      %475 = vmatpush1.bf16.msra.mxu0 %v376
      %476 = vmatprep.subr.bf16.mxu0 0
      %477 = vmatpush1.bf16.msra.mxu0 %v377
      %478 = vmatprep.subr.bf16.mxu0 0
      %479 = vmatpush1.bf16.msra.mxu0 0
      %480 = vmatprep.subr.bf16.mxu0 0
      %481 = vmatpush1.bf16.msra.mxu0 0
      %482 = vmatprep.subr.bf16.mxu0 0
      %483 = vmatpush1.bf16.msra.mxu0 0
      %484 = vmatprep.subr.bf16.mxu0 0
      %485 = vmatpush1.bf16.msra.mxu0 0
      %486 = vmatprep.subr.bf16.mxu0 0
      %487 = vmatpush1.bf16.msra.mxu0 0
      %488 = vmatprep.subr.bf16.mxu0 0
      %489 = vmatpush1.bf16.msra.mxu0 0
      %490 = vmatprep.subr.bf16.mxu0 0
      %491 = vmatpush1.bf16.msra.mxu0 0
      %492 = vmatprep.subr.bf16.mxu0 0
      %493 = vmatpush1.bf16.msra.mxu0 0
      %494 = vmatprep.subr.bf16.mxu0 0
      %495 = vmatpush1.bf16.msra.mxu0 0
      %496 = vmatprep.subr.bf16.mxu0 0
      %497 = vmatpush1.bf16.msra.mxu0 0
      %498 = vmatprep.subr.bf16.mxu0 0
      %499 = vmatpush1.bf16.msra.mxu0 0
      %500 = vmatprep.subr.bf16.mxu0 0
      %501 = vmatpush1.bf16.msra.mxu0 0
      %502 = vmatprep.subr.bf16.mxu0 0
      %503 = vmatpush1.bf16.msra.mxu0 0
      %504 = vmatprep.subr.bf16.mxu0 0
      %505 = vmatpush1.bf16.msra.mxu0 0
      %506 = vmatprep.mubr.bf16.mxu0 0
      %507 = vmatmul.mubr.bf16.gmra.mrb[0].mxu0 %v398
      %v508 = vpop.f32.mrb[0].mxu0
      %v509 = vadd.f32 %v444, %v508
      %v510 = vpop.f32.mrb[0].mxu0
      %v511 = vpop.f32.mrb[0].mxu0
      %v512 = vadd.f32 %v447, %v511
      %v513 = vpop.f32.mrb[0].mxu0
      %514 = vmatprep.mubr.bf16.mxu0 0
      %515 = vmatmul.mubr.bf16.gmra.mrb[0].mxu0 %v401
      %v516 = vpop.f32.mrb[0].mxu0
      %v517 = vadd.f32 %v452, %v516
      %v518 = vpop.f32.mrb[0].mxu0
      %v519 = vpop.f32.mrb[0].mxu0
      %v520 = vadd.f32 %v455, %v519
      %v521 = vpop.f32.mrb[0].mxu0
      %522 = vmatprep.mubr.bf16.mxu0 0
      %523 = vmatmul.mubr.bf16.gmra.mrb[0].mxu0 %v404
      %v524 = vpop.f32.mrb[0].mxu0
      %v525 = vadd.f32 %v460, %v524
      %v526 = vpop.f32.mrb[0].mxu0
      %v527 = vpop.f32.mrb[0].mxu0
      %v528 = vadd.f32 %v463, %v527
      %v529 = vpop.f32.mrb[0].mxu0
      %530 = vmatprep.mubr.bf16.mxu0 0
      %531 = vmatmul.mubr.bf16.gmra.mrb[0].mxu0 %v407
      %v532 = vpop.f32.mrb[0].mxu0
      %v533 = vadd.f32 %v468, %v532
      %v534 = vpop.f32.mrb[0].mxu0
      %v535 = vpop.f32.mrb[0].mxu0
      %v536 = vadd.f32 %v471, %v535
      %v537 = vpop.f32.mrb[0].mxu0
      %538 = vdwg.mxu0
      %vm539 = vcmp.ge.f32.partialorder %v509, 0.0
      %vm540 = vcmp.ge.f32.partialorder %v512, 0.0
      %vm541 = vcmp.ge.f32.partialorder %v517, 0.0
      %vm542 = vcmp.ge.f32.partialorder %v520, 0.0
      %vm543 = vcmp.ge.f32.partialorder %v525, 0.0
      %vm544 = vcmp.ge.f32.partialorder %v528, 0.0
      %vm545 = vcmp.ge.f32.partialorder %v533, 0.0
      %vm546 = vcmp.ge.f32.partialorder %v536, 0.0
      %v547 = vmul.f32 %v509, 0.2
      %v548 = vmul.f32 %v512, 0.2
      %v549 = vmul.f32 %v517, 0.2
      %v550 = vmul.f32 %v520, 0.2
      %v551 = vmul.f32 %v525, 0.2
      %v552 = vmul.f32 %v528, 0.2
      %v553 = vmul.f32 %v533, 0.2
      %v554 = vmul.f32 %v536, 0.2
      %v555 = vsel %vm539, %v509, %v547
      %v556 = vsel %vm540, %v512, %v548
      %v557 = vsel %vm541, %v517, %v549
      %v558 = vsel %vm542, %v520, %v550
      %v559 = vsel %vm543, %v525, %v551
      %v560 = vsel %vm544, %v528, %v552
      %v561 = vsel %vm545, %v533, %v553
      %v562 = vsel %vm546, %v536, %v554
      %vm563 = vcmask 130048
      %564 = vst.msk [vmem:[%s174] sm:$0xff] %vm563, %v555
      %565 = vst.msk [vmem:[%s174 + $0x8] sm:$0xff] %vm563, %v556
      %566 = vst.msk [vmem:[%s174 + $0x10] sm:$0xff] %vm563, %v557
      %567 = vst.msk [vmem:[%s174 + $0x18] sm:$0xff] %vm563, %v558
      %568 = vst.msk [vmem:[%s174 + $0x20] sm:$0xff] %vm563, %v559
      %569 = vst.msk [vmem:[%s174 + $0x28] sm:$0xff] %vm563, %v560
      %570 = vst.msk [vmem:[%s174 + $0x30] sm:$0xff] %vm563, %v561
      %571 = vst.msk [vmem:[%s174 + $0x38] sm:$0xff] %vm563, %v562
      %p572 = scmp.lt.s32.totalorder %s17, 1
      %s573 = scalar_select %p572, %s17, 1
      %p574 = scmp.lt.s32.totalorder %s18, 0
      %s575 = scalar_select %p574, %s18, 0
      %s576 = smul.addr %s573, 8
      %s577 = sadd.s32 %s575, %s576
      %s578 = smul.addr %s577, 8
      %s579 = scalar_lea.vmem %s2, %s578
      // Predicated region
      $region29: #{_lambda_.10} parent=27 // pred_check
        %p580 = pneg %p94
      $region30: #{_lambda_.10} parent=27 // pred_check_branch
        %582 = sbr.rel (%p580) target = $region32
      $region31: #{_lambda_.10} parent=27 // pred_region
        _
      $region32: #{_lambda_.10} parent=27 // pred_fallthru
        _
    $region28: #{_lambda_.10} parent=5 // pred_fallthru
      _
    %p583 = scmp.le.s32.totalorder 2, %s8
    // Predicated region
    $region33: #{_lambda_.10} parent=5 // pred_check
      %p584 = pneg %p583
    $region34: #{_lambda_.10} parent=5 // pred_check_branch
      %586 = sbr.rel (%p584) target = $region36
    $region35: #{_lambda_.10} parent=5 // pred_region
      %s587 = ssub.s32 %s8, 2
      // Predicated region
      $region37: #{_lambda_.10} parent=35 // pred_check
        %p588 = pneg %p100
      $region38: #{_lambda_.10} parent=35 // pred_check_branch
        %590 = sbr.rel (%p588) target = $region40
      $region39: #{_lambda_.10} parent=35 // pred_region
        %p591 = scmp.lt.s32.totalorder %s19, 1
        %s592 = scalar_select %p591, %s19, 1
        %p593 = scmp.lt.s32.totalorder %s20, 0
        %s594 = scalar_select %p593, %s20, 0
        %s595 = smul.addr %s592, 8
        %s596 = sadd.s32 %s594, %s595
        %s597 = smul.addr %s596, 8
        %s598 = scalar_lea.vmem %s2, %s597
      $region40: #{_lambda_.10} parent=35 // pred_fallthru
        _
    $region36: #{_lambda_.10} parent=5 // pred_fallthru
      _
  $region6: #{_lambda_.10} parent=0 // loop_footer
    %s12 = sadd.s32 1, %s8
  $region7: #{_lambda_.10} parent=0 // loop_footer_branch
    %7 = sbr.rel target = $region3
  $region8: #{_lambda_.10} parent=0 // loop_exit
    _

// kernel: _lambda_.11
$region0: #{_lambda_.11}
  #allocation0 [shape = 'u32[]', space=smem, size = 0x4, offset = 0x4, fixed_abs, tag = 'smem constant byte address 0x4 - core index']
  #allocation1 [shape = 'u32[144,128]{1,0:T(1,128)}', space=vmem, size = 0x12000, scoped, tag = 'internal scratch']
  %s0 = inlined_call_operand.vmem [shape: bf16[64,144], index: 0, kind: input, shape index: {}]
  %s1 = inlined_call_operand.vmem [shape: bf16[2,144,64], index: 1, kind: input, shape index: {}]
  %s2 = inlined_call_operand.vmem [shape: f32[2,64,64], index: 2, kind: output, shape index: {}]
  %s3 = sld [smem:[#allocation0]]
  $region41: #{_lambda_.11} parent=0
    _
  %s5 = ssub.s32 1, %s3
  %s6 = scalar_select 0, %s5, %s3
  loop: start=0, step=1, limit=4
  $region2: #{_lambda_.11} parent=0 // loop_pre_header
    _
  $region3: #{_lambda_.11} parent=0 // loop_header
    %s8 = sphi 0, %s12
    %p9 = scmp.ge.s32.totalorder %s8, 4
    %s15 = sphi 0, %s27
    %s16 = sphi 0, %s23
    %s17 = sphi 0, %s15
    %s18 = sphi 0, %s16
    %s19 = sphi 0, %s17
    %s20 = sphi 0, %s18
    %s28 = sphi 0, %s28
    %s30 = sphi 0, %s28
    %s31 = sphi 0, %s30
    %s45 = sphi 0, %s31
    %s53 = sphi 0, %s55
    %s56 = sphi 0, %s53
    %s57 = sphi 0, %s56
    %s73 = sphi 0, %s57
    %s81 = sphi 0, %s83
    %s84 = sphi 0, %s81
    %s85 = sphi 0, %s84
    %s101 = sphi 0, %s85
  $region4: #{_lambda_.11} parent=0 // loop_header_branch
    %11 = sbr.rel (%p9) target = $region8
  $region5: #{_lambda_.11} parent=0 // loop_body
    %s13 = ssub.s32 %s8, 1
    %s14 = ssub.s32 %s8, 2
    %s21 = sadd.s32 1, %s16
    %p22 = scmp.ge.s32.totalorder %s21, 1
    %s23 = scalar_select %p22, 0, %s21
    %s24 = sadd.s32 1, %s15
    %s25 = scalar_select %p22, %s24, %s15
    %p26 = scmp.ge.s32.totalorder %s25, 2
    %s27 = scalar_select %p26, 0, %s25
    %s29 = sadd.s32 %s28, 1
    %p32 = scmp.eq.s32.totalorder %s8, 1
    %p33 = scmp.ne.s32.totalorder %s28, %s30
    %p34 = scmp.eq.s32.totalorder %s8, 0
    %p35 = por %p33, %p34
    %p36 = scmp.ne.s32.totalorder %s28, %s30
    %p37 = scmp.eq.s32.totalorder %s13, 1
    %p38 = por %p36, %p37
    %p39 = scmp.ne.s32.totalorder %s30, %s31
    %p40 = scmp.eq.s32.totalorder %s13, 0
    %p41 = por %p39, %p40
    %p42 = scmp.ne.s32.totalorder %s30, %s31
    %p43 = scmp.eq.s32.totalorder %s14, 1
    %p44 = por %p42, %p43
    %p46 = scmp.ne.s32.totalorder %s31, %s45
    %p47 = scmp.eq.s32.totalorder %s14, 0
    %p48 = por %p46, %p47
    %s49 = ssub.s32 %s15, %s27
    %s50 = ssub.s32 %s16, %s23
    %s51 = sor.u32 %s49, %s50
    %p52 = scmp.eq.s32.totalorder %s51, 0
    %s54 = sadd.s32 %s53, 1
    %s55 = scalar_select %p52, %s53, %s54
    %p58 = pneg %p52
    %p59 = scmp.eq.s32.totalorder %s8, 1
    %p60 = por %p58, %p59
    %p61 = scmp.ne.s32.totalorder %s53, %s56
    %p62 = scmp.eq.s32.totalorder %s8, 0
    %p63 = por %p61, %p62
    %p64 = scmp.ne.s32.totalorder %s53, %s56
    %p65 = scmp.eq.s32.totalorder %s13, 1
    %p66 = por %p64, %p65
    %p67 = scmp.ne.s32.totalorder %s56, %s57
    %p68 = scmp.eq.s32.totalorder %s13, 0
    %p69 = por %p67, %p68
    %p70 = scmp.ne.s32.totalorder %s56, %s57
    %p71 = scmp.eq.s32.totalorder %s14, 1
    %p72 = por %p70, %p71
    %p74 = scmp.ne.s32.totalorder %s57, %s73
    %p75 = scmp.eq.s32.totalorder %s14, 0
    %p76 = por %p74, %p75
    %s77 = ssub.s32 %s15, %s27
    %s78 = ssub.s32 %s16, %s23
    %s79 = sor.u32 %s77, %s78
    %p80 = scmp.eq.s32.totalorder %s79, 0
    %s82 = sadd.s32 %s81, 1
    %s83 = scalar_select %p80, %s81, %s82
    %p86 = pneg %p80
    %p87 = scmp.eq.s32.totalorder %s8, 1
    %p88 = por %p86, %p87
    %p89 = scmp.ne.s32.totalorder %s81, %s84
    %p90 = scmp.eq.s32.totalorder %s8, 0
    %p91 = por %p89, %p90
    %p92 = scmp.ne.s32.totalorder %s81, %s84
    %p93 = scmp.eq.s32.totalorder %s13, 1
    %p94 = por %p92, %p93
    %p95 = scmp.ne.s32.totalorder %s84, %s85
    %p96 = scmp.eq.s32.totalorder %s13, 0
    %p97 = por %p95, %p96
    %p98 = scmp.ne.s32.totalorder %s84, %s85
    %p99 = scmp.eq.s32.totalorder %s14, 1
    %p100 = por %p98, %p99
    %p102 = scmp.ne.s32.totalorder %s85, %s101
    %p103 = scmp.eq.s32.totalorder %s14, 0
    %p104 = por %p102, %p103
    %p105 = scmp.le.s32.totalorder 1, %s8
    %p106 = scmp.lt.s32.totalorder %s8, 3
    %p107 = pnand %p105, %p106
    %p108 = pneg %p107
    // Predicated region
    $region9: #{_lambda_.11} parent=5 // pred_check
      _
    $region10: #{_lambda_.11} parent=5 // pred_check_branch
      %110 = sbr.rel (%p107) target = $region12
    $region11: #{_lambda_.11} parent=5 // pred_region
      %s111 = ssub.s32 %s8, 1
      // Predicated region
      $region13: #{_lambda_.11} parent=11 // pred_check
        %p112 = pneg %p41
      $region14: #{_lambda_.11} parent=11 // pred_check_branch
        %114 = sbr.rel (%p112) target = $region16
      $region15: #{_lambda_.11} parent=11 // pred_region
        _
      $region16: #{_lambda_.11} parent=11 // pred_fallthru
        _
    $region12: #{_lambda_.11} parent=5 // pred_fallthru
      _
    %p115 = scmp.lt.s32.totalorder %s8, 2
    // Predicated region
    $region17: #{_lambda_.11} parent=5 // pred_check
      %p116 = pneg %p115
    $region18: #{_lambda_.11} parent=5 // pred_check_branch
      %118 = sbr.rel (%p116) target = $region20
    $region19: #{_lambda_.11} parent=5 // pred_region
      // Predicated region
      $region21: #{_lambda_.11} parent=19 // pred_check
        %p119 = pneg %p63
      $region22: #{_lambda_.11} parent=19 // pred_check_branch
        %121 = sbr.rel (%p119) target = $region24
      $region23: #{_lambda_.11} parent=19 // pred_region
        %p122 = scmp.lt.s32.totalorder %s15, 1
        %s123 = scalar_select %p122, %s15, 1
        %p124 = scmp.lt.s32.totalorder %s16, 0
        %s125 = scalar_select %p124, %s16, 0
        %s126 = smul.addr %s123, 18
        %s127 = sadd.s32 %s125, %s126
        %s128 = smul.addr %s127, 4
        %s129 = scalar_lea.vmem %s1, %s128
      $region24: #{_lambda_.11} parent=19 // pred_fallthru
        _
    $region20: #{_lambda_.11} parent=5 // pred_fallthru
      _
    %p130 = scmp.le.s32.totalorder 1, %s8
    %p131 = scmp.lt.s32.totalorder %s8, 3
    %p132 = pnand %p130, %p131
    %p133 = pneg %p132
    // Predicated region
    $region25: #{_lambda_.11} parent=5 // pred_check
      _
    $region26: #{_lambda_.11} parent=5 // pred_check_branch
      %135 = sbr.rel (%p132) target = $region28
    $region27: #{_lambda_.11} parent=5 // pred_region
      %s136 = ssub.s32 %s8, 1
      %p137 = pneg %p41
      %p138 = pneg %p38
      %p139 = scmp.lt.s32.totalorder %s17, 1
      %s140 = scalar_select %p139, %s17, 1
      %p141 = scmp.lt.s32.totalorder %s18, 0
      %s142 = scalar_select %p141, %s18, 0
      %s143 = smul.addr %s140, 18
      %s144 = sadd.s32 %s142, %s143
      %s145 = smul.addr %s144, 4
      %s146 = scalar_lea.vmem %s1, %s145
      %p147 = pneg %p69
      %p148 = pneg %p66
      %p149 = pneg %p97
      %p150 = pneg %p94
      %p151 = scmp.lt.s32.totalorder %s17, 1
      %s152 = scalar_select %p151, %s17, 1
      %p153 = scmp.lt.s32.totalorder %s18, 0
      %s154 = scalar_select %p153, %s18, 0
      %s155 = smul.addr %s152, 8
      %s156 = sadd.s32 %s154, %s155
      %s157 = smul.addr %s156, 8
      %s158 = scalar_lea.vmem %s2, %s157
      %p159 = scmp.lt.s32.totalorder %s17, 1
      %s160 = scalar_select %p159, %s17, 1
      %p161 = scmp.lt.s32.totalorder %s18, 0
      %s162 = scalar_select %p161, %s18, 0
      %s163 = smul.addr %s160, 18
      %s164 = sadd.s32 %s162, %s163
      %s165 = smul.addr %s164, 4
      %s166 = scalar_lea.vmem %s1, %s165
      %p167 = scmp.lt.s32.totalorder %s17, 1
      %s168 = scalar_select %p167, %s17, 1
      %p169 = scmp.lt.s32.totalorder %s18, 0
      %s170 = scalar_select %p169, %s18, 0
      %s171 = smul.addr %s168, 8
      %s172 = sadd.s32 %s170, %s171
      %s173 = smul.addr %s172, 8
      %s174 = scalar_lea.vmem %s2, %s173
      %v176 = vld [vmem:[%s0] sm:$0xff]
      %v177 = vld [vmem:[%s0 + $0x8] sm:$0xff]
      %v178 = vld [vmem:[%s0 + $0x10] sm:$0xff]
      %v179 = vld [vmem:[%s0 + $0x18] sm:$0xff]
      %v180 = vld [vmem:[%s0 + $0x20] sm:$0xff]
      %v181 = vld [vmem:[%s0 + $0x28] sm:$0xff]
      %v182 = vld [vmem:[%s0 + $0x30] sm:$0xff]
      %v183 = vld [vmem:[%s0 + $0x38] sm:$0xff]
      %v184 = vld [vmem:[%s166] sm:$0xf]
      %v185 = vld [vmem:[%s166 + $0x4] sm:$0xf]
      %v186 = vld [vmem:[%s166 + $0x8] sm:$0xf]
      %v187 = vld [vmem:[%s166 + $0xc] sm:$0xf]
      %v188 = vld [vmem:[%s166 + $0x10] sm:$0xf]
      %v189 = vld [vmem:[%s166 + $0x14] sm:$0xf]
      %v190 = vld [vmem:[%s166 + $0x18] sm:$0xf]
      %v191 = vld [vmem:[%s166 + $0x1c] sm:$0xf]
      %v192 = vld [vmem:[%s166 + $0x20] sm:$0xf]
      %v193 = vld [vmem:[%s166 + $0x24] sm:$0xf]
      %v194 = vld [vmem:[%s166 + $0x28] sm:$0xf]
      %v195 = vld [vmem:[%s166 + $0x2c] sm:$0xf]
      %v196 = vld [vmem:[%s166 + $0x30] sm:$0xf]
      %v197 = vld [vmem:[%s166 + $0x34] sm:$0xf]
      %v198 = vld [vmem:[%s166 + $0x38] sm:$0xf]
      %v199 = vld [vmem:[%s166 + $0x3c] sm:$0xf]
      %v200 = vld [vmem:[%s166 + $0x40] sm:$0xf]
      %v201 = vld [vmem:[%s166 + $0x44] sm:$0xf]
      %v210 = vunpack.c.l.b16 %v176
      %v211 = vunpack.c.h.b16 %v176
      %v212 = vunpack.c.l.b16 %v177
      %v213 = vunpack.c.h.b16 %v177
      %v214 = vunpack.c.l.b16 %v178
      %v215 = vunpack.c.h.b16 %v178
      %v216 = vunpack.c.l.b16 %v179
      %v217 = vunpack.c.h.b16 %v179
      %v218 = vunpack.c.l.b16 %v180
      %v219 = vunpack.c.h.b16 %v180
      %v220 = vunpack.c.l.b16 %v181
      %v221 = vunpack.c.h.b16 %v181
      %v222 = vunpack.c.l.b16 %v182
      %v223 = vunpack.c.h.b16 %v182
      %v224 = vunpack.c.l.b16 %v183
      %v225 = vunpack.c.h.b16 %v183
      %v226 = vpack.c.b16 %v212, %v210
      %v227 = vpack.c.b16 %v213, %v211
      %v228 = vpack.c.b16 %v216, %v214
      %v229 = vpack.c.b16 %v217, %v215
      %v230 = vpack.c.b16 %v220, %v218
      %v231 = vpack.c.b16 %v221, %v219
      %v232 = vpack.c.b16 %v224, %v222
      %v233 = vpack.c.b16 %v225, %v223
      %v256 = vunpack.c.l.b16 %v184
      %v257 = vunpack.c.l.b16 %v185
      %v258 = vunpack.c.l.b16 %v186
      %v259 = vunpack.c.l.b16 %v187
      %v260 = vunpack.c.l.b16 %v188
      %v261 = vunpack.c.l.b16 %v189
      %v262 = vunpack.c.l.b16 %v190
      %v263 = vunpack.c.l.b16 %v191
      %v264 = vunpack.c.l.b16 %v192
      %v265 = vunpack.c.l.b16 %v193
      %v266 = vunpack.c.l.b16 %v194
      %v267 = vunpack.c.l.b16 %v195
      %v268 = vunpack.c.l.b16 %v196
      %v269 = vunpack.c.l.b16 %v197
      %v270 = vunpack.c.l.b16 %v198
      %v271 = vunpack.c.l.b16 %v199
      %v272 = vunpack.c.l.b16 %v200
      %v273 = vunpack.c.l.b16 %v201
      %v274 = vpack.c.b16 %v257, %v256
      %v275 = vpack.c.b16 %v259, %v258
      %v276 = vpack.c.b16 %v261, %v260
      %v277 = vpack.c.b16 %v263, %v262
      %v278 = vpack.c.b16 %v265, %v264
      %v279 = vpack.c.b16 %v267, %v266
      %v280 = vpack.c.b16 %v269, %v268
      %v281 = vpack.c.b16 %v271, %v270
      %v282 = vpack.c.b16 %v273, %v272
      %vm292 = vcmask 130048
      %v294 = vsel %vm292, %v227, 0
      %v297 = vsel %vm292, %v229, 0
      %v300 = vsel %vm292, %v231, 0
      %v303 = vsel %vm292, %v233, 0
      %305 = vmatprep.subr.bf16.mxu0 0
      %306 = vmatpush1.bf16.msra.mxu0 %v274
      %307 = vmatprep.subr.bf16.mxu0 0
      %308 = vmatpush1.bf16.msra.mxu0 %v275
      %309 = vmatprep.subr.bf16.mxu0 0
      %310 = vmatpush1.bf16.msra.mxu0 %v276
      %311 = vmatprep.subr.bf16.mxu0 0
      %312 = vmatpush1.bf16.msra.mxu0 %v277
      %313 = vmatprep.subr.bf16.mxu0 0
      %314 = vmatpush1.bf16.msra.mxu0 %v278
      %315 = vmatprep.subr.bf16.mxu0 0
      %316 = vmatpush1.bf16.msra.mxu0 %v279
      %317 = vmatprep.subr.bf16.mxu0 0
      %318 = vmatpush1.bf16.msra.mxu0 %v280
      %319 = vmatprep.subr.bf16.mxu0 0
      %320 = vmatpush1.bf16.msra.mxu0 %v281
      %321 = vmatprep.subr.bf16.mxu0 0
      %322 = vmatpush1.bf16.msra.mxu0 %v282
      %323 = vmatprep.subr.bf16.mxu0 0
      %324 = vmatpush1.bf16.msra.mxu0 0
      %325 = vmatprep.subr.bf16.mxu0 0
      %326 = vmatpush1.bf16.msra.mxu0 0
      %327 = vmatprep.subr.bf16.mxu0 0
      %328 = vmatpush1.bf16.msra.mxu0 0
      %329 = vmatprep.subr.bf16.mxu0 0
      %330 = vmatpush1.bf16.msra.mxu0 0
      %331 = vmatprep.subr.bf16.mxu0 0
      %332 = vmatpush1.bf16.msra.mxu0 0
      %333 = vmatprep.subr.bf16.mxu0 0
      %334 = vmatpush1.bf16.msra.mxu0 0
      %335 = vmatprep.subr.bf16.mxu0 0
      %336 = vmatpush1.bf16.msra.mxu0 0
      %337 = vmatprep.mubr.bf16.mxu0 %v294
      %338 = vmatmul.mubr.bf16.gmra.mrb[0].mxu0 %v226
      %v339 = vpop.f32.mrb[0].mxu0
      %v340 = vadd.f32 0.0, %v339
      %v341 = vpop.f32.mrb[0].mxu0
      %v342 = vpop.f32.mrb[0].mxu0
      %v343 = vadd.f32 0.0, %v342
      %v344 = vpop.f32.mrb[0].mxu0
      %345 = vmatprep.mubr.bf16.mxu0 %v297
      %346 = vmatmul.mubr.bf16.gmra.mrb[0].mxu0 %v228
      %v347 = vpop.f32.mrb[0].mxu0
      %v348 = vadd.f32 0.0, %v347
      %v349 = vpop.f32.mrb[0].mxu0
      %v350 = vpop.f32.mrb[0].mxu0
      %v351 = vadd.f32 0.0, %v350
      %v352 = vpop.f32.mrb[0].mxu0
      %353 = vmatprep.mubr.bf16.mxu0 %v300
      %354 = vmatmul.mubr.bf16.gmra.mrb[0].mxu0 %v230
      %v355 = vpop.f32.mrb[0].mxu0
      %v356 = vadd.f32 0.0, %v355
      %v357 = vpop.f32.mrb[0].mxu0
      %v358 = vpop.f32.mrb[0].mxu0
      %v359 = vadd.f32 0.0, %v358
      %v360 = vpop.f32.mrb[0].mxu0
      %361 = vmatprep.mubr.bf16.mxu0 %v303
      %362 = vmatmul.mubr.bf16.gmra.mrb[0].mxu0 %v232
      %v363 = vpop.f32.mrb[0].mxu0
      %v364 = vadd.f32 0.0, %v363
      %v365 = vpop.f32.mrb[0].mxu0
      %v366 = vpop.f32.mrb[0].mxu0
      %v367 = vadd.f32 0.0, %v366
      %v368 = vpop.f32.mrb[0].mxu0
      %369 = vdwg.mxu0
      %vm370 = vcmp.ge.f32.partialorder %v340, 0.0
      %vm371 = vcmp.ge.f32.partialorder %v343, 0.0
      %vm372 = vcmp.ge.f32.partialorder %v348, 0.0
      %vm373 = vcmp.ge.f32.partialorder %v351, 0.0
      %vm374 = vcmp.ge.f32.partialorder %v356, 0.0
      %vm375 = vcmp.ge.f32.partialorder %v359, 0.0
      %vm376 = vcmp.ge.f32.partialorder %v364, 0.0
      %vm377 = vcmp.ge.f32.partialorder %v367, 0.0
      %v378 = vmul.f32 %v340, 0.2
      %v379 = vmul.f32 %v343, 0.2
      %v380 = vmul.f32 %v348, 0.2
      %v381 = vmul.f32 %v351, 0.2
      %v382 = vmul.f32 %v356, 0.2
      %v383 = vmul.f32 %v359, 0.2
      %v384 = vmul.f32 %v364, 0.2
      %v385 = vmul.f32 %v367, 0.2
      %v386 = vsel %vm370, %v340, %v378
      %v387 = vsel %vm371, %v343, %v379
      %v388 = vsel %vm372, %v348, %v380
      %v389 = vsel %vm373, %v351, %v381
      %v390 = vsel %vm374, %v356, %v382
      %v391 = vsel %vm375, %v359, %v383
      %v392 = vsel %vm376, %v364, %v384
      %v393 = vsel %vm377, %v367, %v385
      %vm394 = vcmask 523264
      %395 = vst.msk [vmem:[%s174] sm:$0xff] %vm394, %v386
      %396 = vst.msk [vmem:[%s174 + $0x8] sm:$0xff] %vm394, %v387
      %397 = vst.msk [vmem:[%s174 + $0x10] sm:$0xff] %vm394, %v388
      %398 = vst.msk [vmem:[%s174 + $0x18] sm:$0xff] %vm394, %v389
      %399 = vst.msk [vmem:[%s174 + $0x20] sm:$0xff] %vm394, %v390
      %400 = vst.msk [vmem:[%s174 + $0x28] sm:$0xff] %vm394, %v391
      %401 = vst.msk [vmem:[%s174 + $0x30] sm:$0xff] %vm394, %v392
      %402 = vst.msk [vmem:[%s174 + $0x38] sm:$0xff] %vm394, %v393
      %p403 = scmp.lt.s32.totalorder %s17, 1
      %s404 = scalar_select %p403, %s17, 1
      %p405 = scmp.lt.s32.totalorder %s18, 0
      %s406 = scalar_select %p405, %s18, 0
      %s407 = smul.addr %s404, 8
      %s408 = sadd.s32 %s406, %s407
      %s409 = smul.addr %s408, 8
      %s410 = scalar_lea.vmem %s2, %s409
      // Predicated region
      $region29: #{_lambda_.11} parent=27 // pred_check
        %p411 = pneg %p94
      $region30: #{_lambda_.11} parent=27 // pred_check_branch
        %413 = sbr.rel (%p411) target = $region32
      $region31: #{_lambda_.11} parent=27 // pred_region
        _
      $region32: #{_lambda_.11} parent=27 // pred_fallthru
        _
    $region28: #{_lambda_.11} parent=5 // pred_fallthru
      _
    %p414 = scmp.le.s32.totalorder 2, %s8
    // Predicated region
    $region33: #{_lambda_.11} parent=5 // pred_check
      %p415 = pneg %p414
    $region34: #{_lambda_.11} parent=5 // pred_check_branch
      %417 = sbr.rel (%p415) target = $region36
    $region35: #{_lambda_.11} parent=5 // pred_region
      %s418 = ssub.s32 %s8, 2
      // Predicated region
      $region37: #{_lambda_.11} parent=35 // pred_check
        %p419 = pneg %p100
      $region38: #{_lambda_.11} parent=35 // pred_check_branch
        %421 = sbr.rel (%p419) target = $region40
      $region39: #{_lambda_.11} parent=35 // pred_region
        %p422 = scmp.lt.s32.totalorder %s19, 1
        %s423 = scalar_select %p422, %s19, 1
        %p424 = scmp.lt.s32.totalorder %s20, 0
        %s425 = scalar_select %p424, %s20, 0
        %s426 = smul.addr %s423, 8
        %s427 = sadd.s32 %s425, %s426
        %s428 = smul.addr %s427, 8
        %s429 = scalar_lea.vmem %s2, %s428
      $region40: #{_lambda_.11} parent=35 // pred_fallthru
        _
    $region36: #{_lambda_.11} parent=5 // pred_fallthru
      _
  $region6: #{_lambda_.11} parent=0 // loop_footer
    %s12 = sadd.s32 1, %s8
  $region7: #{_lambda_.11} parent=0 // loop_footer_branch
    %7 = sbr.rel target = $region3
  $region8: #{_lambda_.11} parent=0 // loop_exit
    _

// kernel: _lambda_.12
$region0: #{_lambda_.12}
  #allocation0 [shape = 'u32[]', space=smem, size = 0x4, offset = 0x4, fixed_abs, tag = 'smem constant byte address 0x4 - core index']
  #allocation1 [shape = 'u32[144,128]{1,0:T(1,128)}', space=vmem, size = 0x12000, scoped, tag = 'internal scratch']
  %s0 = inlined_call_operand.vmem [shape: bf16[32,144], index: 0, kind: input, shape index: {}]
  %s1 = inlined_call_operand.vmem [shape: bf16[2,144,256], index: 1, kind: input, shape index: {}]
  %s2 = inlined_call_operand.vmem [shape: f32[2,32,256], index: 2, kind: output, shape index: {}]
  %s3 = sld [smem:[#allocation0]]
  $region41: #{_lambda_.12} parent=0
    _
  %s5 = ssub.s32 1, %s3
  %s6 = scalar_select 0, %s5, %s3
  loop: start=0, step=1, limit=4
  $region2: #{_lambda_.12} parent=0 // loop_pre_header
    _
  $region3: #{_lambda_.12} parent=0 // loop_header
    %s8 = sphi 0, %s12
    %p9 = scmp.ge.s32.totalorder %s8, 4
    %s15 = sphi 0, %s27
    %s16 = sphi 0, %s23
    %s17 = sphi 0, %s15
    %s18 = sphi 0, %s16
    %s19 = sphi 0, %s17
    %s20 = sphi 0, %s18
    %s28 = sphi 0, %s28
    %s30 = sphi 0, %s28
    %s31 = sphi 0, %s30
    %s45 = sphi 0, %s31
    %s53 = sphi 0, %s55
    %s56 = sphi 0, %s53
    %s57 = sphi 0, %s56
    %s73 = sphi 0, %s57
    %s81 = sphi 0, %s83
    %s84 = sphi 0, %s81
    %s85 = sphi 0, %s84
    %s101 = sphi 0, %s85
  $region4: #{_lambda_.12} parent=0 // loop_header_branch
    %11 = sbr.rel (%p9) target = $region8
  $region5: #{_lambda_.12} parent=0 // loop_body
    %s13 = ssub.s32 %s8, 1
    %s14 = ssub.s32 %s8, 2
    %s21 = sadd.s32 1, %s16
    %p22 = scmp.ge.s32.totalorder %s21, 1
    %s23 = scalar_select %p22, 0, %s21
    %s24 = sadd.s32 1, %s15
    %s25 = scalar_select %p22, %s24, %s15
    %p26 = scmp.ge.s32.totalorder %s25, 2
    %s27 = scalar_select %p26, 0, %s25
    %s29 = sadd.s32 %s28, 1
    %p32 = scmp.eq.s32.totalorder %s8, 1
    %p33 = scmp.ne.s32.totalorder %s28, %s30
    %p34 = scmp.eq.s32.totalorder %s8, 0
    %p35 = por %p33, %p34
    %p36 = scmp.ne.s32.totalorder %s28, %s30
    %p37 = scmp.eq.s32.totalorder %s13, 1
    %p38 = por %p36, %p37
    %p39 = scmp.ne.s32.totalorder %s30, %s31
    %p40 = scmp.eq.s32.totalorder %s13, 0
    %p41 = por %p39, %p40
    %p42 = scmp.ne.s32.totalorder %s30, %s31
    %p43 = scmp.eq.s32.totalorder %s14, 1
    %p44 = por %p42, %p43
    %p46 = scmp.ne.s32.totalorder %s31, %s45
    %p47 = scmp.eq.s32.totalorder %s14, 0
    %p48 = por %p46, %p47
    %s49 = ssub.s32 %s15, %s27
    %s50 = ssub.s32 %s16, %s23
    %s51 = sor.u32 %s49, %s50
    %p52 = scmp.eq.s32.totalorder %s51, 0
    %s54 = sadd.s32 %s53, 1
    %s55 = scalar_select %p52, %s53, %s54
    %p58 = pneg %p52
    %p59 = scmp.eq.s32.totalorder %s8, 1
    %p60 = por %p58, %p59
    %p61 = scmp.ne.s32.totalorder %s53, %s56
    %p62 = scmp.eq.s32.totalorder %s8, 0
    %p63 = por %p61, %p62
    %p64 = scmp.ne.s32.totalorder %s53, %s56
    %p65 = scmp.eq.s32.totalorder %s13, 1
    %p66 = por %p64, %p65
    %p67 = scmp.ne.s32.totalorder %s56, %s57
    %p68 = scmp.eq.s32.totalorder %s13, 0
    %p69 = por %p67, %p68
    %p70 = scmp.ne.s32.totalorder %s56, %s57
    %p71 = scmp.eq.s32.totalorder %s14, 1
    %p72 = por %p70, %p71
    %p74 = scmp.ne.s32.totalorder %s57, %s73
    %p75 = scmp.eq.s32.totalorder %s14, 0
    %p76 = por %p74, %p75
    %s77 = ssub.s32 %s15, %s27
    %s78 = ssub.s32 %s16, %s23
    %s79 = sor.u32 %s77, %s78
    %p80 = scmp.eq.s32.totalorder %s79, 0
    %s82 = sadd.s32 %s81, 1
    %s83 = scalar_select %p80, %s81, %s82
    %p86 = pneg %p80
    %p87 = scmp.eq.s32.totalorder %s8, 1
    %p88 = por %p86, %p87
    %p89 = scmp.ne.s32.totalorder %s81, %s84
    %p90 = scmp.eq.s32.totalorder %s8, 0
    %p91 = por %p89, %p90
    %p92 = scmp.ne.s32.totalorder %s81, %s84
    %p93 = scmp.eq.s32.totalorder %s13, 1
    %p94 = por %p92, %p93
    %p95 = scmp.ne.s32.totalorder %s84, %s85
    %p96 = scmp.eq.s32.totalorder %s13, 0
    %p97 = por %p95, %p96
    %p98 = scmp.ne.s32.totalorder %s84, %s85
    %p99 = scmp.eq.s32.totalorder %s14, 1
    %p100 = por %p98, %p99
    %p102 = scmp.ne.s32.totalorder %s85, %s101
    %p103 = scmp.eq.s32.totalorder %s14, 0
    %p104 = por %p102, %p103
    %p105 = scmp.le.s32.totalorder 1, %s8
    %p106 = scmp.lt.s32.totalorder %s8, 3
    %p107 = pnand %p105, %p106
    %p108 = pneg %p107
    // Predicated region
    $region9: #{_lambda_.12} parent=5 // pred_check
      _
    $region10: #{_lambda_.12} parent=5 // pred_check_branch
      %110 = sbr.rel (%p107) target = $region12
    $region11: #{_lambda_.12} parent=5 // pred_region
      %s111 = ssub.s32 %s8, 1
      // Predicated region
      $region13: #{_lambda_.12} parent=11 // pred_check
        %p112 = pneg %p41
      $region14: #{_lambda_.12} parent=11 // pred_check_branch
        %114 = sbr.rel (%p112) target = $region16
      $region15: #{_lambda_.12} parent=11 // pred_region
        _
      $region16: #{_lambda_.12} parent=11 // pred_fallthru
        _
    $region12: #{_lambda_.12} parent=5 // pred_fallthru
      _
    %p115 = scmp.lt.s32.totalorder %s8, 2
    // Predicated region
    $region17: #{_lambda_.12} parent=5 // pred_check
      %p116 = pneg %p115
    $region18: #{_lambda_.12} parent=5 // pred_check_branch
      %118 = sbr.rel (%p116) target = $region20
    $region19: #{_lambda_.12} parent=5 // pred_region
      // Predicated region
      $region21: #{_lambda_.12} parent=19 // pred_check
        %p119 = pneg %p63
      $region22: #{_lambda_.12} parent=19 // pred_check_branch
        %121 = sbr.rel (%p119) target = $region24
      $region23: #{_lambda_.12} parent=19 // pred_region
        %s122 = smul.u32 2, %s16
        %p123 = scmp.lt.s32.totalorder %s15, 1
        %s124 = scalar_select %p123, %s15, 1
        %p125 = scmp.lt.s32.totalorder %s122, 1
        %s126 = scalar_select %p125, %s122, 1
        %s127 = smul.addr %s124, 36
        %s128 = sadd.s32 %s126, %s127
        %s129 = smul.addr %s128, 4
        %s130 = scalar_lea.vmem %s1, %s129
        %s131 = smul.u32 2, %s16
      $region24: #{_lambda_.12} parent=19 // pred_fallthru
        _
    $region20: #{_lambda_.12} parent=5 // pred_fallthru
      _
    %p132 = scmp.le.s32.totalorder 1, %s8
    %p133 = scmp.lt.s32.totalorder %s8, 3
    %p134 = pnand %p132, %p133
    %p135 = pneg %p134
    // Predicated region
    $region25: #{_lambda_.12} parent=5 // pred_check
      _
    $region26: #{_lambda_.12} parent=5 // pred_check_branch
      %137 = sbr.rel (%p134) target = $region28
    $region27: #{_lambda_.12} parent=5 // pred_region
      %s138 = ssub.s32 %s8, 1
      %p139 = pneg %p41
      %p140 = pneg %p38
      %s141 = smul.u32 2, %s18
      %p142 = scmp.lt.s32.totalorder %s17, 1
      %s143 = scalar_select %p142, %s17, 1
      %p144 = scmp.lt.s32.totalorder %s141, 1
      %s145 = scalar_select %p144, %s141, 1
      %s146 = smul.addr %s143, 36
      %s147 = sadd.s32 %s145, %s146
      %s148 = smul.addr %s147, 4
      %s149 = scalar_lea.vmem %s1, %s148
      %p150 = pneg %p69
      %p151 = pneg %p66
      %p152 = pneg %p97
      %p153 = pneg %p94
      %s154 = smul.u32 2, %s18
      %p155 = scmp.lt.s32.totalorder %s17, 1
      %s156 = scalar_select %p155, %s17, 1
      %p157 = scmp.lt.s32.totalorder %s154, 1
      %s158 = scalar_select %p157, %s154, 1
      %s159 = smul.addr %s156, 8
      %s160 = sadd.s32 %s158, %s159
      %s161 = smul.addr %s160, 8
      %s162 = scalar_lea.vmem %s2, %s161
      %s163 = smul.u32 2, %s18
      %p164 = scmp.lt.s32.totalorder %s17, 1
      %s165 = scalar_select %p164, %s17, 1
      %p166 = scmp.lt.s32.totalorder %s163, 1
      %s167 = scalar_select %p166, %s163, 1
      %s168 = smul.addr %s165, 36
      %s169 = sadd.s32 %s167, %s168
      %s170 = smul.addr %s169, 4
      %s171 = scalar_lea.vmem %s1, %s170
      %s172 = smul.u32 2, %s18
      %s173 = smul.u32 2, %s18
      %p174 = scmp.lt.s32.totalorder %s17, 1
      %s175 = scalar_select %p174, %s17, 1
      %p176 = scmp.lt.s32.totalorder %s173, 1
      %s177 = scalar_select %p176, %s173, 1
      %s178 = smul.addr %s175, 8
      %s179 = sadd.s32 %s177, %s178
      %s180 = smul.addr %s179, 8
      %s181 = scalar_lea.vmem %s2, %s180
      %s182 = smul.u32 2, %s18
      %v184 = vld [vmem:[%s0] sm:$0xff]
      %v185 = vld [vmem:[%s0 + $0x8] sm:$0xff]
      %v186 = vld [vmem:[%s0 + $0x10] sm:$0xff]
      %v187 = vld [vmem:[%s0 + $0x18] sm:$0xff]
      %v188 = vld [vmem:[%s171] sm:$0xff]
      %v189 = vld [vmem:[%s171 + $0x8] sm:$0xff]
      %v190 = vld [vmem:[%s171 + $0x10] sm:$0xff]
      %v191 = vld [vmem:[%s171 + $0x18] sm:$0xff]
      %v192 = vld [vmem:[%s171 + $0x20] sm:$0xff]
      %v193 = vld [vmem:[%s171 + $0x28] sm:$0xff]
      %v194 = vld [vmem:[%s171 + $0x30] sm:$0xff]
      %v195 = vld [vmem:[%s171 + $0x38] sm:$0xff]
      %v196 = vld [vmem:[%s171 + $0x40] sm:$0xff]
      %v197 = vld [vmem:[%s171 + $0x48] sm:$0xff]
      %v198 = vld [vmem:[%s171 + $0x50] sm:$0xff]
      %v199 = vld [vmem:[%s171 + $0x58] sm:$0xff]
      %v200 = vld [vmem:[%s171 + $0x60] sm:$0xff]
      %v201 = vld [vmem:[%s171 + $0x68] sm:$0xff]
      %v202 = vld [vmem:[%s171 + $0x70] sm:$0xff]
      %v203 = vld [vmem:[%s171 + $0x78] sm:$0xff]
      %v204 = vld [vmem:[%s171 + $0x80] sm:$0xff]
      %v205 = vld [vmem:[%s171 + $0x88] sm:$0xff]
      %v210 = vunpack.c.l.b16 %v184
      %v211 = vunpack.c.h.b16 %v184
      %v212 = vunpack.c.l.b16 %v185
      %v213 = vunpack.c.h.b16 %v185
      %v214 = vunpack.c.l.b16 %v186
      %v215 = vunpack.c.h.b16 %v186
      %v216 = vunpack.c.l.b16 %v187
      %v217 = vunpack.c.h.b16 %v187
      %v218 = vpack.c.b16 %v212, %v210
      %v219 = vpack.c.b16 %v213, %v211
      %v220 = vpack.c.b16 %v216, %v214
      %v221 = vpack.c.b16 %v217, %v215
      %v242 = vunpack.c.l.b16 %v188
      %v243 = vunpack.c.h.b16 %v188
      %v244 = vunpack.c.l.b16 %v189
      %v245 = vunpack.c.h.b16 %v189
      %v246 = vunpack.c.l.b16 %v190
      %v247 = vunpack.c.h.b16 %v190
      %v248 = vunpack.c.l.b16 %v191
      %v249 = vunpack.c.h.b16 %v191
      %v250 = vunpack.c.l.b16 %v192
      %v251 = vunpack.c.h.b16 %v192
      %v252 = vunpack.c.l.b16 %v193
      %v253 = vunpack.c.h.b16 %v193
      %v254 = vunpack.c.l.b16 %v194
      %v255 = vunpack.c.h.b16 %v194
      %v256 = vunpack.c.l.b16 %v195
      %v257 = vunpack.c.h.b16 %v195
      %v258 = vunpack.c.l.b16 %v196
      %v259 = vunpack.c.h.b16 %v196
      %v260 = vunpack.c.l.b16 %v197
      %v261 = vunpack.c.h.b16 %v197
      %v262 = vunpack.c.l.b16 %v198
      %v263 = vunpack.c.h.b16 %v198
      %v264 = vunpack.c.l.b16 %v199
      %v265 = vunpack.c.h.b16 %v199
      %v266 = vunpack.c.l.b16 %v200
      %v267 = vunpack.c.h.b16 %v200
      %v268 = vunpack.c.l.b16 %v201
      %v269 = vunpack.c.h.b16 %v201
      %v270 = vunpack.c.l.b16 %v202
      %v271 = vunpack.c.h.b16 %v202
      %v272 = vunpack.c.l.b16 %v203
      %v273 = vunpack.c.h.b16 %v203
      %v274 = vunpack.c.l.b16 %v204
      %v275 = vunpack.c.h.b16 %v204
      %v276 = vunpack.c.l.b16 %v205
      %v277 = vunpack.c.h.b16 %v205
      %v278 = vpack.c.b16 %v244, %v242
      %v279 = vpack.c.b16 %v245, %v243
      %v280 = vpack.c.b16 %v248, %v246
      %v281 = vpack.c.b16 %v249, %v247
      %v282 = vpack.c.b16 %v252, %v250
      %v283 = vpack.c.b16 %v253, %v251
      %v284 = vpack.c.b16 %v256, %v254
      %v285 = vpack.c.b16 %v257, %v255
      %v286 = vpack.c.b16 %v260, %v258
      %v287 = vpack.c.b16 %v261, %v259
      %v288 = vpack.c.b16 %v264, %v262
      %v289 = vpack.c.b16 %v265, %v263
      %v290 = vpack.c.b16 %v268, %v266
      %v291 = vpack.c.b16 %v269, %v267
      %v292 = vpack.c.b16 %v272, %v270
      %v293 = vpack.c.b16 %v273, %v271
      %v294 = vpack.c.b16 %v276, %v274
      %v295 = vpack.c.b16 %v277, %v275
      %vm314 = vcmask 130048
      %v316 = vsel %vm314, %v219, 0
      %v319 = vsel %vm314, %v221, 0
      %321 = vmatprep.subr.bf16.mxu0 %v279
      %322 = vmatpush1.bf16.msra.mxu0 %v278
      %323 = vmatprep.subr.bf16.mxu0 %v281
      %324 = vmatpush1.bf16.msra.mxu0 %v280
      %325 = vmatprep.subr.bf16.mxu0 %v283
      %326 = vmatpush1.bf16.msra.mxu0 %v282
      %327 = vmatprep.subr.bf16.mxu0 %v285
      %328 = vmatpush1.bf16.msra.mxu0 %v284
      %329 = vmatprep.subr.bf16.mxu0 %v287
      %330 = vmatpush1.bf16.msra.mxu0 %v286
      %331 = vmatprep.subr.bf16.mxu0 %v289
      %332 = vmatpush1.bf16.msra.mxu0 %v288
      %333 = vmatprep.subr.bf16.mxu0 %v291
      %334 = vmatpush1.bf16.msra.mxu0 %v290
      %335 = vmatprep.subr.bf16.mxu0 %v293
      %336 = vmatpush1.bf16.msra.mxu0 %v292
      %337 = vmatprep.subr.bf16.mxu0 %v295
      %338 = vmatpush1.bf16.msra.mxu0 %v294
      %339 = vmatprep.subr.bf16.mxu0 0
      %340 = vmatpush1.bf16.msra.mxu0 0
      %341 = vmatprep.subr.bf16.mxu0 0
      %342 = vmatpush1.bf16.msra.mxu0 0
      %343 = vmatprep.subr.bf16.mxu0 0
      %344 = vmatpush1.bf16.msra.mxu0 0
      %345 = vmatprep.subr.bf16.mxu0 0
      %346 = vmatpush1.bf16.msra.mxu0 0
      %347 = vmatprep.subr.bf16.mxu0 0
      %348 = vmatpush1.bf16.msra.mxu0 0
      %349 = vmatprep.subr.bf16.mxu0 0
      %350 = vmatpush1.bf16.msra.mxu0 0
      %351 = vmatprep.subr.bf16.mxu0 0
      %352 = vmatpush1.bf16.msra.mxu0 0
      %353 = vmatprep.mubr.bf16.mxu0 %v316
      %354 = vmatmul.mubr.bf16.gmra.mrb[0].mxu0 %v218
      %v355 = vpop.f32.mrb[0].mxu0
      %v356 = vadd.f32 0.0, %v355
      %v357 = vpop.f32.mrb[0].mxu0
      %v358 = vadd.f32 0.0, %v357
      %v359 = vpop.f32.mrb[0].mxu0
      %v360 = vadd.f32 0.0, %v359
      %v361 = vpop.f32.mrb[0].mxu0
      %v362 = vadd.f32 0.0, %v361
      %363 = vmatprep.mubr.bf16.mxu0 %v319
      %364 = vmatmul.mubr.bf16.gmra.mrb[0].mxu0 %v220
      %v365 = vpop.f32.mrb[0].mxu0
      %v366 = vadd.f32 0.0, %v365
      %v367 = vpop.f32.mrb[0].mxu0
      %v368 = vadd.f32 0.0, %v367
      %v369 = vpop.f32.mrb[0].mxu0
      %v370 = vadd.f32 0.0, %v369
      %v371 = vpop.f32.mrb[0].mxu0
      %v372 = vadd.f32 0.0, %v371
      %373 = vdwg.mxu0
      %vm374 = vcmp.ge.f32.partialorder %v356, 0.0
      %vm375 = vcmp.ge.f32.partialorder %v358, 0.0
      %vm376 = vcmp.ge.f32.partialorder %v360, 0.0
      %vm377 = vcmp.ge.f32.partialorder %v362, 0.0
      %vm378 = vcmp.ge.f32.partialorder %v366, 0.0
      %vm379 = vcmp.ge.f32.partialorder %v368, 0.0
      %vm380 = vcmp.ge.f32.partialorder %v370, 0.0
      %vm381 = vcmp.ge.f32.partialorder %v372, 0.0
      %v382 = vmul.f32 %v356, 0.2
      %v383 = vmul.f32 %v358, 0.2
      %v384 = vmul.f32 %v360, 0.2
      %v385 = vmul.f32 %v362, 0.2
      %v386 = vmul.f32 %v366, 0.2
      %v387 = vmul.f32 %v368, 0.2
      %v388 = vmul.f32 %v370, 0.2
      %v389 = vmul.f32 %v372, 0.2
      %v390 = vsel %vm374, %v356, %v382
      %v391 = vsel %vm375, %v358, %v383
      %v392 = vsel %vm376, %v360, %v384
      %v393 = vsel %vm377, %v362, %v385
      %v394 = vsel %vm378, %v366, %v386
      %v395 = vsel %vm379, %v368, %v387
      %v396 = vsel %vm380, %v370, %v388
      %v397 = vsel %vm381, %v372, %v389
      %398 = vst [vmem:[%s181] sm:$0xff] %v390
      %399 = vst [vmem:[%s181 + $0x8] sm:$0xff] %v391
      %400 = vst [vmem:[%s181 + $0x10] sm:$0xff] %v392
      %401 = vst [vmem:[%s181 + $0x18] sm:$0xff] %v393
      %402 = vst [vmem:[%s181 + $0x20] sm:$0xff] %v394
      %403 = vst [vmem:[%s181 + $0x28] sm:$0xff] %v395
      %404 = vst [vmem:[%s181 + $0x30] sm:$0xff] %v396
      %405 = vst [vmem:[%s181 + $0x38] sm:$0xff] %v397
      %s406 = smul.u32 2, %s18
      %p407 = scmp.lt.s32.totalorder %s17, 1
      %s408 = scalar_select %p407, %s17, 1
      %p409 = scmp.lt.s32.totalorder %s406, 1
      %s410 = scalar_select %p409, %s406, 1
      %s411 = smul.addr %s408, 8
      %s412 = sadd.s32 %s410, %s411
      %s413 = smul.addr %s412, 8
      %s414 = scalar_lea.vmem %s2, %s413
      // Predicated region
      $region29: #{_lambda_.12} parent=27 // pred_check
        %p415 = pneg %p94
      $region30: #{_lambda_.12} parent=27 // pred_check_branch
        %417 = sbr.rel (%p415) target = $region32
      $region31: #{_lambda_.12} parent=27 // pred_region
        %s418 = smul.u32 2, %s18
      $region32: #{_lambda_.12} parent=27 // pred_fallthru
        _
    $region28: #{_lambda_.12} parent=5 // pred_fallthru
      _
    %p419 = scmp.le.s32.totalorder 2, %s8
    // Predicated region
    $region33: #{_lambda_.12} parent=5 // pred_check
      %p420 = pneg %p419
    $region34: #{_lambda_.12} parent=5 // pred_check_branch
      %422 = sbr.rel (%p420) target = $region36
    $region35: #{_lambda_.12} parent=5 // pred_region
      %s423 = ssub.s32 %s8, 2
      // Predicated region
      $region37: #{_lambda_.12} parent=35 // pred_check
        %p424 = pneg %p100
      $region38: #{_lambda_.12} parent=35 // pred_check_branch
        %426 = sbr.rel (%p424) target = $region40
      $region39: #{_lambda_.12} parent=35 // pred_region
        %s427 = smul.u32 2, %s20
        %p428 = scmp.lt.s32.totalorder %s19, 1
        %s429 = scalar_select %p428, %s19, 1
        %p430 = scmp.lt.s32.totalorder %s427, 1
        %s431 = scalar_select %p430, %s427, 1
        %s432 = smul.addr %s429, 8
        %s433 = sadd.s32 %s431, %s432
        %s434 = smul.addr %s433, 8
        %s435 = scalar_lea.vmem %s2, %s434
      $region40: #{_lambda_.12} parent=35 // pred_fallthru
        _
    $region36: #{_lambda_.12} parent=5 // pred_fallthru
      _
  $region6: #{_lambda_.12} parent=0 // loop_footer
    %s12 = sadd.s32 1, %s8
  $region7: #{_lambda_.12} parent=0 // loop_footer_branch
    %7 = sbr.rel target = $region3
  $region8: #{_lambda_.12} parent=0 // loop_exit
    _

// kernel: _lambda_.13
$region0: #{_lambda_.13}
  #allocation0 [shape = 'u32[]', space=smem, size = 0x4, offset = 0x4, fixed_abs, tag = 'smem constant byte address 0x4 - core index']
  #allocation1 [shape = 'u32[144,128]{1,0:T(1,128)}', space=vmem, size = 0x12000, scoped, tag = 'internal scratch']
  %s0 = inlined_call_operand.vmem [shape: bf16[16,72], index: 0, kind: input, shape index: {}]
  %s1 = inlined_call_operand.vmem [shape: bf16[2,72,1024], index: 1, kind: input, shape index: {}]
  %s2 = inlined_call_operand.vmem [shape: f32[2,16,1024], index: 2, kind: output, shape index: {}]
  %s3 = sld [smem:[#allocation0]]
  $region83: #{_lambda_.13} parent=0
    _
  %s5 = ssub.s32 1, %s3
  %s6 = scalar_select 0, %s5, %s3
  $region1: #{_lambda_.13} parent=0
    #allocation2 [shape = 'u8[147456]{0}', space=vmem, size = 0x24000, scoped, tag = 'input window, operand 1']
    #allocation3 [shape = 'u8[65536]{0}', space=vmem, size = 0x10000, scoped, tag = 'output window, operand 0']
    loop: start=0, step=1, limit=6
    $region2: #{_lambda_.13} parent=1 // loop_pre_header
      _
    $region3: #{_lambda_.13} parent=1 // loop_header
      %s8 = sphi 0, %s12
      %p9 = scmp.ge.s32.totalorder %s8, 6
      %s15 = sphi 0, %s27
      %s16 = sphi 0, %s23
      %s17 = sphi 0, %s15
      %s18 = sphi 0, %s16
      %s19 = sphi 0, %s17
      %s20 = sphi 0, %s18
      %s28 = sphi 0, %s28
      %s30 = sphi 0, %s28
      %s31 = sphi 0, %s30
      %s45 = sphi 0, %s31
      %s53 = sphi 0, %s55
      %s56 = sphi 0, %s53
      %s57 = sphi 0, %s56
      %s73 = sphi 0, %s57
      %s81 = sphi 0, %s83
      %s84 = sphi 0, %s81
      %s85 = sphi 0, %s84
      %s101 = sphi 0, %s85
    $region4: #{_lambda_.13} parent=1 // loop_header_branch
      %11 = sbr.rel (%p9) target = $region8
    $region5: #{_lambda_.13} parent=1 // loop_body
      %s13 = ssub.s32 %s8, 1
      %s14 = ssub.s32 %s8, 2
      %s21 = sadd.s32 1, %s16
      %p22 = scmp.ge.s32.totalorder %s21, 2
      %s23 = scalar_select %p22, 0, %s21
      %s24 = sadd.s32 1, %s15
      %s25 = scalar_select %p22, %s24, %s15
      %p26 = scmp.ge.s32.totalorder %s25, 2
      %s27 = scalar_select %p26, 0, %s25
      %s29 = sadd.s32 %s28, 1
      %p32 = scmp.eq.s32.totalorder %s8, 3
      %p33 = scmp.ne.s32.totalorder %s28, %s30
      %p34 = scmp.eq.s32.totalorder %s8, 0
      %p35 = por %p33, %p34
      %p36 = scmp.ne.s32.totalorder %s28, %s30
      %p37 = scmp.eq.s32.totalorder %s13, 3
      %p38 = por %p36, %p37
      %p39 = scmp.ne.s32.totalorder %s30, %s31
      %p40 = scmp.eq.s32.totalorder %s13, 0
      %p41 = por %p39, %p40
      %p42 = scmp.ne.s32.totalorder %s30, %s31
      %p43 = scmp.eq.s32.totalorder %s14, 3
      %p44 = por %p42, %p43
      %p46 = scmp.ne.s32.totalorder %s31, %s45
      %p47 = scmp.eq.s32.totalorder %s14, 0
      %p48 = por %p46, %p47
      %s49 = ssub.s32 %s15, %s27
      %s50 = ssub.s32 %s16, %s23
      %s51 = sor.u32 %s49, %s50
      %p52 = scmp.eq.s32.totalorder %s51, 0
      %s54 = sadd.s32 %s53, 1
      %s55 = scalar_select %p52, %s53, %s54
      %p58 = pneg %p52
      %p59 = scmp.eq.s32.totalorder %s8, 3
      %p60 = por %p58, %p59
      %p61 = scmp.ne.s32.totalorder %s53, %s56
      %p62 = scmp.eq.s32.totalorder %s8, 0
      %p63 = por %p61, %p62
      %p64 = scmp.ne.s32.totalorder %s53, %s56
      %p65 = scmp.eq.s32.totalorder %s13, 3
      %p66 = por %p64, %p65
      %p67 = scmp.ne.s32.totalorder %s56, %s57
      %p68 = scmp.eq.s32.totalorder %s13, 0
      %p69 = por %p67, %p68
      %p70 = scmp.ne.s32.totalorder %s56, %s57
      %p71 = scmp.eq.s32.totalorder %s14, 3
      %p72 = por %p70, %p71
      %p74 = scmp.ne.s32.totalorder %s57, %s73
      %p75 = scmp.eq.s32.totalorder %s14, 0
      %p76 = por %p74, %p75
      %s77 = ssub.s32 %s15, %s27
      %s78 = ssub.s32 %s16, %s23
      %s79 = sor.u32 %s77, %s78
      %p80 = scmp.eq.s32.totalorder %s79, 0
      %s82 = sadd.s32 %s81, 1
      %s83 = scalar_select %p80, %s81, %s82
      %p86 = pneg %p80
      %p87 = scmp.eq.s32.totalorder %s8, 3
      %p88 = por %p86, %p87
      %p89 = scmp.ne.s32.totalorder %s81, %s84
      %p90 = scmp.eq.s32.totalorder %s8, 0
      %p91 = por %p89, %p90
      %p92 = scmp.ne.s32.totalorder %s81, %s84
      %p93 = scmp.eq.s32.totalorder %s13, 3
      %p94 = por %p92, %p93
      %p95 = scmp.ne.s32.totalorder %s84, %s85
      %p96 = scmp.eq.s32.totalorder %s13, 0
      %p97 = por %p95, %p96
      %p98 = scmp.ne.s32.totalorder %s84, %s85
      %p99 = scmp.eq.s32.totalorder %s14, 3
      %p100 = por %p98, %p99
      %p102 = scmp.ne.s32.totalorder %s85, %s101
      %p103 = scmp.eq.s32.totalorder %s14, 0
      %p104 = por %p102, %p103
      %p105 = scmp.le.s32.totalorder 1, %s8
      %p106 = scmp.lt.s32.totalorder %s8, 5
      %p107 = pnand %p105, %p106
      %p108 = pneg %p107
      // Predicated region
      $region9: #{_lambda_.13} parent=5 // pred_check
        _
      $region10: #{_lambda_.13} parent=5 // pred_check_branch
        %110 = sbr.rel (%p107) target = $region12
      $region11: #{_lambda_.13} parent=5 // pred_region
        %s111 = ssub.s32 %s8, 1
        // Predicated region
        $region13: #{_lambda_.13} parent=11 // pred_check
          %p112 = pneg %p41
        $region14: #{_lambda_.13} parent=11 // pred_check_branch
          %114 = sbr.rel (%p112) target = $region16
        $region15: #{_lambda_.13} parent=11 // pred_region
          _
        $region16: #{_lambda_.13} parent=11 // pred_fallthru
          _
      $region12: #{_lambda_.13} parent=5 // pred_fallthru
        _
      %p115 = scmp.lt.s32.totalorder %s8, 4
      // Predicated region
      $region17: #{_lambda_.13} parent=5 // pred_check
        %p116 = pneg %p115
      $region18: #{_lambda_.13} parent=5 // pred_check_branch
        %118 = sbr.rel (%p116) target = $region20
      $region19: #{_lambda_.13} parent=5 // pred_region
        // Predicated region
        $region21: #{_lambda_.13} parent=19 // pred_check
          %p119 = pneg %p63
        $region22: #{_lambda_.13} parent=19 // pred_check_branch
          %121 = sbr.rel (%p119) target = $region24
        $region23: #{_lambda_.13} parent=19 // pred_region
          %s122 = sand.u32 %s53, 1
          %s123 = sand.u32 %s53, 1
          %s124 = smul.addr %s123, 144
          %s125 = scalar_lea.vmem [#allocation2], %s124
          %s126 = smul.u32 4, %s16
          %s127 = smul.addr %s15, 72
          %s128 = sadd.s32 %s126, %s127
          %s129 = smul.addr %s128, 4
          %s130 = scalar_lea.vmem %s1, %s129
          // Predicated region
          $region25: #{_lambda_.13} parent=23 // pred_check
            _
          $region26: #{_lambda_.13} parent=23 // pred_check_branch
            %132 = sbr.rel (0) target = $region28
          $region27: #{_lambda_.13} parent=23 // pred_region
            // Predicated region
            $region29: #{_lambda_.13} parent=27 // pred_check
              _
            $region30: #{_lambda_.13} parent=27 // pred_check_branch
              %134 = sbr.rel (0) target = $region32
            $region31: #{_lambda_.13} parent=27 // pred_region
              loop: start=0, step=1, limit=1
              $region33: #{_lambda_.13} parent=31 // loop_pre_header
                _
              $region34: #{_lambda_.13} parent=31 // loop_header
                %s136 = sphi 0, %s140
                %p137 = scmp.ge.s32.totalorder %s136, 1
                %s141 = sphi %s130, %s130
                %s142 = sphi %s125, %s125
              $region35: #{_lambda_.13} parent=31 // loop_header_branch
                %139 = sbr.rel (%p137) target = $region39
              $region36: #{_lambda_.13} parent=31 // loop_body
                %v143 = vld [vmem:[%s141] sm:$0xff]
                %144 = vst [vmem:[%s142] sm:$0xff] %v143
                %v145 = vld [vmem:[%s141 + $0x8] sm:$0xff]
                %146 = vst [vmem:[%s142 + $0x8] sm:$0xff] %v145
                %v147 = vld [vmem:[%s141 + $0x20] sm:$0xff]
                %148 = vst [vmem:[%s142 + $0x10] sm:$0xff] %v147
                %v149 = vld [vmem:[%s141 + $0x28] sm:$0xff]
                %150 = vst [vmem:[%s142 + $0x18] sm:$0xff] %v149
                %v151 = vld [vmem:[%s141 + $0x40] sm:$0xff]
                %152 = vst [vmem:[%s142 + $0x20] sm:$0xff] %v151
                %v153 = vld [vmem:[%s141 + $0x48] sm:$0xff]
                %154 = vst [vmem:[%s142 + $0x28] sm:$0xff] %v153
                %v155 = vld [vmem:[%s141 + $0x60] sm:$0xff]
                %156 = vst [vmem:[%s142 + $0x30] sm:$0xff] %v155
                %v157 = vld [vmem:[%s141 + $0x68] sm:$0xff]
                %158 = vst [vmem:[%s142 + $0x38] sm:$0xff] %v157
                %v159 = vld [vmem:[%s141 + $0x80] sm:$0xff]
                %160 = vst [vmem:[%s142 + $0x40] sm:$0xff] %v159
                %v161 = vld [vmem:[%s141 + $0x88] sm:$0xff]
                %162 = vst [vmem:[%s142 + $0x48] sm:$0xff] %v161
                %v163 = vld [vmem:[%s141 + $0xa0] sm:$0xff]
                %164 = vst [vmem:[%s142 + $0x50] sm:$0xff] %v163
                %v165 = vld [vmem:[%s141 + $0xa8] sm:$0xff]
                %166 = vst [vmem:[%s142 + $0x58] sm:$0xff] %v165
                %v167 = vld [vmem:[%s141 + $0xc0] sm:$0xff]
                %168 = vst [vmem:[%s142 + $0x60] sm:$0xff] %v167
                %v169 = vld [vmem:[%s141 + $0xc8] sm:$0xff]
                %170 = vst [vmem:[%s142 + $0x68] sm:$0xff] %v169
                %v171 = vld [vmem:[%s141 + $0xe0] sm:$0xff]
                %172 = vst [vmem:[%s142 + $0x70] sm:$0xff] %v171
                %v173 = vld [vmem:[%s141 + $0xe8] sm:$0xff]
                %174 = vst [vmem:[%s142 + $0x78] sm:$0xff] %v173
                %v175 = vld [vmem:[%s141 + $0x100] sm:$0xff]
                %176 = vst [vmem:[%s142 + $0x80] sm:$0xff] %v175
                %v177 = vld [vmem:[%s141 + $0x108] sm:$0xff]
                %178 = vst [vmem:[%s142 + $0x88] sm:$0xff] %v177
              $region37: #{_lambda_.13} parent=31 // loop_footer
                %s140 = sadd.s32 1, %s136
              $region38: #{_lambda_.13} parent=31 // loop_footer_branch
                %135 = sbr.rel target = $region34
              $region39: #{_lambda_.13} parent=31 // loop_exit
                _
            $region32: #{_lambda_.13} parent=27 // pred_fallthru
              _
            // Predicated region
            $region40: #{_lambda_.13} parent=27 // pred_check
              _
            $region41: #{_lambda_.13} parent=27 // pred_check_branch
              %180 = sbr.rel target = $region43
            $region42: #{_lambda_.13} parent=27 // pred_region
              _
            $region43: #{_lambda_.13} parent=27 // pred_fallthru
              _
          $region28: #{_lambda_.13} parent=23 // pred_fallthru
            _
          %181 = vnop
        $region24: #{_lambda_.13} parent=19 // pred_fallthru
          _
      $region20: #{_lambda_.13} parent=5 // pred_fallthru
        _
      %p182 = scmp.le.s32.totalorder 1, %s8
      %p183 = scmp.lt.s32.totalorder %s8, 5
      %p184 = pnand %p182, %p183
      %p185 = pneg %p184
      // Predicated region
      $region44: #{_lambda_.13} parent=5 // pred_check
        _
      $region45: #{_lambda_.13} parent=5 // pred_check_branch
        %187 = sbr.rel (%p184) target = $region47
      $region46: #{_lambda_.13} parent=5 // pred_region
        %s188 = ssub.s32 %s8, 1
        %s189 = sand.u32 %s56, 1
        %s190 = sand.u32 %s56, 1
        %s191 = smul.addr %s190, 144
        %s192 = scalar_lea.vmem [#allocation2], %s191
        // Predicated region
        $region48: #{_lambda_.13} parent=46 // pred_check
          %p193 = pneg %p69
        $region49: #{_lambda_.13} parent=46 // pred_check_branch
          %195 = sbr.rel (%p193) target = $region51
        $region50: #{_lambda_.13} parent=46 // pred_region
          _
        $region51: #{_lambda_.13} parent=46 // pred_fallthru
          _
        %p196 = pneg %p41
        %p197 = pneg %p38
        %s198 = sand.u32 %s56, 1
        %s199 = sand.u32 %s56, 1
        %s200 = smul.addr %s199, 144
        %s201 = scalar_lea.vmem [#allocation2], %s200
        %p202 = pneg %p69
        %p203 = pneg %p66
        %p204 = pneg %p97
        %p205 = pneg %p94
        %s206 = sand.u32 %s84, 1
        %s207 = sand.u32 %s84, 1
        %s208 = smul.addr %s207, 64
        %s209 = scalar_lea.vmem [#allocation3], %s208
        %s210 = smul.u32 4, %s18
        %s211 = smul.u32 4, %s18
        %v213 = vld [vmem:[%s0] sm:$0xf]
        %v214 = vld [vmem:[%s0 + $0x4] sm:$0xf]
        %v215 = vld [vmem:[%s192] sm:$0xff]
        %v216 = vld [vmem:[%s192 + $0x8] sm:$0xff]
        %v217 = vld [vmem:[%s192 + $0x10] sm:$0xff]
        %v218 = vld [vmem:[%s192 + $0x18] sm:$0xff]
        %v219 = vld [vmem:[%s192 + $0x20] sm:$0xff]
        %v220 = vld [vmem:[%s192 + $0x28] sm:$0xff]
        %v221 = vld [vmem:[%s192 + $0x30] sm:$0xff]
        %v222 = vld [vmem:[%s192 + $0x38] sm:$0xff]
        %v223 = vld [vmem:[%s192 + $0x40] sm:$0xff]
        %v224 = vld [vmem:[%s192 + $0x48] sm:$0xff]
        %v225 = vld [vmem:[%s192 + $0x50] sm:$0xff]
        %v226 = vld [vmem:[%s192 + $0x58] sm:$0xff]
        %v227 = vld [vmem:[%s192 + $0x60] sm:$0xff]
        %v228 = vld [vmem:[%s192 + $0x68] sm:$0xff]
        %v229 = vld [vmem:[%s192 + $0x70] sm:$0xff]
        %v230 = vld [vmem:[%s192 + $0x78] sm:$0xff]
        %v231 = vld [vmem:[%s192 + $0x80] sm:$0xff]
        %v232 = vld [vmem:[%s192 + $0x88] sm:$0xff]
        %v235 = vunpack.c.l.b16 %v213
        %v236 = vunpack.c.l.b16 %v214
        %v237 = vpack.c.b16 %v236, %v235
        %v256 = vunpack.c.l.b16 %v215
        %v257 = vunpack.c.h.b16 %v215
        %v258 = vunpack.c.l.b16 %v216
        %v259 = vunpack.c.h.b16 %v216
        %v260 = vunpack.c.l.b16 %v217
        %v261 = vunpack.c.h.b16 %v217
        %v262 = vunpack.c.l.b16 %v218
        %v263 = vunpack.c.h.b16 %v218
        %v264 = vunpack.c.l.b16 %v219
        %v265 = vunpack.c.h.b16 %v219
        %v266 = vunpack.c.l.b16 %v220
        %v267 = vunpack.c.h.b16 %v220
        %v268 = vunpack.c.l.b16 %v221
        %v269 = vunpack.c.h.b16 %v221
        %v270 = vunpack.c.l.b16 %v222
        %v271 = vunpack.c.h.b16 %v222
        %v272 = vunpack.c.l.b16 %v223
        %v273 = vunpack.c.h.b16 %v223
        %v274 = vunpack.c.l.b16 %v224
        %v275 = vunpack.c.h.b16 %v224
        %v276 = vunpack.c.l.b16 %v225
        %v277 = vunpack.c.h.b16 %v225
        %v278 = vunpack.c.l.b16 %v226
        %v279 = vunpack.c.h.b16 %v226
        %v280 = vunpack.c.l.b16 %v227
        %v281 = vunpack.c.h.b16 %v227
        %v282 = vunpack.c.l.b16 %v228
        %v283 = vunpack.c.h.b16 %v228
        %v284 = vunpack.c.l.b16 %v229
        %v285 = vunpack.c.h.b16 %v229
        %v286 = vunpack.c.l.b16 %v230
        %v287 = vunpack.c.h.b16 %v230
        %v288 = vunpack.c.l.b16 %v231
        %v289 = vunpack.c.h.b16 %v231
        %v290 = vunpack.c.l.b16 %v232
        %v291 = vunpack.c.h.b16 %v232
        %v292 = vpack.c.b16 %v260, %v256
        %v293 = vpack.c.b16 %v261, %v257
        %v294 = vpack.c.b16 %v262, %v258
        %v295 = vpack.c.b16 %v263, %v259
        %v296 = vpack.c.b16 %v268, %v264
        %v297 = vpack.c.b16 %v269, %v265
        %v298 = vpack.c.b16 %v270, %v266
        %v299 = vpack.c.b16 %v271, %v267
        %v300 = vpack.c.b16 %v276, %v272
        %v301 = vpack.c.b16 %v277, %v273
        %v302 = vpack.c.b16 %v278, %v274
        %v303 = vpack.c.b16 %v279, %v275
        %v304 = vpack.c.b16 %v284, %v280
        %v305 = vpack.c.b16 %v285, %v281
        %v306 = vpack.c.b16 %v286, %v282
        %v307 = vpack.c.b16 %v287, %v283
        %v308 = vpack.c.b16 %v288, %v288
        %v309 = vpack.c.b16 %v289, %v289
        %v310 = vpack.c.b16 %v290, %v290
        %v311 = vpack.c.b16 %v291, %v291
        %vm328 = vcmask 588800
        %v330 = vsel %vm328, %v237, 0
        %vm332 = vcmask 1043456
        %v334 = vsel %vm332, %v308, 0
        %v337 = vsel %vm332, %v309, 0
        %v340 = vsel %vm332, %v310, 0
        %v343 = vsel %vm332, %v311, 0
        %345 = vmatprep.subr.bf16.mxu0 %v293
        %346 = vmatpush1.bf16.msra.mxu0 %v292
        %347 = vmatprep.subr.bf16.mxu0 %v297
        %348 = vmatpush1.bf16.msra.mxu0 %v296
        %349 = vmatprep.subr.bf16.mxu0 %v301
        %350 = vmatpush1.bf16.msra.mxu0 %v300
        %351 = vmatprep.subr.bf16.mxu0 %v305
        %352 = vmatpush1.bf16.msra.mxu0 %v304
        %353 = vmatprep.subr.bf16.mxu0 %v337
        %354 = vmatpush1.bf16.msra.mxu0 %v334
        %355 = vmatprep.subr.bf16.mxu0 0
        %356 = vmatpush1.bf16.msra.mxu0 0
        %357 = vmatprep.subr.bf16.mxu0 0
        %358 = vmatpush1.bf16.msra.mxu0 0
        %359 = vmatprep.subr.bf16.mxu0 0
        %360 = vmatpush1.bf16.msra.mxu0 0
        %361 = vmatprep.subr.bf16.mxu0 0
        %362 = vmatpush1.bf16.msra.mxu0 0
        %363 = vmatprep.subr.bf16.mxu0 0
        %364 = vmatpush1.bf16.msra.mxu0 0
        %365 = vmatprep.subr.bf16.mxu0 0
        %366 = vmatpush1.bf16.msra.mxu0 0
        %367 = vmatprep.subr.bf16.mxu0 0
        %368 = vmatpush1.bf16.msra.mxu0 0
        %369 = vmatprep.subr.bf16.mxu0 0
        %370 = vmatpush1.bf16.msra.mxu0 0
        %371 = vmatprep.subr.bf16.mxu0 0
        %372 = vmatpush1.bf16.msra.mxu0 0
        %373 = vmatprep.subr.bf16.mxu0 0
        %374 = vmatpush1.bf16.msra.mxu0 0
        %375 = vmatprep.subr.bf16.mxu0 0
        %376 = vmatpush1.bf16.msra.mxu0 0
        %377 = vmatprep.mubr.bf16.mxu0 0
        %378 = vmatmul.mubr.bf16.gmra.mrb[0].mxu0 %v330
        %v379 = vpop.f32.mrb[0].mxu0
        %v380 = vadd.f32 0.0, %v379
        %v381 = vpop.f32.mrb[0].mxu0
        %v382 = vadd.f32 0.0, %v381
        %v383 = vpop.f32.mrb[0].mxu0
        %v384 = vadd.f32 0.0, %v383
        %v385 = vpop.f32.mrb[0].mxu0
        %v386 = vadd.f32 0.0, %v385
        %387 = vdwg.mxu0
        %388 = vmatprep.subr.bf16.mxu0 %v295
        %389 = vmatpush1.bf16.msra.mxu0 %v294
        %390 = vmatprep.subr.bf16.mxu0 %v299
        %391 = vmatpush1.bf16.msra.mxu0 %v298
        %392 = vmatprep.subr.bf16.mxu0 %v303
        %393 = vmatpush1.bf16.msra.mxu0 %v302
        %394 = vmatprep.subr.bf16.mxu0 %v307
        %395 = vmatpush1.bf16.msra.mxu0 %v306
        %396 = vmatprep.subr.bf16.mxu0 %v343
        %397 = vmatpush1.bf16.msra.mxu0 %v340
        %398 = vmatprep.subr.bf16.mxu0 0
        %399 = vmatpush1.bf16.msra.mxu0 0
        %400 = vmatprep.subr.bf16.mxu0 0
        %401 = vmatpush1.bf16.msra.mxu0 0
        %402 = vmatprep.subr.bf16.mxu0 0
        %403 = vmatpush1.bf16.msra.mxu0 0
        %404 = vmatprep.subr.bf16.mxu0 0
        %405 = vmatpush1.bf16.msra.mxu0 0
        %406 = vmatprep.subr.bf16.mxu0 0
        %407 = vmatpush1.bf16.msra.mxu0 0
        %408 = vmatprep.subr.bf16.mxu0 0
        %409 = vmatpush1.bf16.msra.mxu0 0
        %410 = vmatprep.subr.bf16.mxu0 0
        %411 = vmatpush1.bf16.msra.mxu0 0
        %412 = vmatprep.subr.bf16.mxu0 0
        %413 = vmatpush1.bf16.msra.mxu0 0
        %414 = vmatprep.subr.bf16.mxu0 0
        %415 = vmatpush1.bf16.msra.mxu0 0
        %416 = vmatprep.subr.bf16.mxu0 0
        %417 = vmatpush1.bf16.msra.mxu0 0
        %418 = vmatprep.subr.bf16.mxu0 0
        %419 = vmatpush1.bf16.msra.mxu0 0
        %420 = vmatprep.mubr.bf16.mxu0 0
        %421 = vmatmul.mubr.bf16.gmra.mrb[0].mxu0 %v330
        %v422 = vpop.f32.mrb[0].mxu0
        %v423 = vadd.f32 0.0, %v422
        %v424 = vpop.f32.mrb[0].mxu0
        %v425 = vadd.f32 0.0, %v424
        %v426 = vpop.f32.mrb[0].mxu0
        %v427 = vadd.f32 0.0, %v426
        %v428 = vpop.f32.mrb[0].mxu0
        %v429 = vadd.f32 0.0, %v428
        %430 = vdwg.mxu0
        %v431 = vsub.f32 0.0, %v380
        %v432 = vsub.f32 0.0, %v382
        %v433 = vsub.f32 0.0, %v423
        %v434 = vsub.f32 0.0, %v425
        %v435 = vsub.f32 0.0, %v384
        %v436 = vsub.f32 0.0, %v386
        %v437 = vsub.f32 0.0, %v427
        %v438 = vsub.f32 0.0, %v429
        %v439 = vmul.f32 %v431, 1.442695
        %v440 = vpow.pop %v439
        %v441 = vmul.f32 %v432, 1.442695
        %v442 = vpow.pop %v441
        %v443 = vmul.f32 %v433, 1.442695
        %v444 = vpow.pop %v443
        %v445 = vmul.f32 %v434, 1.442695
        %v446 = vpow.pop %v445
        %v447 = vmul.f32 %v435, 1.442695
        %v448 = vpow.pop %v447
        %v449 = vmul.f32 %v436, 1.442695
        %v450 = vpow.pop %v449
        %v451 = vmul.f32 %v437, 1.442695
        %v452 = vpow.pop %v451
        %v453 = vmul.f32 %v438, 1.442695
        %v454 = vpow.pop %v453
        %v455 = vadd.f32 %v440, 1.0
        %v456 = vadd.f32 %v442, 1.0
        %v457 = vadd.f32 %v444, 1.0
        %v458 = vadd.f32 %v446, 1.0
        %v459 = vadd.f32 %v448, 1.0
        %v460 = vadd.f32 %v450, 1.0
        %v461 = vadd.f32 %v452, 1.0
        %v462 = vadd.f32 %v454, 1.0
        %v463 = vrcp.pop %v455
        %v464 = vmul.f32 1.0, %v463
        %v465 = vrcp.pop %v456
        %v466 = vmul.f32 1.0, %v465
        %v467 = vrcp.pop %v457
        %v468 = vmul.f32 1.0, %v467
        %v469 = vrcp.pop %v458
        %v470 = vmul.f32 1.0, %v469
        %v471 = vrcp.pop %v459
        %v472 = vmul.f32 1.0, %v471
        %v473 = vrcp.pop %v460
        %v474 = vmul.f32 1.0, %v473
        %v475 = vrcp.pop %v461
        %v476 = vmul.f32 1.0, %v475
        %v477 = vrcp.pop %v462
        %v478 = vmul.f32 1.0, %v477
        %479 = vst [vmem:[%s209] sm:$0xff] %v464
        %480 = vst [vmem:[%s209 + $0x8] sm:$0xff] %v466
        %481 = vst [vmem:[%s209 + $0x10] sm:$0xff] %v468
        %482 = vst [vmem:[%s209 + $0x18] sm:$0xff] %v470
        %483 = vst [vmem:[%s209 + $0x20] sm:$0xff] %v472
        %484 = vst [vmem:[%s209 + $0x28] sm:$0xff] %v474
        %485 = vst [vmem:[%s209 + $0x30] sm:$0xff] %v476
        %486 = vst [vmem:[%s209 + $0x38] sm:$0xff] %v478
        %s487 = sand.u32 %s84, 1
        %s488 = sand.u32 %s84, 1
        %s489 = smul.addr %s488, 64
        %s490 = scalar_lea.vmem [#allocation3], %s489
        // Predicated region
        $region52: #{_lambda_.13} parent=46 // pred_check
          %p491 = pneg %p94
        $region53: #{_lambda_.13} parent=46 // pred_check_branch
          %493 = sbr.rel (%p491) target = $region55
        $region54: #{_lambda_.13} parent=46 // pred_region
          %s494 = smul.u32 4, %s18
          %s495 = smul.addr %s17, 16
          %s496 = sadd.s32 %s494, %s495
          %s497 = smul.addr %s496, 8
          %s498 = scalar_lea.vmem %s2, %s497
          // Predicated region
          $region56: #{_lambda_.13} parent=54 // pred_check
            _
          $region57: #{_lambda_.13} parent=54 // pred_check_branch
            %500 = sbr.rel (0) target = $region59
          $region58: #{_lambda_.13} parent=54 // pred_region
            // Predicated region
            $region60: #{_lambda_.13} parent=58 // pred_check
              _
            $region61: #{_lambda_.13} parent=58 // pred_check_branch
              %502 = sbr.rel (0) target = $region63
            $region62: #{_lambda_.13} parent=58 // pred_region
              loop: start=0, step=1, limit=1
              $region64: #{_lambda_.13} parent=62 // loop_pre_header
                _
              $region65: #{_lambda_.13} parent=62 // loop_header
                %s504 = sphi 0, %s508
                %p505 = scmp.ge.s32.totalorder %s504, 1
                %s509 = sphi %s490, %s490
                %s510 = sphi %s498, %s498
              $region66: #{_lambda_.13} parent=62 // loop_header_branch
                %507 = sbr.rel (%p505) target = $region70
              $region67: #{_lambda_.13} parent=62 // loop_body
                %v511 = vld [vmem:[%s509] sm:$0xff]
                %512 = vst [vmem:[%s510] sm:$0xff] %v511
                %v513 = vld [vmem:[%s509 + $0x8] sm:$0xff]
                %514 = vst [vmem:[%s510 + $0x8] sm:$0xff] %v513
                %v515 = vld [vmem:[%s509 + $0x10] sm:$0xff]
                %516 = vst [vmem:[%s510 + $0x10] sm:$0xff] %v515
                %v517 = vld [vmem:[%s509 + $0x18] sm:$0xff]
                %518 = vst [vmem:[%s510 + $0x18] sm:$0xff] %v517
                %v519 = vld [vmem:[%s509 + $0x20] sm:$0xff]
                %520 = vst [vmem:[%s510 + $0x40] sm:$0xff] %v519
                %v521 = vld [vmem:[%s509 + $0x28] sm:$0xff]
                %522 = vst [vmem:[%s510 + $0x48] sm:$0xff] %v521
                %v523 = vld [vmem:[%s509 + $0x30] sm:$0xff]
                %524 = vst [vmem:[%s510 + $0x50] sm:$0xff] %v523
                %v525 = vld [vmem:[%s509 + $0x38] sm:$0xff]
                %526 = vst [vmem:[%s510 + $0x58] sm:$0xff] %v525
              $region68: #{_lambda_.13} parent=62 // loop_footer
                %s508 = sadd.s32 1, %s504
              $region69: #{_lambda_.13} parent=62 // loop_footer_branch
                %503 = sbr.rel target = $region65
              $region70: #{_lambda_.13} parent=62 // loop_exit
                _
            $region63: #{_lambda_.13} parent=58 // pred_fallthru
              _
            // Predicated region
            $region71: #{_lambda_.13} parent=58 // pred_check
              _
            $region72: #{_lambda_.13} parent=58 // pred_check_branch
              %528 = sbr.rel target = $region74
            $region73: #{_lambda_.13} parent=58 // pred_region
              _
            $region74: #{_lambda_.13} parent=58 // pred_fallthru
              _
          $region59: #{_lambda_.13} parent=54 // pred_fallthru
            _
          %529 = vnop
        $region55: #{_lambda_.13} parent=46 // pred_fallthru
          _
      $region47: #{_lambda_.13} parent=5 // pred_fallthru
        _
      %p530 = scmp.le.s32.totalorder 2, %s8
      // Predicated region
      $region75: #{_lambda_.13} parent=5 // pred_check
        %p531 = pneg %p530
      $region76: #{_lambda_.13} parent=5 // pred_check_branch
        %533 = sbr.rel (%p531) target = $region78
      $region77: #{_lambda_.13} parent=5 // pred_region
        %s534 = ssub.s32 %s8, 2
        // Predicated region
        $region79: #{_lambda_.13} parent=77 // pred_check
          %p535 = pneg %p100
        $region80: #{_lambda_.13} parent=77 // pred_check_branch
          %537 = sbr.rel (%p535) target = $region82
        $region81: #{_lambda_.13} parent=77 // pred_region
          %s538 = sand.u32 %s85, 1
          %s539 = sand.u32 %s85, 1
          %s540 = smul.addr %s539, 64
          %s541 = scalar_lea.vmem [#allocation3], %s540
        $region82: #{_lambda_.13} parent=77 // pred_fallthru
          _
      $region78: #{_lambda_.13} parent=5 // pred_fallthru
        _
    $region6: #{_lambda_.13} parent=1 // loop_footer
      %s12 = sadd.s32 1, %s8
    $region7: #{_lambda_.13} parent=1 // loop_footer_branch
      %7 = sbr.rel target = $region3
    $region8: #{_lambda_.13} parent=1 // loop_exit
      _

</llo_original>
